<compile_context>
chip_gen: v7x
topology: tpu7x:2x2x1
jax: 0.10.0
libtpu: 0.0.40
codegen_flags: <defaults>
</compile_context>

<pallas_src>
import functools

import jax
import jax.numpy as jnp
from jax import lax
from jax.experimental import pallas as pl
from jax.experimental.pallas import tpu as pltpu

_KH = _KW = 5
_PH = _PW = 2           # 'same' padding for a 5x5 kernel
_CI = _CO = 3

_F1 = [[0, 0, 0, 0, 0],
       [0, -1, 2, -1, 0],
       [0, 2, -4, 2, 0],
       [0, -1, 2, -1, 0],
       [0, 0, 0, 0, 0]]
_F2 = [[-1, 2, -2, 2, -1],
       [2, -6, 8, -6, 2],
       [-2, 8, -12, 8, -2],
       [2, -6, 8, -6, 2],
       [-1, 2, -2, 2, -1]]
_F3 = [[0, 0, 0, 0, 0],
       [0, 0, 0, 0, 0],
       [0, 1, -2, 1, 0],
       [0, 0, 0, 0, 0],
       [0, 0, 0, 0, 0]]
_Q = [4.0, 12.0, 2.0]


def _srm_kernel(x_ref, o_ref, s_ref, *, H, W):
    """x_ref/o_ref: VMEM [3, H, W, nb]; s_ref: VMEM [H+4, W+4, nb] f32 scratch."""
    nb = s_ref.shape[-1]

    # ---- in-kernel 'same' zero padding: clear ONLY the 2-wide halo; the interior
    # is fully overwritten by the channel sum every grid step.  Cleared every step
    # on purpose (each TensorCore has its own scratch under "parallel" semantics).
    zrow = jnp.zeros((_PH, W + 2 * _PW, nb), jnp.float32)
    s_ref[0:_PH, :, :] = zrow
    s_ref[_PH + H:_PH + H + _PH, :, :] = zrow
    zcol = jnp.zeros((H + 2 * _PH, _PW, nb), jnp.float32)
    s_ref[:, 0:_PW, :] = zcol
    s_ref[:, _PW + W:_PW + W + _PW, :] = zcol

    # Every output channel applies the SAME 2D filter to all 3 input channels,
    # so conv(x, [f, f, f]) == conv(x0 + x1 + x2, f): form the channel sum once.
    csum = (x_ref[0].astype(jnp.float32)
            + x_ref[1].astype(jnp.float32)
            + x_ref[2].astype(jnp.float32))
    s_ref[_PH:_PH + H, _PW:_PW + W, :] = csum

    # Shifted views of the padded sum.  ky indexes the untiled leading dim (pure
    # addressing); kx only offsets the sublane dim; the lane (batch) axis is never
    # shifted, so no lane relayouts and all stores stay lane-dense.
    def v(ky, kx):
        return s_ref[ky:ky + H, kx:kx + W, :]

    # ---- weight-group factoring: one sum per offset group (adds only), shared by
    # all output channels; integer weights; 1/q applied once at the end.
    g_cen   = v(2, 2)
    g_icorn = v(1, 1) + v(1, 3) + v(3, 1) + v(3, 3)
    g_iedge = v(1, 2) + v(2, 1) + v(2, 3) + v(3, 2)
    g_ocorn = v(0, 0) + v(0, 4) + v(4, 0) + v(4, 4)
    g_oedge = (v(0, 1) + v(0, 3) + v(1, 0) + v(1, 4)
               + v(3, 0) + v(3, 4) + v(4, 1) + v(4, 3))
    g_omid  = v(0, 2) + v(2, 0) + v(2, 4) + v(4, 2)
    g_f3h   = v(2, 1) + v(2, 3)

    acc1 = 2.0 * g_iedge - g_icorn - 4.0 * g_cen                        # f1 (int weights)
    acc2 = (2.0 * g_oedge - g_ocorn - 2.0 * g_omid
            - 6.0 * g_icorn + 8.0 * g_iedge - 12.0 * g_cen)             # f2
    acc3 = g_f3h - 2.0 * g_cen                                          # f3

    # 1/q scale, then Hardtanh(-2, 2); lane-dense (full last-dim) stores.
    o_ref[0] = jnp.clip(acc1 * (1.0 / 4.0), -2.0, 2.0).astype(o_ref.dtype)
    o_ref[1] = jnp.clip(acc2 * (1.0 / 12.0), -2.0, 2.0).astype(o_ref.dtype)
    o_ref[2] = jnp.clip(acc3 * (1.0 / 2.0), -2.0, 2.0).astype(o_ref.dtype)


def _vmem_capacity_bytes():
    """Generation-aware physical VMEM (falls back to the v7x per-TC 64 MiB)."""
    try:
        return int(pltpu.get_tpu_info().vmem_capacity_bytes)
    except Exception:
        return 64 * 1024 * 1024


def _block_vmem_bytes(nb, H, W, in_isz, out_isz):
    """Estimated VMEM for one batch block (double-buffered I/O + scratch + live f32)."""
    img = H * W * nb
    return (2 * _CI * img * in_isz                                 # input block x2 (pipeline)
            + 2 * _CO * img * out_isz                              # output block x2
            + (H + 2 * _PH) * (W + 2 * _PW) * nb * 4               # padded channel-sum scratch
            + 10 * img * 4)                                        # csum + group sums + accs


def _pick_batch_block(N, H, W, in_isz, out_isz, budget):
    # nb must divide N, and to satisfy the (8, 128) lane rule when nb < N it must
    # be a multiple of 128 (otherwise take the full batch in one block).
    cands = [d for d in range(1, N + 1) if N % d == 0 and (d == N or d % 128 == 0)]
    fits = [d for d in cands if _block_vmem_bytes(d, H, W, in_isz, out_isz) <= budget]
    if not fits:
        # TODO(synk): H-strip tiling with a 2-row halo for very large images.
        fits = [min(cands)]
    nb = max(fits)
    multi = [d for d in fits if N // d >= 2]
    if multi:                      # keep >=2 grid steps so both v7x TensorCores work
        nb = max(multi)
    return nb


def srm_filter(x):
    """Pallas implementation of SRMFilter.forward.  x: [N, 3, H, W] (NCHW)."""
    N, C, H, W = x.shape
    assert C == _CI, f"SRMFilter expects {_CI} input channels, got {C}"

    # Lane-dense layout: batch on the lane (last) axis (wrapper-side layout plumbing).
    xt = jnp.transpose(x, (1, 2, 3, 0))                 # [3, H, W, N]

    itemsize = jnp.dtype(x.dtype).itemsize
    phys = _vmem_capacity_bytes()
    budget = phys // 2
    nb = _pick_batch_block(N, H, W, itemsize, itemsize, budget)
    need = _block_vmem_bytes(nb, H, W, itemsize, itemsize)
    vmem_limit = int(min(phys * 3 // 4, max(32 * 1024 * 1024, 2 * need)))

    kernel = functools.partial(_srm_kernel, H=H, W=W)

    out_t = pl.pallas_call(
        kernel,
        out_shape=jax.ShapeDtypeStruct((_CO, H, W, N), x.dtype),
        grid=(N // nb,),
        in_specs=[pl.BlockSpec((_CI, H, W, nb), lambda n: (0, 0, 0, n))],
        out_specs=pl.BlockSpec((_CO, H, W, nb), lambda n: (0, 0, 0, n)),
        scratch_shapes=[pltpu.VMEM((H + 2 * _PH, W + 2 * _PW, nb), jnp.float32)],
        compiler_params=pltpu.CompilerParams(
            dimension_semantics=("parallel",),
            vmem_limit_bytes=vmem_limit),
    )(xt)

    return jnp.transpose(out_t, (3, 0, 1, 2))           # back to NCHW


def _reference(x):
    """Pure-JAX reference (matches torch.nn.functional.conv2d + Hardtanh)."""
    filters = (jnp.array([[_F1] * 3, [_F2] * 3, [_F3] * 3], dtype=jnp.float32)
               / jnp.array(_Q, dtype=jnp.float32).reshape(3, 1, 1, 1))
    y = lax.conv_general_dilated(
        x.astype(jnp.float32), filters,
        window_strides=(1, 1), padding="SAME",
        dimension_numbers=("NCHW", "OIHW", "NCHW"),
        precision=lax.Precision.HIGHEST)
    return jnp.clip(y, -2.0, 2.0).astype(x.dtype)


if __name__ == "__main__":
    key = jax.random.PRNGKey(0)
    x = jax.random.normal(key, (2, 3, 16, 16), dtype=jnp.float32)

    out = jax.block_until_ready(srm_filter(x))

    ref = _reference(x)
    assert out.shape == ref.shape == (2, 3, 16, 16)
    assert jnp.allclose(out, ref, atol=1e-5, rtol=1e-5), "mismatch vs reference conv"

    print("KERNEL_OK")
</pallas_src>

<mosaic_0001>
module attributes {stable_mosaic.version = 11 : i64} {
  func.func @_srm_kernel(%arg0: i32, %arg1: memref<3x16x16x2xf32, #tpu.memory_space<vmem>>, %arg2: memref<3x16x16x2xf32, #tpu.memory_space<vmem>>, %arg3: memref<20x20x2xf32, #tpu.memory_space<vmem>>) attributes {dimension_semantics = [#tpu.dimension_semantics<parallel>], iteration_bounds = array<i64: 1>, scalar_prefetch = 0 : i64, scratch_operands = 1 : i64, tpu.core_type = #tpu.core_type<tc>, window_params = [{transform_indices = @transform_0, window_bounds = array<i64: 3, 16, 16, 2>}, {transform_indices = @transform_1, window_bounds = array<i64: 3, 16, 16, 2>}]} {
    %cst = arith.constant 0.000000e+00 : f32
    %0 = vector.broadcast %cst : f32 to vector<2x20x2xf32>
    %c0 = arith.constant 0 : index
    %c0_0 = arith.constant 0 : index
    %c0_1 = arith.constant 0 : index
    %1 = vector.load %arg3[%c0, %c0_0, %c0_1] : memref<20x20x2xf32, #tpu.memory_space<vmem>>, vector<2x20x2xf32>
    tpu.vector_store %arg3[%c0, %c0_0, %c0_1], %0 {strides = array<i32>} : memref<20x20x2xf32, #tpu.memory_space<vmem>>, vector<2x20x2xf32>,
    %c18 = arith.constant 18 : index
    %c0_2 = arith.constant 0 : index
    %c0_3 = arith.constant 0 : index
    %2 = vector.load %arg3[%c18, %c0_2, %c0_3] : memref<20x20x2xf32, #tpu.memory_space<vmem>>, vector<2x20x2xf32>
    tpu.vector_store %arg3[%c18, %c0_2, %c0_3], %0 {strides = array<i32>} : memref<20x20x2xf32, #tpu.memory_space<vmem>>, vector<2x20x2xf32>,
    %cst_4 = arith.constant 0.000000e+00 : f32
    %3 = vector.broadcast %cst_4 : f32 to vector<20x2x2xf32>
    %c0_5 = arith.constant 0 : index
    %c0_6 = arith.constant 0 : index
    %c0_7 = arith.constant 0 : index
    %4 = vector.load %arg3[%c0_5, %c0_6, %c0_7] : memref<20x20x2xf32, #tpu.memory_space<vmem>>, vector<20x2x2xf32>
    tpu.vector_store %arg3[%c0_5, %c0_6, %c0_7], %3 {strides = array<i32>} : memref<20x20x2xf32, #tpu.memory_space<vmem>>, vector<20x2x2xf32>,
    %c0_8 = arith.constant 0 : index
    %c18_9 = arith.constant 18 : index
    %c0_10 = arith.constant 0 : index
    %5 = vector.load %arg3[%c0_8, %c18_9, %c0_10] : memref<20x20x2xf32, #tpu.memory_space<vmem>>, vector<20x2x2xf32>
    tpu.vector_store %arg3[%c0_8, %c18_9, %c0_10], %3 {strides = array<i32>} : memref<20x20x2xf32, #tpu.memory_space<vmem>>, vector<20x2x2xf32>,
    %c0_11 = arith.constant 0 : index
    %c0_12 = arith.constant 0 : index
    %c0_13 = arith.constant 0 : index
    %c0_14 = arith.constant 0 : index
    %6 = vector.load %arg1[%c0_11, %c0_12, %c0_13, %c0_14] : memref<3x16x16x2xf32, #tpu.memory_space<vmem>>, vector<1x16x16x2xf32>
    %7 = vector.shape_cast %6 : vector<1x16x16x2xf32> to vector<16x16x2xf32>
    %c1 = arith.constant 1 : index
    %c0_15 = arith.constant 0 : index
    %c0_16 = arith.constant 0 : index
    %c0_17 = arith.constant 0 : index
    %8 = vector.load %arg1[%c1, %c0_15, %c0_16, %c0_17] : memref<3x16x16x2xf32, #tpu.memory_space<vmem>>, vector<1x16x16x2xf32>
    %9 = vector.shape_cast %8 : vector<1x16x16x2xf32> to vector<16x16x2xf32>
    %10 = arith.addf %7, %9 : vector<16x16x2xf32>
    %c2 = arith.constant 2 : index
    %c0_18 = arith.constant 0 : index
    %c0_19 = arith.constant 0 : index
    %c0_20 = arith.constant 0 : index
    %11 = vector.load %arg1[%c2, %c0_18, %c0_19, %c0_20] : memref<3x16x16x2xf32, #tpu.memory_space<vmem>>, vector<1x16x16x2xf32>
    %12 = vector.shape_cast %11 : vector<1x16x16x2xf32> to vector<16x16x2xf32>
    %13 = arith.addf %10, %12 : vector<16x16x2xf32>
    %c2_21 = arith.constant 2 : index
    %c2_22 = arith.constant 2 : index
    %c0_23 = arith.constant 0 : index
    %14 = vector.load %arg3[%c2_21, %c2_22, %c0_23] : memref<20x20x2xf32, #tpu.memory_space<vmem>>, vector<16x16x2xf32>
    tpu.vector_store %arg3[%c2_21, %c2_22, %c0_23], %13 {strides = array<i32>} : memref<20x20x2xf32, #tpu.memory_space<vmem>>, vector<16x16x2xf32>,
    %c2_24 = arith.constant 2 : index
    %c2_25 = arith.constant 2 : index
    %c0_26 = arith.constant 0 : index
    %15 = vector.load %arg3[%c2_24, %c2_25, %c0_26] : memref<20x20x2xf32, #tpu.memory_space<vmem>>, vector<16x16x2xf32>
    %c1_27 = arith.constant 1 : index
    %c1_28 = arith.constant 1 : index
    %c0_29 = arith.constant 0 : index
    %16 = vector.load %arg3[%c1_27, %c1_28, %c0_29] : memref<20x20x2xf32, #tpu.memory_space<vmem>>, vector<16x16x2xf32>
    %c1_30 = arith.constant 1 : index
    %c3 = arith.constant 3 : index
    %c0_31 = arith.constant 0 : index
    %17 = vector.load %arg3[%c1_30, %c3, %c0_31] : memref<20x20x2xf32, #tpu.memory_space<vmem>>, vector<16x16x2xf32>
    %18 = arith.addf %16, %17 : vector<16x16x2xf32>
    %c3_32 = arith.constant 3 : index
    %c1_33 = arith.constant 1 : index
    %c0_34 = arith.constant 0 : index
    %19 = vector.load %arg3[%c3_32, %c1_33, %c0_34] : memref<20x20x2xf32, #tpu.memory_space<vmem>>, vector<16x16x2xf32>
    %20 = arith.addf %18, %19 : vector<16x16x2xf32>
    %c3_35 = arith.constant 3 : index
    %c3_36 = arith.constant 3 : index
    %c0_37 = arith.constant 0 : index
    %21 = vector.load %arg3[%c3_35, %c3_36, %c0_37] : memref<20x20x2xf32, #tpu.memory_space<vmem>>, vector<16x16x2xf32>
    %22 = arith.addf %20, %21 : vector<16x16x2xf32>
    %c1_38 = arith.constant 1 : index
    %c2_39 = arith.constant 2 : index
    %c0_40 = arith.constant 0 : index
    %23 = vector.load %arg3[%c1_38, %c2_39, %c0_40] : memref<20x20x2xf32, #tpu.memory_space<vmem>>, vector<16x16x2xf32>
    %c2_41 = arith.constant 2 : index
    %c1_42 = arith.constant 1 : index
    %c0_43 = arith.constant 0 : index
    %24 = vector.load %arg3[%c2_41, %c1_42, %c0_43] : memref<20x20x2xf32, #tpu.memory_space<vmem>>, vector<16x16x2xf32>
    %25 = arith.addf %23, %24 : vector<16x16x2xf32>
    %c2_44 = arith.constant 2 : index
    %c3_45 = arith.constant 3 : index
    %c0_46 = arith.constant 0 : index
    %26 = vector.load %arg3[%c2_44, %c3_45, %c0_46] : memref<20x20x2xf32, #tpu.memory_space<vmem>>, vector<16x16x2xf32>
    %27 = arith.addf %25, %26 : vector<16x16x2xf32>
    %c3_47 = arith.constant 3 : index
    %c2_48 = arith.constant 2 : index
    %c0_49 = arith.constant 0 : index
    %28 = vector.load %arg3[%c3_47, %c2_48, %c0_49] : memref<20x20x2xf32, #tpu.memory_space<vmem>>, vector<16x16x2xf32>
    %29 = arith.addf %27, %28 : vector<16x16x2xf32>
    %c0_50 = arith.constant 0 : index
    %c0_51 = arith.constant 0 : index
    %c0_52 = arith.constant 0 : index
    %30 = vector.load %arg3[%c0_50, %c0_51, %c0_52] : memref<20x20x2xf32, #tpu.memory_space<vmem>>, vector<16x16x2xf32>
    %c0_53 = arith.constant 0 : index
    %c4 = arith.constant 4 : index
    %c0_54 = arith.constant 0 : index
    %31 = vector.load %arg3[%c0_53, %c4, %c0_54] : memref<20x20x2xf32, #tpu.memory_space<vmem>>, vector<16x16x2xf32>
    %32 = arith.addf %30, %31 : vector<16x16x2xf32>
    %c4_55 = arith.constant 4 : index
    %c0_56 = arith.constant 0 : index
    %c0_57 = arith.constant 0 : index
    %33 = vector.load %arg3[%c4_55, %c0_56, %c0_57] : memref<20x20x2xf32, #tpu.memory_space<vmem>>, vector<16x16x2xf32>
    %34 = arith.addf %32, %33 : vector<16x16x2xf32>
    %c4_58 = arith.constant 4 : index
    %c4_59 = arith.constant 4 : index
    %c0_60 = arith.constant 0 : index
    %35 = vector.load %arg3[%c4_58, %c4_59, %c0_60] : memref<20x20x2xf32, #tpu.memory_space<vmem>>, vector<16x16x2xf32>
    %36 = arith.addf %34, %35 : vector<16x16x2xf32>
    %c0_61 = arith.constant 0 : index
    %c1_62 = arith.constant 1 : index
    %c0_63 = arith.constant 0 : index
    %37 = vector.load %arg3[%c0_61, %c1_62, %c0_63] : memref<20x20x2xf32, #tpu.memory_space<vmem>>, vector<16x16x2xf32>
    %c0_64 = arith.constant 0 : index
    %c3_65 = arith.constant 3 : index
    %c0_66 = arith.constant 0 : index
    %38 = vector.load %arg3[%c0_64, %c3_65, %c0_66] : memref<20x20x2xf32, #tpu.memory_space<vmem>>, vector<16x16x2xf32>
    %39 = arith.addf %37, %38 : vector<16x16x2xf32>
    %c1_67 = arith.constant 1 : index
    %c0_68 = arith.constant 0 : index
    %c0_69 = arith.constant 0 : index
    %40 = vector.load %arg3[%c1_67, %c0_68, %c0_69] : memref<20x20x2xf32, #tpu.memory_space<vmem>>, vector<16x16x2xf32>
    %41 = arith.addf %39, %40 : vector<16x16x2xf32>
    %c1_70 = arith.constant 1 : index
    %c4_71 = arith.constant 4 : index
    %c0_72 = arith.constant 0 : index
    %42 = vector.load %arg3[%c1_70, %c4_71, %c0_72] : memref<20x20x2xf32, #tpu.memory_space<vmem>>, vector<16x16x2xf32>
    %43 = arith.addf %41, %42 : vector<16x16x2xf32>
    %c3_73 = arith.constant 3 : index
    %c0_74 = arith.constant 0 : index
    %c0_75 = arith.constant 0 : index
    %44 = vector.load %arg3[%c3_73, %c0_74, %c0_75] : memref<20x20x2xf32, #tpu.memory_space<vmem>>, vector<16x16x2xf32>
    %45 = arith.addf %43, %44 : vector<16x16x2xf32>
    %c3_76 = arith.constant 3 : index
    %c4_77 = arith.constant 4 : index
    %c0_78 = arith.constant 0 : index
    %46 = vector.load %arg3[%c3_76, %c4_77, %c0_78] : memref<20x20x2xf32, #tpu.memory_space<vmem>>, vector<16x16x2xf32>
    %47 = arith.addf %45, %46 : vector<16x16x2xf32>
    %c4_79 = arith.constant 4 : index
    %c1_80 = arith.constant 1 : index
    %c0_81 = arith.constant 0 : index
    %48 = vector.load %arg3[%c4_79, %c1_80, %c0_81] : memref<20x20x2xf32, #tpu.memory_space<vmem>>, vector<16x16x2xf32>
    %49 = arith.addf %47, %48 : vector<16x16x2xf32>
    %c4_82 = arith.constant 4 : index
    %c3_83 = arith.constant 3 : index
    %c0_84 = arith.constant 0 : index
    %50 = vector.load %arg3[%c4_82, %c3_83, %c0_84] : memref<20x20x2xf32, #tpu.memory_space<vmem>>, vector<16x16x2xf32>
    %51 = arith.addf %49, %50 : vector<16x16x2xf32>
    %c0_85 = arith.constant 0 : index
    %c2_86 = arith.constant 2 : index
    %c0_87 = arith.constant 0 : index
    %52 = vector.load %arg3[%c0_85, %c2_86, %c0_87] : memref<20x20x2xf32, #tpu.memory_space<vmem>>, vector<16x16x2xf32>
    %c2_88 = arith.constant 2 : index
    %c0_89 = arith.constant 0 : index
    %c0_90 = arith.constant 0 : index
    %53 = vector.load %arg3[%c2_88, %c0_89, %c0_90] : memref<20x20x2xf32, #tpu.memory_space<vmem>>, vector<16x16x2xf32>
    %54 = arith.addf %52, %53 : vector<16x16x2xf32>
    %c2_91 = arith.constant 2 : index
    %c4_92 = arith.constant 4 : index
    %c0_93 = arith.constant 0 : index
    %55 = vector.load %arg3[%c2_91, %c4_92, %c0_93] : memref<20x20x2xf32, #tpu.memory_space<vmem>>, vector<16x16x2xf32>
    %56 = arith.addf %54, %55 : vector<16x16x2xf32>
    %c4_94 = arith.constant 4 : index
    %c2_95 = arith.constant 2 : index
    %c0_96 = arith.constant 0 : index
    %57 = vector.load %arg3[%c4_94, %c2_95, %c0_96] : memref<20x20x2xf32, #tpu.memory_space<vmem>>, vector<16x16x2xf32>
    %58 = arith.addf %56, %57 : vector<16x16x2xf32>
    %c2_97 = arith.constant 2 : index
    %c1_98 = arith.constant 1 : index
    %c0_99 = arith.constant 0 : index
    %59 = vector.load %arg3[%c2_97, %c1_98, %c0_99] : memref<20x20x2xf32, #tpu.memory_space<vmem>>, vector<16x16x2xf32>
    %c2_100 = arith.constant 2 : index
    %c3_101 = arith.constant 3 : index
    %c0_102 = arith.constant 0 : index
    %60 = vector.load %arg3[%c2_100, %c3_101, %c0_102] : memref<20x20x2xf32, #tpu.memory_space<vmem>>, vector<16x16x2xf32>
    %61 = arith.addf %59, %60 : vector<16x16x2xf32>
    %cst_103 = arith.constant 2.000000e+00 : f32
    %62 = vector.broadcast %cst_103 : f32 to vector<16x16x2xf32>
    %63 = arith.mulf %62, %29 : vector<16x16x2xf32>
    %64 = arith.subf %63, %22 : vector<16x16x2xf32>
    %cst_104 = arith.constant 4.000000e+00 : f32
    %65 = vector.broadcast %cst_104 : f32 to vector<16x16x2xf32>
    %66 = arith.mulf %65, %15 : vector<16x16x2xf32>
    %67 = arith.subf %64, %66 : vector<16x16x2xf32>
    %cst_105 = arith.constant 2.000000e+00 : f32
    %68 = vector.broadcast %cst_105 : f32 to vector<16x16x2xf32>
    %69 = arith.mulf %68, %51 : vector<16x16x2xf32>
    %70 = arith.subf %69, %36 : vector<16x16x2xf32>
    %cst_106 = arith.constant 2.000000e+00 : f32
    %71 = vector.broadcast %cst_106 : f32 to vector<16x16x2xf32>
    %72 = arith.mulf %71, %58 : vector<16x16x2xf32>
    %73 = arith.subf %70, %72 : vector<16x16x2xf32>
    %cst_107 = arith.constant 6.000000e+00 : f32
    %74 = vector.broadcast %cst_107 : f32 to vector<16x16x2xf32>
    %75 = arith.mulf %74, %22 : vector<16x16x2xf32>
    %76 = arith.subf %73, %75 : vector<16x16x2xf32>
    %cst_108 = arith.constant 8.000000e+00 : f32
    %77 = vector.broadcast %cst_108 : f32 to vector<16x16x2xf32>
    %78 = arith.mulf %77, %29 : vector<16x16x2xf32>
    %79 = arith.addf %76, %78 : vector<16x16x2xf32>
    %cst_109 = arith.constant 1.200000e+01 : f32
    %80 = vector.broadcast %cst_109 : f32 to vector<16x16x2xf32>
    %81 = arith.mulf %80, %15 : vector<16x16x2xf32>
    %82 = arith.subf %79, %81 : vector<16x16x2xf32>
    %cst_110 = arith.constant 2.000000e+00 : f32
    %83 = vector.broadcast %cst_110 : f32 to vector<16x16x2xf32>
    %84 = arith.mulf %83, %15 : vector<16x16x2xf32>
    %85 = arith.subf %61, %84 : vector<16x16x2xf32>
    %cst_111 = arith.constant 2.500000e-01 : f32
    %86 = vector.broadcast %cst_111 : f32 to vector<16x16x2xf32>
    %87 = arith.mulf %67, %86 : vector<16x16x2xf32>
    %cst_112 = arith.constant -2.000000e+00 : f32
    %cst_113 = arith.constant 2.000000e+00 : f32
    %88 = vector.broadcast %cst_112 : f32 to vector<16x16x2xf32>
    %89 = arith.maximumf %88, %87 : vector<16x16x2xf32>
    %90 = vector.broadcast %cst_113 : f32 to vector<16x16x2xf32>
    %91 = arith.minimumf %90, %89 : vector<16x16x2xf32>
    %c0_114 = arith.constant 0 : index
    %c0_115 = arith.constant 0 : index
    %c0_116 = arith.constant 0 : index
    %c0_117 = arith.constant 0 : index
    %92 = vector.load %arg2[%c0_114, %c0_115, %c0_116, %c0_117] : memref<3x16x16x2xf32, #tpu.memory_space<vmem>>, vector<1x16x16x2xf32>
    %93 = vector.shape_cast %92 : vector<1x16x16x2xf32> to vector<16x16x2xf32>
    %94 = vector.shape_cast %91 : vector<16x16x2xf32> to vector<1x16x16x2xf32>
    tpu.vector_store %arg2[%c0_114, %c0_115, %c0_116, %c0_117], %94 {strides = array<i32>} : memref<3x16x16x2xf32, #tpu.memory_space<vmem>>, vector<1x16x16x2xf32>,
    %cst_118 = arith.constant 0.0833333358 : f32
    %95 = vector.broadcast %cst_118 : f32 to vector<16x16x2xf32>
    %96 = arith.mulf %82, %95 : vector<16x16x2xf32>
    %cst_119 = arith.constant -2.000000e+00 : f32
    %cst_120 = arith.constant 2.000000e+00 : f32
    %97 = vector.broadcast %cst_119 : f32 to vector<16x16x2xf32>
    %98 = arith.maximumf %97, %96 : vector<16x16x2xf32>
    %99 = vector.broadcast %cst_120 : f32 to vector<16x16x2xf32>
    %100 = arith.minimumf %99, %98 : vector<16x16x2xf32>
    %c1_121 = arith.constant 1 : index
    %c0_122 = arith.constant 0 : index
    %c0_123 = arith.constant 0 : index
    %c0_124 = arith.constant 0 : index
    %101 = vector.load %arg2[%c1_121, %c0_122, %c0_123, %c0_124] : memref<3x16x16x2xf32, #tpu.memory_space<vmem>>, vector<1x16x16x2xf32>
    %102 = vector.shape_cast %101 : vector<1x16x16x2xf32> to vector<16x16x2xf32>
    %103 = vector.shape_cast %100 : vector<16x16x2xf32> to vector<1x16x16x2xf32>
    tpu.vector_store %arg2[%c1_121, %c0_122, %c0_123, %c0_124], %103 {strides = array<i32>} : memref<3x16x16x2xf32, #tpu.memory_space<vmem>>, vector<1x16x16x2xf32>,
    %cst_125 = arith.constant 5.000000e-01 : f32
    %104 = vector.broadcast %cst_125 : f32 to vector<16x16x2xf32>
    %105 = arith.mulf %85, %104 : vector<16x16x2xf32>
    %cst_126 = arith.constant -2.000000e+00 : f32
    %cst_127 = arith.constant 2.000000e+00 : f32
    %106 = vector.broadcast %cst_126 : f32 to vector<16x16x2xf32>
    %107 = arith.maximumf %106, %105 : vector<16x16x2xf32>
    %108 = vector.broadcast %cst_127 : f32 to vector<16x16x2xf32>
    %109 = arith.minimumf %108, %107 : vector<16x16x2xf32>
    %c2_128 = arith.constant 2 : index
    %c0_129 = arith.constant 0 : index
    %c0_130 = arith.constant 0 : index
    %c0_131 = arith.constant 0 : index
    %110 = vector.load %arg2[%c2_128, %c0_129, %c0_130, %c0_131] : memref<3x16x16x2xf32, #tpu.memory_space<vmem>>, vector<1x16x16x2xf32>
    %111 = vector.shape_cast %110 : vector<1x16x16x2xf32> to vector<16x16x2xf32>
    %112 = vector.shape_cast %109 : vector<16x16x2xf32> to vector<1x16x16x2xf32>
    tpu.vector_store %arg2[%c2_128, %c0_129, %c0_130, %c0_131], %112 {strides = array<i32>} : memref<3x16x16x2xf32, #tpu.memory_space<vmem>>, vector<1x16x16x2xf32>,
    return
  }
  func.func @transform_0(%arg0: i32) -> (i32, i32, i32, i32) {
    %c0_i32 = arith.constant 0 : i32
    %c0_i32_0 = arith.constant 0 : i32
    %c0_i32_1 = arith.constant 0 : i32
    %c0_i32_2 = arith.constant 0 : i32
    return %c0_i32, %c0_i32_0, %c0_i32_1, %arg0 : i32, i32, i32, i32
  }
  func.func @transform_1(%arg0: i32) -> (i32, i32, i32, i32) {
    %c0_i32 = arith.constant 0 : i32
    %c0_i32_0 = arith.constant 0 : i32
    %c0_i32_1 = arith.constant 0 : i32
    %c0_i32_2 = arith.constant 0 : i32
    return %c0_i32, %c0_i32_0, %c0_i32_1, %arg0 : i32, i32, i32, i32
  }
}

</mosaic_0001>

<llo_original>
// kernel: tpu_custom_call.1
$region0: #{tpu_custom_call.1}
  #allocation0 [shape = 'u32[]', space=smem, size = 0x4, offset = 0x4, fixed_abs, tag = 'smem constant byte address 0x4 - core index']
  #allocation1 [shape = 'u32[144,128]{1,0:T(1,128)}', space=vmem, size = 0x12000, scoped, tag = 'internal scratch']
  #allocation2 [shape = 'f32[20,20,2]{2,1,0:T(8,128)}', space=vmem, size = 0x3c000, scoped, tag = 'scratch operand']
  %s0 = inlined_call_operand.vmem [shape: f32[3,16,16,2], index: 0, kind: input, shape index: {}]
  %s1 = inlined_call_operand.vmem [shape: f32[3,16,16,2], index: 1, kind: output, shape index: {}]
  %s2 = sld [smem:[#allocation0]]
  $region14: #{tpu_custom_call.1} parent=0
    _
  %s4 = ssub.s32 1, %s2
  %s5 = scalar_select 0, %s4, %s2
  // Predicated region
  $region2: #{tpu_custom_call.1} parent=0 // pred_check
    _
  $region3: #{tpu_custom_call.1} parent=0 // pred_check_branch
    %7 = sbr.rel (0) target = $region5
  $region4: #{tpu_custom_call.1} parent=0 // pred_region
    _
  $region5: #{tpu_custom_call.1} parent=0 // pred_fallthru
    _
  %vm8 = vcmask 15360
  %9 = vst.msk [vmem:[#allocation2] sm:$0xff] %vm8, 0.0
  %10 = vst.msk [vmem:[#allocation2 + $0x8] sm:$0xff] %vm8, 0.0
  %vm11 = vcmask 11264
  %12 = vst.msk [vmem:[#allocation2 + $0x10] sm:$0xf] %vm11, 0.0
  %13 = vst.msk [vmem:[#allocation2 + $0x18] sm:$0xff] %vm8, 0.0
  %14 = vst.msk [vmem:[#allocation2 + $0x20] sm:$0xff] %vm8, 0.0
  %15 = vst.msk [vmem:[#allocation2 + $0x28] sm:$0xf] %vm11, 0.0
  %s16 = scalar_lea.vmem [#allocation2], 432
  %17 = vst.msk [vmem:[%s16] sm:$0xff] %vm8, 0.0
  %18 = vst.msk [vmem:[%s16 + $0x8] sm:$0xff] %vm8, 0.0
  %19 = vst.msk [vmem:[%s16 + $0x10] sm:$0xf] %vm11, 0.0
  %20 = vst.msk [vmem:[%s16 + $0x18] sm:$0xff] %vm8, 0.0
  %21 = vst.msk [vmem:[%s16 + $0x20] sm:$0xff] %vm8, 0.0
  %22 = vst.msk [vmem:[%s16 + $0x28] sm:$0xf] %vm11, 0.0
  %vm23 = vcmask 9216
  %24 = vst.msk [vmem:[#allocation2] sm:$0x3] %vm23, 0.0
  %25 = vst.msk [vmem:[#allocation2 + $0x18] sm:$0x3] %vm23, 0.0
  %26 = vst.msk [vmem:[#allocation2 + $0x30] sm:$0x3] %vm23, 0.0
  %27 = vst.msk [vmem:[#allocation2 + $0x48] sm:$0x3] %vm23, 0.0
  %28 = vst.msk [vmem:[#allocation2 + $0x60] sm:$0x3] %vm23, 0.0
  %29 = vst.msk [vmem:[#allocation2 + $0x78] sm:$0x3] %vm23, 0.0
  %30 = vst.msk [vmem:[#allocation2 + $0x90] sm:$0x3] %vm23, 0.0
  %31 = vst.msk [vmem:[#allocation2 + $0xa8] sm:$0x3] %vm23, 0.0
  %32 = vst.msk [vmem:[#allocation2 + $0xc0] sm:$0x3] %vm23, 0.0
  %33 = vst.msk [vmem:[#allocation2 + $0xd8] sm:$0x3] %vm23, 0.0
  %34 = vst.msk [vmem:[#allocation2 + $0xf0] sm:$0x3] %vm23, 0.0
  %35 = vst.msk [vmem:[#allocation2 + $0x108] sm:$0x3] %vm23, 0.0
  %36 = vst.msk [vmem:[#allocation2 + $0x120] sm:$0x3] %vm23, 0.0
  %37 = vst.msk [vmem:[#allocation2 + $0x138] sm:$0x3] %vm23, 0.0
  %38 = vst.msk [vmem:[#allocation2 + $0x150] sm:$0x3] %vm23, 0.0
  %39 = vst.msk [vmem:[#allocation2 + $0x168] sm:$0x3] %vm23, 0.0
  %40 = vst.msk [vmem:[#allocation2 + $0x180] sm:$0x3] %vm23, 0.0
  %41 = vst.msk [vmem:[#allocation2 + $0x198] sm:$0x3] %vm23, 0.0
  %42 = vst.msk [vmem:[#allocation2 + $0x1b0] sm:$0x3] %vm23, 0.0
  %43 = vst.msk [vmem:[#allocation2 + $0x1c8] sm:$0x3] %vm23, 0.0
  %44 = vst.msk [vmem:[#allocation2 + $0x12] sm:$0x3] %vm23, 0.0
  %45 = vst.msk [vmem:[#allocation2 + $0x2a] sm:$0x3] %vm23, 0.0
  %46 = vst.msk [vmem:[#allocation2 + $0x42] sm:$0x3] %vm23, 0.0
  %47 = vst.msk [vmem:[#allocation2 + $0x5a] sm:$0x3] %vm23, 0.0
  %48 = vst.msk [vmem:[#allocation2 + $0x72] sm:$0x3] %vm23, 0.0
  %49 = vst.msk [vmem:[#allocation2 + $0x8a] sm:$0x3] %vm23, 0.0
  %50 = vst.msk [vmem:[#allocation2 + $0xa2] sm:$0x3] %vm23, 0.0
  %51 = vst.msk [vmem:[#allocation2 + $0xba] sm:$0x3] %vm23, 0.0
  %52 = vst.msk [vmem:[#allocation2 + $0xd2] sm:$0x3] %vm23, 0.0
  %53 = vst.msk [vmem:[#allocation2 + $0xea] sm:$0x3] %vm23, 0.0
  %54 = vst.msk [vmem:[#allocation2 + $0x102] sm:$0x3] %vm23, 0.0
  %55 = vst.msk [vmem:[#allocation2 + $0x11a] sm:$0x3] %vm23, 0.0
  %56 = vst.msk [vmem:[#allocation2 + $0x132] sm:$0x3] %vm23, 0.0
  %57 = vst.msk [vmem:[#allocation2 + $0x14a] sm:$0x3] %vm23, 0.0
  %58 = vst.msk [vmem:[#allocation2 + $0x162] sm:$0x3] %vm23, 0.0
  %59 = vst.msk [vmem:[#allocation2 + $0x17a] sm:$0x3] %vm23, 0.0
  %60 = vst.msk [vmem:[#allocation2 + $0x192] sm:$0x3] %vm23, 0.0
  %61 = vst.msk [vmem:[#allocation2 + $0x1aa] sm:$0x3] %vm23, 0.0
  %62 = vst.msk [vmem:[#allocation2 + $0x1c2] sm:$0x3] %vm23, 0.0
  %63 = vst.msk [vmem:[#allocation2 + $0x1da] sm:$0x3] %vm23, 0.0
  %v64 = vld [vmem:[%s0] sm:$0xff]
  %v65 = vld [vmem:[%s0 + $0x8] sm:$0xff]
  %v66 = vld [vmem:[%s0 + $0x10] sm:$0xff]
  %v67 = vld [vmem:[%s0 + $0x18] sm:$0xff]
  %v68 = vld [vmem:[%s0 + $0x20] sm:$0xff]
  %v69 = vld [vmem:[%s0 + $0x28] sm:$0xff]
  %v70 = vld [vmem:[%s0 + $0x30] sm:$0xff]
  %v71 = vld [vmem:[%s0 + $0x38] sm:$0xff]
  %v72 = vld [vmem:[%s0 + $0x40] sm:$0xff]
  %v73 = vld [vmem:[%s0 + $0x48] sm:$0xff]
  %v74 = vld [vmem:[%s0 + $0x50] sm:$0xff]
  %v75 = vld [vmem:[%s0 + $0x58] sm:$0xff]
  %v76 = vld [vmem:[%s0 + $0x60] sm:$0xff]
  %v77 = vld [vmem:[%s0 + $0x68] sm:$0xff]
  %v78 = vld [vmem:[%s0 + $0x70] sm:$0xff]
  %v79 = vld [vmem:[%s0 + $0x78] sm:$0xff]
  %v80 = vld [vmem:[%s0 + $0x80] sm:$0xff]
  %v81 = vld [vmem:[%s0 + $0x88] sm:$0xff]
  %v82 = vld [vmem:[%s0 + $0x90] sm:$0xff]
  %v83 = vld [vmem:[%s0 + $0x98] sm:$0xff]
  %v84 = vld [vmem:[%s0 + $0xa0] sm:$0xff]
  %v85 = vld [vmem:[%s0 + $0xa8] sm:$0xff]
  %v86 = vld [vmem:[%s0 + $0xb0] sm:$0xff]
  %v87 = vld [vmem:[%s0 + $0xb8] sm:$0xff]
  %v88 = vld [vmem:[%s0 + $0xc0] sm:$0xff]
  %v89 = vld [vmem:[%s0 + $0xc8] sm:$0xff]
  %v90 = vld [vmem:[%s0 + $0xd0] sm:$0xff]
  %v91 = vld [vmem:[%s0 + $0xd8] sm:$0xff]
  %v92 = vld [vmem:[%s0 + $0xe0] sm:$0xff]
  %v93 = vld [vmem:[%s0 + $0xe8] sm:$0xff]
  %v94 = vld [vmem:[%s0 + $0xf0] sm:$0xff]
  %v95 = vld [vmem:[%s0 + $0xf8] sm:$0xff]
  %s96 = scalar_lea.vmem %s0, 256
  %v97 = vld [vmem:[%s96] sm:$0xff]
  %v98 = vld [vmem:[%s96 + $0x8] sm:$0xff]
  %v99 = vld [vmem:[%s96 + $0x10] sm:$0xff]
  %v100 = vld [vmem:[%s96 + $0x18] sm:$0xff]
  %v101 = vld [vmem:[%s96 + $0x20] sm:$0xff]
  %v102 = vld [vmem:[%s96 + $0x28] sm:$0xff]
  %v103 = vld [vmem:[%s96 + $0x30] sm:$0xff]
  %v104 = vld [vmem:[%s96 + $0x38] sm:$0xff]
  %v105 = vld [vmem:[%s96 + $0x40] sm:$0xff]
  %v106 = vld [vmem:[%s96 + $0x48] sm:$0xff]
  %v107 = vld [vmem:[%s96 + $0x50] sm:$0xff]
  %v108 = vld [vmem:[%s96 + $0x58] sm:$0xff]
  %v109 = vld [vmem:[%s96 + $0x60] sm:$0xff]
  %v110 = vld [vmem:[%s96 + $0x68] sm:$0xff]
  %v111 = vld [vmem:[%s96 + $0x70] sm:$0xff]
  %v112 = vld [vmem:[%s96 + $0x78] sm:$0xff]
  %v113 = vld [vmem:[%s96 + $0x80] sm:$0xff]
  %v114 = vld [vmem:[%s96 + $0x88] sm:$0xff]
  %v115 = vld [vmem:[%s96 + $0x90] sm:$0xff]
  %v116 = vld [vmem:[%s96 + $0x98] sm:$0xff]
  %v117 = vld [vmem:[%s96 + $0xa0] sm:$0xff]
  %v118 = vld [vmem:[%s96 + $0xa8] sm:$0xff]
  %v119 = vld [vmem:[%s96 + $0xb0] sm:$0xff]
  %v120 = vld [vmem:[%s96 + $0xb8] sm:$0xff]
  %v121 = vld [vmem:[%s96 + $0xc0] sm:$0xff]
  %v122 = vld [vmem:[%s96 + $0xc8] sm:$0xff]
  %v123 = vld [vmem:[%s96 + $0xd0] sm:$0xff]
  %v124 = vld [vmem:[%s96 + $0xd8] sm:$0xff]
  %v125 = vld [vmem:[%s96 + $0xe0] sm:$0xff]
  %v126 = vld [vmem:[%s96 + $0xe8] sm:$0xff]
  %v127 = vld [vmem:[%s96 + $0xf0] sm:$0xff]
  %v128 = vld [vmem:[%s96 + $0xf8] sm:$0xff]
  %v129 = vadd.f32 %v64, %v97
  %v130 = vadd.f32 %v65, %v98
  %v131 = vadd.f32 %v66, %v99
  %v132 = vadd.f32 %v67, %v100
  %v133 = vadd.f32 %v68, %v101
  %v134 = vadd.f32 %v69, %v102
  %v135 = vadd.f32 %v70, %v103
  %v136 = vadd.f32 %v71, %v104
  %v137 = vadd.f32 %v72, %v105
  %v138 = vadd.f32 %v73, %v106
  %v139 = vadd.f32 %v74, %v107
  %v140 = vadd.f32 %v75, %v108
  %v141 = vadd.f32 %v76, %v109
  %v142 = vadd.f32 %v77, %v110
  %v143 = vadd.f32 %v78, %v111
  %v144 = vadd.f32 %v79, %v112
  %v145 = vadd.f32 %v80, %v113
  %v146 = vadd.f32 %v81, %v114
  %v147 = vadd.f32 %v82, %v115
  %v148 = vadd.f32 %v83, %v116
  %v149 = vadd.f32 %v84, %v117
  %v150 = vadd.f32 %v85, %v118
  %v151 = vadd.f32 %v86, %v119
  %v152 = vadd.f32 %v87, %v120
  %v153 = vadd.f32 %v88, %v121
  %v154 = vadd.f32 %v89, %v122
  %v155 = vadd.f32 %v90, %v123
  %v156 = vadd.f32 %v91, %v124
  %v157 = vadd.f32 %v92, %v125
  %v158 = vadd.f32 %v93, %v126
  %v159 = vadd.f32 %v94, %v127
  %v160 = vadd.f32 %v95, %v128
  %s161 = scalar_lea.vmem %s0, 512
  %v162 = vld [vmem:[%s161] sm:$0xff]
  %v163 = vld [vmem:[%s161 + $0x8] sm:$0xff]
  %v164 = vld [vmem:[%s161 + $0x10] sm:$0xff]
  %v165 = vld [vmem:[%s161 + $0x18] sm:$0xff]
  %v166 = vld [vmem:[%s161 + $0x20] sm:$0xff]
  %v167 = vld [vmem:[%s161 + $0x28] sm:$0xff]
  %v168 = vld [vmem:[%s161 + $0x30] sm:$0xff]
  %v169 = vld [vmem:[%s161 + $0x38] sm:$0xff]
  %v170 = vld [vmem:[%s161 + $0x40] sm:$0xff]
  %v171 = vld [vmem:[%s161 + $0x48] sm:$0xff]
  %v172 = vld [vmem:[%s161 + $0x50] sm:$0xff]
  %v173 = vld [vmem:[%s161 + $0x58] sm:$0xff]
  %v174 = vld [vmem:[%s161 + $0x60] sm:$0xff]
  %v175 = vld [vmem:[%s161 + $0x68] sm:$0xff]
  %v176 = vld [vmem:[%s161 + $0x70] sm:$0xff]
  %v177 = vld [vmem:[%s161 + $0x78] sm:$0xff]
  %v178 = vld [vmem:[%s161 + $0x80] sm:$0xff]
  %v179 = vld [vmem:[%s161 + $0x88] sm:$0xff]
  %v180 = vld [vmem:[%s161 + $0x90] sm:$0xff]
  %v181 = vld [vmem:[%s161 + $0x98] sm:$0xff]
  %v182 = vld [vmem:[%s161 + $0xa0] sm:$0xff]
  %v183 = vld [vmem:[%s161 + $0xa8] sm:$0xff]
  %v184 = vld [vmem:[%s161 + $0xb0] sm:$0xff]
  %v185 = vld [vmem:[%s161 + $0xb8] sm:$0xff]
  %v186 = vld [vmem:[%s161 + $0xc0] sm:$0xff]
  %v187 = vld [vmem:[%s161 + $0xc8] sm:$0xff]
  %v188 = vld [vmem:[%s161 + $0xd0] sm:$0xff]
  %v189 = vld [vmem:[%s161 + $0xd8] sm:$0xff]
  %v190 = vld [vmem:[%s161 + $0xe0] sm:$0xff]
  %v191 = vld [vmem:[%s161 + $0xe8] sm:$0xff]
  %v192 = vld [vmem:[%s161 + $0xf0] sm:$0xff]
  %v193 = vld [vmem:[%s161 + $0xf8] sm:$0xff]
  %v194 = vadd.f32 %v129, %v162
  %v195 = vadd.f32 %v130, %v163
  %v196 = vadd.f32 %v131, %v164
  %v197 = vadd.f32 %v132, %v165
  %v198 = vadd.f32 %v133, %v166
  %v199 = vadd.f32 %v134, %v167
  %v200 = vadd.f32 %v135, %v168
  %v201 = vadd.f32 %v136, %v169
  %v202 = vadd.f32 %v137, %v170
  %v203 = vadd.f32 %v138, %v171
  %v204 = vadd.f32 %v139, %v172
  %v205 = vadd.f32 %v140, %v173
  %v206 = vadd.f32 %v141, %v174
  %v207 = vadd.f32 %v142, %v175
  %v208 = vadd.f32 %v143, %v176
  %v209 = vadd.f32 %v144, %v177
  %v210 = vadd.f32 %v145, %v178
  %v211 = vadd.f32 %v146, %v179
  %v212 = vadd.f32 %v147, %v180
  %v213 = vadd.f32 %v148, %v181
  %v214 = vadd.f32 %v149, %v182
  %v215 = vadd.f32 %v150, %v183
  %v216 = vadd.f32 %v151, %v184
  %v217 = vadd.f32 %v152, %v185
  %v218 = vadd.f32 %v153, %v186
  %v219 = vadd.f32 %v154, %v187
  %v220 = vadd.f32 %v155, %v188
  %v221 = vadd.f32 %v156, %v189
  %v222 = vadd.f32 %v157, %v190
  %v223 = vadd.f32 %v158, %v191
  %v224 = vadd.f32 %v159, %v192
  %v225 = vadd.f32 %v160, %v193
  %s226 = scalar_lea.vmem [#allocation2], 48
  %227 = vst.msk [vmem:[%s226 + $0x2] sm:$0xff] %vm8, %v194
  %228 = vst.msk [vmem:[%s226 + $0xa] sm:$0xff] %vm8, %v195
  %229 = vst.msk [vmem:[%s226 + $0x1a] sm:$0xff] %vm8, %v196
  %230 = vst.msk [vmem:[%s226 + $0x22] sm:$0xff] %vm8, %v197
  %231 = vst.msk [vmem:[%s226 + $0x32] sm:$0xff] %vm8, %v198
  %232 = vst.msk [vmem:[%s226 + $0x3a] sm:$0xff] %vm8, %v199
  %233 = vst.msk [vmem:[%s226 + $0x4a] sm:$0xff] %vm8, %v200
  %234 = vst.msk [vmem:[%s226 + $0x52] sm:$0xff] %vm8, %v201
  %235 = vst.msk [vmem:[%s226 + $0x62] sm:$0xff] %vm8, %v202
  %236 = vst.msk [vmem:[%s226 + $0x6a] sm:$0xff] %vm8, %v203
  %237 = vst.msk [vmem:[%s226 + $0x7a] sm:$0xff] %vm8, %v204
  %238 = vst.msk [vmem:[%s226 + $0x82] sm:$0xff] %vm8, %v205
  %239 = vst.msk [vmem:[%s226 + $0x92] sm:$0xff] %vm8, %v206
  %240 = vst.msk [vmem:[%s226 + $0x9a] sm:$0xff] %vm8, %v207
  %241 = vst.msk [vmem:[%s226 + $0xaa] sm:$0xff] %vm8, %v208
  %242 = vst.msk [vmem:[%s226 + $0xb2] sm:$0xff] %vm8, %v209
  %243 = vst.msk [vmem:[%s226 + $0xc2] sm:$0xff] %vm8, %v210
  %244 = vst.msk [vmem:[%s226 + $0xca] sm:$0xff] %vm8, %v211
  %245 = vst.msk [vmem:[%s226 + $0xda] sm:$0xff] %vm8, %v212
  %246 = vst.msk [vmem:[%s226 + $0xe2] sm:$0xff] %vm8, %v213
  %247 = vst.msk [vmem:[%s226 + $0xf2] sm:$0xff] %vm8, %v214
  %248 = vst.msk [vmem:[%s226 + $0xfa] sm:$0xff] %vm8, %v215
  %249 = vst.msk [vmem:[%s226 + $0x10a] sm:$0xff] %vm8, %v216
  %250 = vst.msk [vmem:[%s226 + $0x112] sm:$0xff] %vm8, %v217
  %251 = vst.msk [vmem:[%s226 + $0x122] sm:$0xff] %vm8, %v218
  %252 = vst.msk [vmem:[%s226 + $0x12a] sm:$0xff] %vm8, %v219
  %253 = vst.msk [vmem:[%s226 + $0x13a] sm:$0xff] %vm8, %v220
  %254 = vst.msk [vmem:[%s226 + $0x142] sm:$0xff] %vm8, %v221
  %255 = vst.msk [vmem:[%s226 + $0x152] sm:$0xff] %vm8, %v222
  %256 = vst.msk [vmem:[%s226 + $0x15a] sm:$0xff] %vm8, %v223
  %257 = vst.msk [vmem:[%s226 + $0x16a] sm:$0xff] %vm8, %v224
  %258 = vst.msk [vmem:[%s226 + $0x172] sm:$0xff] %vm8, %v225
  %v259 = vld [vmem:[%s226 + $0x2] sm:$0xff]
  %v260 = vld [vmem:[%s226 + $0xa] sm:$0xff]
  %v261 = vld [vmem:[%s226 + $0x1a] sm:$0xff]
  %v262 = vld [vmem:[%s226 + $0x22] sm:$0xff]
  %v263 = vld [vmem:[%s226 + $0x32] sm:$0xff]
  %v264 = vld [vmem:[%s226 + $0x3a] sm:$0xff]
  %v265 = vld [vmem:[%s226 + $0x4a] sm:$0xff]
  %v266 = vld [vmem:[%s226 + $0x52] sm:$0xff]
  %v267 = vld [vmem:[%s226 + $0x62] sm:$0xff]
  %v268 = vld [vmem:[%s226 + $0x6a] sm:$0xff]
  %v269 = vld [vmem:[%s226 + $0x7a] sm:$0xff]
  %v270 = vld [vmem:[%s226 + $0x82] sm:$0xff]
  %v271 = vld [vmem:[%s226 + $0x92] sm:$0xff]
  %v272 = vld [vmem:[%s226 + $0x9a] sm:$0xff]
  %v273 = vld [vmem:[%s226 + $0xaa] sm:$0xff]
  %v274 = vld [vmem:[%s226 + $0xb2] sm:$0xff]
  %v275 = vld [vmem:[%s226 + $0xc2] sm:$0xff]
  %v276 = vld [vmem:[%s226 + $0xca] sm:$0xff]
  %v277 = vld [vmem:[%s226 + $0xda] sm:$0xff]
  %v278 = vld [vmem:[%s226 + $0xe2] sm:$0xff]
  %v279 = vld [vmem:[%s226 + $0xf2] sm:$0xff]
  %v280 = vld [vmem:[%s226 + $0xfa] sm:$0xff]
  %v281 = vld [vmem:[%s226 + $0x10a] sm:$0xff]
  %v282 = vld [vmem:[%s226 + $0x112] sm:$0xff]
  %v283 = vld [vmem:[%s226 + $0x122] sm:$0xff]
  %v284 = vld [vmem:[%s226 + $0x12a] sm:$0xff]
  %v285 = vld [vmem:[%s226 + $0x13a] sm:$0xff]
  %v286 = vld [vmem:[%s226 + $0x142] sm:$0xff]
  %v287 = vld [vmem:[%s226 + $0x152] sm:$0xff]
  %v288 = vld [vmem:[%s226 + $0x15a] sm:$0xff]
  %v289 = vld [vmem:[%s226 + $0x16a] sm:$0xff]
  %v290 = vld [vmem:[%s226 + $0x172] sm:$0xff]
  %s291 = scalar_lea.vmem [#allocation2], 24
  %v292 = vld [vmem:[%s291 + $0x1] sm:$0xff]
  %v293 = vld [vmem:[%s291 + $0x9] sm:$0xff]
  %v294 = vld [vmem:[%s291 + $0x19] sm:$0xff]
  %v295 = vld [vmem:[%s291 + $0x21] sm:$0xff]
  %v296 = vld [vmem:[%s291 + $0x31] sm:$0xff]
  %v297 = vld [vmem:[%s291 + $0x39] sm:$0xff]
  %v298 = vld [vmem:[%s291 + $0x49] sm:$0xff]
  %v299 = vld [vmem:[%s291 + $0x51] sm:$0xff]
  %v300 = vld [vmem:[%s291 + $0x61] sm:$0xff]
  %v301 = vld [vmem:[%s291 + $0x69] sm:$0xff]
  %v302 = vld [vmem:[%s291 + $0x79] sm:$0xff]
  %v303 = vld [vmem:[%s291 + $0x81] sm:$0xff]
  %v304 = vld [vmem:[%s291 + $0x91] sm:$0xff]
  %v305 = vld [vmem:[%s291 + $0x99] sm:$0xff]
  %v306 = vld [vmem:[%s291 + $0xa9] sm:$0xff]
  %v307 = vld [vmem:[%s291 + $0xb1] sm:$0xff]
  %v308 = vld [vmem:[%s291 + $0xc1] sm:$0xff]
  %v309 = vld [vmem:[%s291 + $0xc9] sm:$0xff]
  %v310 = vld [vmem:[%s291 + $0xd9] sm:$0xff]
  %v311 = vld [vmem:[%s291 + $0xe1] sm:$0xff]
  %v312 = vld [vmem:[%s291 + $0xf1] sm:$0xff]
  %v313 = vld [vmem:[%s291 + $0xf9] sm:$0xff]
  %v314 = vld [vmem:[%s291 + $0x109] sm:$0xff]
  %v315 = vld [vmem:[%s291 + $0x111] sm:$0xff]
  %v316 = vld [vmem:[%s291 + $0x121] sm:$0xff]
  %v317 = vld [vmem:[%s291 + $0x129] sm:$0xff]
  %v318 = vld [vmem:[%s291 + $0x139] sm:$0xff]
  %v319 = vld [vmem:[%s291 + $0x141] sm:$0xff]
  %v320 = vld [vmem:[%s291 + $0x151] sm:$0xff]
  %v321 = vld [vmem:[%s291 + $0x159] sm:$0xff]
  %v322 = vld [vmem:[%s291 + $0x169] sm:$0xff]
  %v323 = vld [vmem:[%s291 + $0x171] sm:$0xff]
  %v324 = vld [vmem:[%s291 + $0x3] sm:$0xff]
  %v325 = vld [vmem:[%s291 + $0xb] sm:$0xff]
  %v326 = vld [vmem:[%s291 + $0x1b] sm:$0xff]
  %v327 = vld [vmem:[%s291 + $0x23] sm:$0xff]
  %v328 = vld [vmem:[%s291 + $0x33] sm:$0xff]
  %v329 = vld [vmem:[%s291 + $0x3b] sm:$0xff]
  %v330 = vld [vmem:[%s291 + $0x4b] sm:$0xff]
  %v331 = vld [vmem:[%s291 + $0x53] sm:$0xff]
  %v332 = vld [vmem:[%s291 + $0x63] sm:$0xff]
  %v333 = vld [vmem:[%s291 + $0x6b] sm:$0xff]
  %v334 = vld [vmem:[%s291 + $0x7b] sm:$0xff]
  %v335 = vld [vmem:[%s291 + $0x83] sm:$0xff]
  %v336 = vld [vmem:[%s291 + $0x93] sm:$0xff]
  %v337 = vld [vmem:[%s291 + $0x9b] sm:$0xff]
  %v338 = vld [vmem:[%s291 + $0xab] sm:$0xff]
  %v339 = vld [vmem:[%s291 + $0xb3] sm:$0xff]
  %v340 = vld [vmem:[%s291 + $0xc3] sm:$0xff]
  %v341 = vld [vmem:[%s291 + $0xcb] sm:$0xff]
  %v342 = vld [vmem:[%s291 + $0xdb] sm:$0xff]
  %v343 = vld [vmem:[%s291 + $0xe3] sm:$0xff]
  %v344 = vld [vmem:[%s291 + $0xf3] sm:$0xff]
  %v345 = vld [vmem:[%s291 + $0xfb] sm:$0xff]
  %v346 = vld [vmem:[%s291 + $0x10b] sm:$0xff]
  %v347 = vld [vmem:[%s291 + $0x113] sm:$0xff]
  %v348 = vld [vmem:[%s291 + $0x123] sm:$0xff]
  %v349 = vld [vmem:[%s291 + $0x12b] sm:$0xff]
  %v350 = vld [vmem:[%s291 + $0x13b] sm:$0xff]
  %v351 = vld [vmem:[%s291 + $0x143] sm:$0xff]
  %v352 = vld [vmem:[%s291 + $0x153] sm:$0xff]
  %v353 = vld [vmem:[%s291 + $0x15b] sm:$0xff]
  %v354 = vld [vmem:[%s291 + $0x16b] sm:$0xff]
  %v355 = vld [vmem:[%s291 + $0x173] sm:$0xff]
  %v356 = vadd.f32 %v292, %v324
  %v357 = vadd.f32 %v293, %v325
  %v358 = vadd.f32 %v294, %v326
  %v359 = vadd.f32 %v295, %v327
  %v360 = vadd.f32 %v296, %v328
  %v361 = vadd.f32 %v297, %v329
  %v362 = vadd.f32 %v298, %v330
  %v363 = vadd.f32 %v299, %v331
  %v364 = vadd.f32 %v300, %v332
  %v365 = vadd.f32 %v301, %v333
  %v366 = vadd.f32 %v302, %v334
  %v367 = vadd.f32 %v303, %v335
  %v368 = vadd.f32 %v304, %v336
  %v369 = vadd.f32 %v305, %v337
  %v370 = vadd.f32 %v306, %v338
  %v371 = vadd.f32 %v307, %v339
  %v372 = vadd.f32 %v308, %v340
  %v373 = vadd.f32 %v309, %v341
  %v374 = vadd.f32 %v310, %v342
  %v375 = vadd.f32 %v311, %v343
  %v376 = vadd.f32 %v312, %v344
  %v377 = vadd.f32 %v313, %v345
  %v378 = vadd.f32 %v314, %v346
  %v379 = vadd.f32 %v315, %v347
  %v380 = vadd.f32 %v316, %v348
  %v381 = vadd.f32 %v317, %v349
  %v382 = vadd.f32 %v318, %v350
  %v383 = vadd.f32 %v319, %v351
  %v384 = vadd.f32 %v320, %v352
  %v385 = vadd.f32 %v321, %v353
  %v386 = vadd.f32 %v322, %v354
  %v387 = vadd.f32 %v323, %v355
  %s388 = scalar_lea.vmem [#allocation2], 72
  %v389 = vld [vmem:[%s388 + $0x1] sm:$0xff]
  %v390 = vld [vmem:[%s388 + $0x9] sm:$0xff]
  %v391 = vld [vmem:[%s388 + $0x19] sm:$0xff]
  %v392 = vld [vmem:[%s388 + $0x21] sm:$0xff]
  %v393 = vld [vmem:[%s388 + $0x31] sm:$0xff]
  %v394 = vld [vmem:[%s388 + $0x39] sm:$0xff]
  %v395 = vld [vmem:[%s388 + $0x49] sm:$0xff]
  %v396 = vld [vmem:[%s388 + $0x51] sm:$0xff]
  %v397 = vld [vmem:[%s388 + $0x61] sm:$0xff]
  %v398 = vld [vmem:[%s388 + $0x69] sm:$0xff]
  %v399 = vld [vmem:[%s388 + $0x79] sm:$0xff]
  %v400 = vld [vmem:[%s388 + $0x81] sm:$0xff]
  %v401 = vld [vmem:[%s388 + $0x91] sm:$0xff]
  %v402 = vld [vmem:[%s388 + $0x99] sm:$0xff]
  %v403 = vld [vmem:[%s388 + $0xa9] sm:$0xff]
  %v404 = vld [vmem:[%s388 + $0xb1] sm:$0xff]
  %v405 = vld [vmem:[%s388 + $0xc1] sm:$0xff]
  %v406 = vld [vmem:[%s388 + $0xc9] sm:$0xff]
  %v407 = vld [vmem:[%s388 + $0xd9] sm:$0xff]
  %v408 = vld [vmem:[%s388 + $0xe1] sm:$0xff]
  %v409 = vld [vmem:[%s388 + $0xf1] sm:$0xff]
  %v410 = vld [vmem:[%s388 + $0xf9] sm:$0xff]
  %v411 = vld [vmem:[%s388 + $0x109] sm:$0xff]
  %v412 = vld [vmem:[%s388 + $0x111] sm:$0xff]
  %v413 = vld [vmem:[%s388 + $0x121] sm:$0xff]
  %v414 = vld [vmem:[%s388 + $0x129] sm:$0xff]
  %v415 = vld [vmem:[%s388 + $0x139] sm:$0xff]
  %v416 = vld [vmem:[%s388 + $0x141] sm:$0xff]
  %v417 = vld [vmem:[%s388 + $0x151] sm:$0xff]
  %v418 = vld [vmem:[%s388 + $0x159] sm:$0xff]
  %v419 = vld [vmem:[%s388 + $0x169] sm:$0xff]
  %v420 = vld [vmem:[%s388 + $0x171] sm:$0xff]
  %v421 = vadd.f32 %v356, %v389
  %v422 = vadd.f32 %v357, %v390
  %v423 = vadd.f32 %v358, %v391
  %v424 = vadd.f32 %v359, %v392
  %v425 = vadd.f32 %v360, %v393
  %v426 = vadd.f32 %v361, %v394
  %v427 = vadd.f32 %v362, %v395
  %v428 = vadd.f32 %v363, %v396
  %v429 = vadd.f32 %v364, %v397
  %v430 = vadd.f32 %v365, %v398
  %v431 = vadd.f32 %v366, %v399
  %v432 = vadd.f32 %v367, %v400
  %v433 = vadd.f32 %v368, %v401
  %v434 = vadd.f32 %v369, %v402
  %v435 = vadd.f32 %v370, %v403
  %v436 = vadd.f32 %v371, %v404
  %v437 = vadd.f32 %v372, %v405
  %v438 = vadd.f32 %v373, %v406
  %v439 = vadd.f32 %v374, %v407
  %v440 = vadd.f32 %v375, %v408
  %v441 = vadd.f32 %v376, %v409
  %v442 = vadd.f32 %v377, %v410
  %v443 = vadd.f32 %v378, %v411
  %v444 = vadd.f32 %v379, %v412
  %v445 = vadd.f32 %v380, %v413
  %v446 = vadd.f32 %v381, %v414
  %v447 = vadd.f32 %v382, %v415
  %v448 = vadd.f32 %v383, %v416
  %v449 = vadd.f32 %v384, %v417
  %v450 = vadd.f32 %v385, %v418
  %v451 = vadd.f32 %v386, %v419
  %v452 = vadd.f32 %v387, %v420
  %v453 = vld [vmem:[%s388 + $0x3] sm:$0xff]
  %v454 = vld [vmem:[%s388 + $0xb] sm:$0xff]
  %v455 = vld [vmem:[%s388 + $0x1b] sm:$0xff]
  %v456 = vld [vmem:[%s388 + $0x23] sm:$0xff]
  %v457 = vld [vmem:[%s388 + $0x33] sm:$0xff]
  %v458 = vld [vmem:[%s388 + $0x3b] sm:$0xff]
  %v459 = vld [vmem:[%s388 + $0x4b] sm:$0xff]
  %v460 = vld [vmem:[%s388 + $0x53] sm:$0xff]
  %v461 = vld [vmem:[%s388 + $0x63] sm:$0xff]
  %v462 = vld [vmem:[%s388 + $0x6b] sm:$0xff]
  %v463 = vld [vmem:[%s388 + $0x7b] sm:$0xff]
  %v464 = vld [vmem:[%s388 + $0x83] sm:$0xff]
  %v465 = vld [vmem:[%s388 + $0x93] sm:$0xff]
  %v466 = vld [vmem:[%s388 + $0x9b] sm:$0xff]
  %v467 = vld [vmem:[%s388 + $0xab] sm:$0xff]
  %v468 = vld [vmem:[%s388 + $0xb3] sm:$0xff]
  %v469 = vld [vmem:[%s388 + $0xc3] sm:$0xff]
  %v470 = vld [vmem:[%s388 + $0xcb] sm:$0xff]
  %v471 = vld [vmem:[%s388 + $0xdb] sm:$0xff]
  %v472 = vld [vmem:[%s388 + $0xe3] sm:$0xff]
  %v473 = vld [vmem:[%s388 + $0xf3] sm:$0xff]
  %v474 = vld [vmem:[%s388 + $0xfb] sm:$0xff]
  %v475 = vld [vmem:[%s388 + $0x10b] sm:$0xff]
  %v476 = vld [vmem:[%s388 + $0x113] sm:$0xff]
  %v477 = vld [vmem:[%s388 + $0x123] sm:$0xff]
  %v478 = vld [vmem:[%s388 + $0x12b] sm:$0xff]
  %v479 = vld [vmem:[%s388 + $0x13b] sm:$0xff]
  %v480 = vld [vmem:[%s388 + $0x143] sm:$0xff]
  %v481 = vld [vmem:[%s388 + $0x153] sm:$0xff]
  %v482 = vld [vmem:[%s388 + $0x15b] sm:$0xff]
  %v483 = vld [vmem:[%s388 + $0x16b] sm:$0xff]
  %v484 = vld [vmem:[%s388 + $0x173] sm:$0xff]
  %v485 = vadd.f32 %v421, %v453
  %v486 = vadd.f32 %v422, %v454
  %v487 = vadd.f32 %v423, %v455
  %v488 = vadd.f32 %v424, %v456
  %v489 = vadd.f32 %v425, %v457
  %v490 = vadd.f32 %v426, %v458
  %v491 = vadd.f32 %v427, %v459
  %v492 = vadd.f32 %v428, %v460
  %v493 = vadd.f32 %v429, %v461
  %v494 = vadd.f32 %v430, %v462
  %v495 = vadd.f32 %v431, %v463
  %v496 = vadd.f32 %v432, %v464
  %v497 = vadd.f32 %v433, %v465
  %v498 = vadd.f32 %v434, %v466
  %v499 = vadd.f32 %v435, %v467
  %v500 = vadd.f32 %v436, %v468
  %v501 = vadd.f32 %v437, %v469
  %v502 = vadd.f32 %v438, %v470
  %v503 = vadd.f32 %v439, %v471
  %v504 = vadd.f32 %v440, %v472
  %v505 = vadd.f32 %v441, %v473
  %v506 = vadd.f32 %v442, %v474
  %v507 = vadd.f32 %v443, %v475
  %v508 = vadd.f32 %v444, %v476
  %v509 = vadd.f32 %v445, %v477
  %v510 = vadd.f32 %v446, %v478
  %v511 = vadd.f32 %v447, %v479
  %v512 = vadd.f32 %v448, %v480
  %v513 = vadd.f32 %v449, %v481
  %v514 = vadd.f32 %v450, %v482
  %v515 = vadd.f32 %v451, %v483
  %v516 = vadd.f32 %v452, %v484
  %v517 = vld [vmem:[%s291 + $0x2] sm:$0xff]
  %v518 = vld [vmem:[%s291 + $0xa] sm:$0xff]
  %v519 = vld [vmem:[%s291 + $0x1a] sm:$0xff]
  %v520 = vld [vmem:[%s291 + $0x22] sm:$0xff]
  %v521 = vld [vmem:[%s291 + $0x32] sm:$0xff]
  %v522 = vld [vmem:[%s291 + $0x3a] sm:$0xff]
  %v523 = vld [vmem:[%s291 + $0x4a] sm:$0xff]
  %v524 = vld [vmem:[%s291 + $0x52] sm:$0xff]
  %v525 = vld [vmem:[%s291 + $0x62] sm:$0xff]
  %v526 = vld [vmem:[%s291 + $0x6a] sm:$0xff]
  %v527 = vld [vmem:[%s291 + $0x7a] sm:$0xff]
  %v528 = vld [vmem:[%s291 + $0x82] sm:$0xff]
  %v529 = vld [vmem:[%s291 + $0x92] sm:$0xff]
  %v530 = vld [vmem:[%s291 + $0x9a] sm:$0xff]
  %v531 = vld [vmem:[%s291 + $0xaa] sm:$0xff]
  %v532 = vld [vmem:[%s291 + $0xb2] sm:$0xff]
  %v533 = vld [vmem:[%s291 + $0xc2] sm:$0xff]
  %v534 = vld [vmem:[%s291 + $0xca] sm:$0xff]
  %v535 = vld [vmem:[%s291 + $0xda] sm:$0xff]
  %v536 = vld [vmem:[%s291 + $0xe2] sm:$0xff]
  %v537 = vld [vmem:[%s291 + $0xf2] sm:$0xff]
  %v538 = vld [vmem:[%s291 + $0xfa] sm:$0xff]
  %v539 = vld [vmem:[%s291 + $0x10a] sm:$0xff]
  %v540 = vld [vmem:[%s291 + $0x112] sm:$0xff]
  %v541 = vld [vmem:[%s291 + $0x122] sm:$0xff]
  %v542 = vld [vmem:[%s291 + $0x12a] sm:$0xff]
  %v543 = vld [vmem:[%s291 + $0x13a] sm:$0xff]
  %v544 = vld [vmem:[%s291 + $0x142] sm:$0xff]
  %v545 = vld [vmem:[%s291 + $0x152] sm:$0xff]
  %v546 = vld [vmem:[%s291 + $0x15a] sm:$0xff]
  %v547 = vld [vmem:[%s291 + $0x16a] sm:$0xff]
  %v548 = vld [vmem:[%s291 + $0x172] sm:$0xff]
  %v549 = vld [vmem:[%s226 + $0x1] sm:$0xff]
  %v550 = vld [vmem:[%s226 + $0x9] sm:$0xff]
  %v551 = vld [vmem:[%s226 + $0x19] sm:$0xff]
  %v552 = vld [vmem:[%s226 + $0x21] sm:$0xff]
  %v553 = vld [vmem:[%s226 + $0x31] sm:$0xff]
  %v554 = vld [vmem:[%s226 + $0x39] sm:$0xff]
  %v555 = vld [vmem:[%s226 + $0x49] sm:$0xff]
  %v556 = vld [vmem:[%s226 + $0x51] sm:$0xff]
  %v557 = vld [vmem:[%s226 + $0x61] sm:$0xff]
  %v558 = vld [vmem:[%s226 + $0x69] sm:$0xff]
  %v559 = vld [vmem:[%s226 + $0x79] sm:$0xff]
  %v560 = vld [vmem:[%s226 + $0x81] sm:$0xff]
  %v561 = vld [vmem:[%s226 + $0x91] sm:$0xff]
  %v562 = vld [vmem:[%s226 + $0x99] sm:$0xff]
  %v563 = vld [vmem:[%s226 + $0xa9] sm:$0xff]
  %v564 = vld [vmem:[%s226 + $0xb1] sm:$0xff]
  %v565 = vld [vmem:[%s226 + $0xc1] sm:$0xff]
  %v566 = vld [vmem:[%s226 + $0xc9] sm:$0xff]
  %v567 = vld [vmem:[%s226 + $0xd9] sm:$0xff]
  %v568 = vld [vmem:[%s226 + $0xe1] sm:$0xff]
  %v569 = vld [vmem:[%s226 + $0xf1] sm:$0xff]
  %v570 = vld [vmem:[%s226 + $0xf9] sm:$0xff]
  %v571 = vld [vmem:[%s226 + $0x109] sm:$0xff]
  %v572 = vld [vmem:[%s226 + $0x111] sm:$0xff]
  %v573 = vld [vmem:[%s226 + $0x121] sm:$0xff]
  %v574 = vld [vmem:[%s226 + $0x129] sm:$0xff]
  %v575 = vld [vmem:[%s226 + $0x139] sm:$0xff]
  %v576 = vld [vmem:[%s226 + $0x141] sm:$0xff]
  %v577 = vld [vmem:[%s226 + $0x151] sm:$0xff]
  %v578 = vld [vmem:[%s226 + $0x159] sm:$0xff]
  %v579 = vld [vmem:[%s226 + $0x169] sm:$0xff]
  %v580 = vld [vmem:[%s226 + $0x171] sm:$0xff]
  %v581 = vadd.f32 %v517, %v549
  %v582 = vadd.f32 %v518, %v550
  %v583 = vadd.f32 %v519, %v551
  %v584 = vadd.f32 %v520, %v552
  %v585 = vadd.f32 %v521, %v553
  %v586 = vadd.f32 %v522, %v554
  %v587 = vadd.f32 %v523, %v555
  %v588 = vadd.f32 %v524, %v556
  %v589 = vadd.f32 %v525, %v557
  %v590 = vadd.f32 %v526, %v558
  %v591 = vadd.f32 %v527, %v559
  %v592 = vadd.f32 %v528, %v560
  %v593 = vadd.f32 %v529, %v561
  %v594 = vadd.f32 %v530, %v562
  %v595 = vadd.f32 %v531, %v563
  %v596 = vadd.f32 %v532, %v564
  %v597 = vadd.f32 %v533, %v565
  %v598 = vadd.f32 %v534, %v566
  %v599 = vadd.f32 %v535, %v567
  %v600 = vadd.f32 %v536, %v568
  %v601 = vadd.f32 %v537, %v569
  %v602 = vadd.f32 %v538, %v570
  %v603 = vadd.f32 %v539, %v571
  %v604 = vadd.f32 %v540, %v572
  %v605 = vadd.f32 %v541, %v573
  %v606 = vadd.f32 %v542, %v574
  %v607 = vadd.f32 %v543, %v575
  %v608 = vadd.f32 %v544, %v576
  %v609 = vadd.f32 %v545, %v577
  %v610 = vadd.f32 %v546, %v578
  %v611 = vadd.f32 %v547, %v579
  %v612 = vadd.f32 %v548, %v580
  %v613 = vld [vmem:[%s226 + $0x3] sm:$0xff]
  %v614 = vld [vmem:[%s226 + $0xb] sm:$0xff]
  %v615 = vld [vmem:[%s226 + $0x1b] sm:$0xff]
  %v616 = vld [vmem:[%s226 + $0x23] sm:$0xff]
  %v617 = vld [vmem:[%s226 + $0x33] sm:$0xff]
  %v618 = vld [vmem:[%s226 + $0x3b] sm:$0xff]
  %v619 = vld [vmem:[%s226 + $0x4b] sm:$0xff]
  %v620 = vld [vmem:[%s226 + $0x53] sm:$0xff]
  %v621 = vld [vmem:[%s226 + $0x63] sm:$0xff]
  %v622 = vld [vmem:[%s226 + $0x6b] sm:$0xff]
  %v623 = vld [vmem:[%s226 + $0x7b] sm:$0xff]
  %v624 = vld [vmem:[%s226 + $0x83] sm:$0xff]
  %v625 = vld [vmem:[%s226 + $0x93] sm:$0xff]
  %v626 = vld [vmem:[%s226 + $0x9b] sm:$0xff]
  %v627 = vld [vmem:[%s226 + $0xab] sm:$0xff]
  %v628 = vld [vmem:[%s226 + $0xb3] sm:$0xff]
  %v629 = vld [vmem:[%s226 + $0xc3] sm:$0xff]
  %v630 = vld [vmem:[%s226 + $0xcb] sm:$0xff]
  %v631 = vld [vmem:[%s226 + $0xdb] sm:$0xff]
  %v632 = vld [vmem:[%s226 + $0xe3] sm:$0xff]
  %v633 = vld [vmem:[%s226 + $0xf3] sm:$0xff]
  %v634 = vld [vmem:[%s226 + $0xfb] sm:$0xff]
  %v635 = vld [vmem:[%s226 + $0x10b] sm:$0xff]
  %v636 = vld [vmem:[%s226 + $0x113] sm:$0xff]
  %v637 = vld [vmem:[%s226 + $0x123] sm:$0xff]
  %v638 = vld [vmem:[%s226 + $0x12b] sm:$0xff]
  %v639 = vld [vmem:[%s226 + $0x13b] sm:$0xff]
  %v640 = vld [vmem:[%s226 + $0x143] sm:$0xff]
  %v641 = vld [vmem:[%s226 + $0x153] sm:$0xff]
  %v642 = vld [vmem:[%s226 + $0x15b] sm:$0xff]
  %v643 = vld [vmem:[%s226 + $0x16b] sm:$0xff]
  %v644 = vld [vmem:[%s226 + $0x173] sm:$0xff]
  %v645 = vadd.f32 %v581, %v613
  %v646 = vadd.f32 %v582, %v614
  %v647 = vadd.f32 %v583, %v615
  %v648 = vadd.f32 %v584, %v616
  %v649 = vadd.f32 %v585, %v617
  %v650 = vadd.f32 %v586, %v618
  %v651 = vadd.f32 %v587, %v619
  %v652 = vadd.f32 %v588, %v620
  %v653 = vadd.f32 %v589, %v621
  %v654 = vadd.f32 %v590, %v622
  %v655 = vadd.f32 %v591, %v623
  %v656 = vadd.f32 %v592, %v624
  %v657 = vadd.f32 %v593, %v625
  %v658 = vadd.f32 %v594, %v626
  %v659 = vadd.f32 %v595, %v627
  %v660 = vadd.f32 %v596, %v628
  %v661 = vadd.f32 %v597, %v629
  %v662 = vadd.f32 %v598, %v630
  %v663 = vadd.f32 %v599, %v631
  %v664 = vadd.f32 %v600, %v632
  %v665 = vadd.f32 %v601, %v633
  %v666 = vadd.f32 %v602, %v634
  %v667 = vadd.f32 %v603, %v635
  %v668 = vadd.f32 %v604, %v636
  %v669 = vadd.f32 %v605, %v637
  %v670 = vadd.f32 %v606, %v638
  %v671 = vadd.f32 %v607, %v639
  %v672 = vadd.f32 %v608, %v640
  %v673 = vadd.f32 %v609, %v641
  %v674 = vadd.f32 %v610, %v642
  %v675 = vadd.f32 %v611, %v643
  %v676 = vadd.f32 %v612, %v644
  %v677 = vld [vmem:[%s388 + $0x2] sm:$0xff]
  %v678 = vld [vmem:[%s388 + $0xa] sm:$0xff]
  %v679 = vld [vmem:[%s388 + $0x1a] sm:$0xff]
  %v680 = vld [vmem:[%s388 + $0x22] sm:$0xff]
  %v681 = vld [vmem:[%s388 + $0x32] sm:$0xff]
  %v682 = vld [vmem:[%s388 + $0x3a] sm:$0xff]
  %v683 = vld [vmem:[%s388 + $0x4a] sm:$0xff]
  %v684 = vld [vmem:[%s388 + $0x52] sm:$0xff]
  %v685 = vld [vmem:[%s388 + $0x62] sm:$0xff]
  %v686 = vld [vmem:[%s388 + $0x6a] sm:$0xff]
  %v687 = vld [vmem:[%s388 + $0x7a] sm:$0xff]
  %v688 = vld [vmem:[%s388 + $0x82] sm:$0xff]
  %v689 = vld [vmem:[%s388 + $0x92] sm:$0xff]
  %v690 = vld [vmem:[%s388 + $0x9a] sm:$0xff]
  %v691 = vld [vmem:[%s388 + $0xaa] sm:$0xff]
  %v692 = vld [vmem:[%s388 + $0xb2] sm:$0xff]
  %v693 = vld [vmem:[%s388 + $0xc2] sm:$0xff]
  %v694 = vld [vmem:[%s388 + $0xca] sm:$0xff]
  %v695 = vld [vmem:[%s388 + $0xda] sm:$0xff]
  %v696 = vld [vmem:[%s388 + $0xe2] sm:$0xff]
  %v697 = vld [vmem:[%s388 + $0xf2] sm:$0xff]
  %v698 = vld [vmem:[%s388 + $0xfa] sm:$0xff]
  %v699 = vld [vmem:[%s388 + $0x10a] sm:$0xff]
  %v700 = vld [vmem:[%s388 + $0x112] sm:$0xff]
  %v701 = vld [vmem:[%s388 + $0x122] sm:$0xff]
  %v702 = vld [vmem:[%s388 + $0x12a] sm:$0xff]
  %v703 = vld [vmem:[%s388 + $0x13a] sm:$0xff]
  %v704 = vld [vmem:[%s388 + $0x142] sm:$0xff]
  %v705 = vld [vmem:[%s388 + $0x152] sm:$0xff]
  %v706 = vld [vmem:[%s388 + $0x15a] sm:$0xff]
  %v707 = vld [vmem:[%s388 + $0x16a] sm:$0xff]
  %v708 = vld [vmem:[%s388 + $0x172] sm:$0xff]
  %v709 = vadd.f32 %v645, %v677
  %v710 = vadd.f32 %v646, %v678
  %v711 = vadd.f32 %v647, %v679
  %v712 = vadd.f32 %v648, %v680
  %v713 = vadd.f32 %v649, %v681
  %v714 = vadd.f32 %v650, %v682
  %v715 = vadd.f32 %v651, %v683
  %v716 = vadd.f32 %v652, %v684
  %v717 = vadd.f32 %v653, %v685
  %v718 = vadd.f32 %v654, %v686
  %v719 = vadd.f32 %v655, %v687
  %v720 = vadd.f32 %v656, %v688
  %v721 = vadd.f32 %v657, %v689
  %v722 = vadd.f32 %v658, %v690
  %v723 = vadd.f32 %v659, %v691
  %v724 = vadd.f32 %v660, %v692
  %v725 = vadd.f32 %v661, %v693
  %v726 = vadd.f32 %v662, %v694
  %v727 = vadd.f32 %v663, %v695
  %v728 = vadd.f32 %v664, %v696
  %v729 = vadd.f32 %v665, %v697
  %v730 = vadd.f32 %v666, %v698
  %v731 = vadd.f32 %v667, %v699
  %v732 = vadd.f32 %v668, %v700
  %v733 = vadd.f32 %v669, %v701
  %v734 = vadd.f32 %v670, %v702
  %v735 = vadd.f32 %v671, %v703
  %v736 = vadd.f32 %v672, %v704
  %v737 = vadd.f32 %v673, %v705
  %v738 = vadd.f32 %v674, %v706
  %v739 = vadd.f32 %v675, %v707
  %v740 = vadd.f32 %v676, %v708
  %v741 = vld [vmem:[#allocation2] sm:$0xff]
  %v742 = vld [vmem:[#allocation2 + $0x8] sm:$0xff]
  %v743 = vld [vmem:[#allocation2 + $0x18] sm:$0xff]
  %v744 = vld [vmem:[#allocation2 + $0x20] sm:$0xff]
  %v745 = vld [vmem:[#allocation2 + $0x30] sm:$0xff]
  %v746 = vld [vmem:[#allocation2 + $0x38] sm:$0xff]
  %v747 = vld [vmem:[#allocation2 + $0x48] sm:$0xff]
  %v748 = vld [vmem:[#allocation2 + $0x50] sm:$0xff]
  %v749 = vld [vmem:[#allocation2 + $0x60] sm:$0xff]
  %v750 = vld [vmem:[#allocation2 + $0x68] sm:$0xff]
  %v751 = vld [vmem:[#allocation2 + $0x78] sm:$0xff]
  %v752 = vld [vmem:[#allocation2 + $0x80] sm:$0xff]
  %v753 = vld [vmem:[#allocation2 + $0x90] sm:$0xff]
  %v754 = vld [vmem:[#allocation2 + $0x98] sm:$0xff]
  %v755 = vld [vmem:[#allocation2 + $0xa8] sm:$0xff]
  %v756 = vld [vmem:[#allocation2 + $0xb0] sm:$0xff]
  %v757 = vld [vmem:[#allocation2 + $0xc0] sm:$0xff]
  %v758 = vld [vmem:[#allocation2 + $0xc8] sm:$0xff]
  %v759 = vld [vmem:[#allocation2 + $0xd8] sm:$0xff]
  %v760 = vld [vmem:[#allocation2 + $0xe0] sm:$0xff]
  %v761 = vld [vmem:[#allocation2 + $0xf0] sm:$0xff]
  %v762 = vld [vmem:[#allocation2 + $0xf8] sm:$0xff]
  %v763 = vld [vmem:[#allocation2 + $0x108] sm:$0xff]
  %v764 = vld [vmem:[#allocation2 + $0x110] sm:$0xff]
  %v765 = vld [vmem:[#allocation2 + $0x120] sm:$0xff]
  %v766 = vld [vmem:[#allocation2 + $0x128] sm:$0xff]
  %v767 = vld [vmem:[#allocation2 + $0x138] sm:$0xff]
  %v768 = vld [vmem:[#allocation2 + $0x140] sm:$0xff]
  %v769 = vld [vmem:[#allocation2 + $0x150] sm:$0xff]
  %v770 = vld [vmem:[#allocation2 + $0x158] sm:$0xff]
  %v771 = vld [vmem:[#allocation2 + $0x168] sm:$0xff]
  %v772 = vld [vmem:[#allocation2 + $0x170] sm:$0xff]
  %v773 = vld [vmem:[#allocation2 + $0x4] sm:$0xff]
  %v774 = vld [vmem:[#allocation2 + $0xc] sm:$0xff]
  %v775 = vld [vmem:[#allocation2 + $0x1c] sm:$0xff]
  %v776 = vld [vmem:[#allocation2 + $0x24] sm:$0xff]
  %v777 = vld [vmem:[#allocation2 + $0x34] sm:$0xff]
  %v778 = vld [vmem:[#allocation2 + $0x3c] sm:$0xff]
  %v779 = vld [vmem:[#allocation2 + $0x4c] sm:$0xff]
  %v780 = vld [vmem:[#allocation2 + $0x54] sm:$0xff]
  %v781 = vld [vmem:[#allocation2 + $0x64] sm:$0xff]
  %v782 = vld [vmem:[#allocation2 + $0x6c] sm:$0xff]
  %v783 = vld [vmem:[#allocation2 + $0x7c] sm:$0xff]
  %v784 = vld [vmem:[#allocation2 + $0x84] sm:$0xff]
  %v785 = vld [vmem:[#allocation2 + $0x94] sm:$0xff]
  %v786 = vld [vmem:[#allocation2 + $0x9c] sm:$0xff]
  %v787 = vld [vmem:[#allocation2 + $0xac] sm:$0xff]
  %v788 = vld [vmem:[#allocation2 + $0xb4] sm:$0xff]
  %v789 = vld [vmem:[#allocation2 + $0xc4] sm:$0xff]
  %v790 = vld [vmem:[#allocation2 + $0xcc] sm:$0xff]
  %v791 = vld [vmem:[#allocation2 + $0xdc] sm:$0xff]
  %v792 = vld [vmem:[#allocation2 + $0xe4] sm:$0xff]
  %v793 = vld [vmem:[#allocation2 + $0xf4] sm:$0xff]
  %v794 = vld [vmem:[#allocation2 + $0xfc] sm:$0xff]
  %v795 = vld [vmem:[#allocation2 + $0x10c] sm:$0xff]
  %v796 = vld [vmem:[#allocation2 + $0x114] sm:$0xff]
  %v797 = vld [vmem:[#allocation2 + $0x124] sm:$0xff]
  %v798 = vld [vmem:[#allocation2 + $0x12c] sm:$0xff]
  %v799 = vld [vmem:[#allocation2 + $0x13c] sm:$0xff]
  %v800 = vld [vmem:[#allocation2 + $0x144] sm:$0xff]
  %v801 = vld [vmem:[#allocation2 + $0x154] sm:$0xff]
  %v802 = vld [vmem:[#allocation2 + $0x15c] sm:$0xff]
  %v803 = vld [vmem:[#allocation2 + $0x16c] sm:$0xff]
  %v804 = vld [vmem:[#allocation2 + $0x174] sm:$0xff]
  %v805 = vadd.f32 %v741, %v773
  %v806 = vadd.f32 %v742, %v774
  %v807 = vadd.f32 %v743, %v775
  %v808 = vadd.f32 %v744, %v776
  %v809 = vadd.f32 %v745, %v777
  %v810 = vadd.f32 %v746, %v778
  %v811 = vadd.f32 %v747, %v779
  %v812 = vadd.f32 %v748, %v780
  %v813 = vadd.f32 %v749, %v781
  %v814 = vadd.f32 %v750, %v782
  %v815 = vadd.f32 %v751, %v783
  %v816 = vadd.f32 %v752, %v784
  %v817 = vadd.f32 %v753, %v785
  %v818 = vadd.f32 %v754, %v786
  %v819 = vadd.f32 %v755, %v787
  %v820 = vadd.f32 %v756, %v788
  %v821 = vadd.f32 %v757, %v789
  %v822 = vadd.f32 %v758, %v790
  %v823 = vadd.f32 %v759, %v791
  %v824 = vadd.f32 %v760, %v792
  %v825 = vadd.f32 %v761, %v793
  %v826 = vadd.f32 %v762, %v794
  %v827 = vadd.f32 %v763, %v795
  %v828 = vadd.f32 %v764, %v796
  %v829 = vadd.f32 %v765, %v797
  %v830 = vadd.f32 %v766, %v798
  %v831 = vadd.f32 %v767, %v799
  %v832 = vadd.f32 %v768, %v800
  %v833 = vadd.f32 %v769, %v801
  %v834 = vadd.f32 %v770, %v802
  %v835 = vadd.f32 %v771, %v803
  %v836 = vadd.f32 %v772, %v804
  %s837 = scalar_lea.vmem [#allocation2], 96
  %v838 = vld [vmem:[%s837] sm:$0xff]
  %v839 = vld [vmem:[%s837 + $0x8] sm:$0xff]
  %v840 = vld [vmem:[%s837 + $0x18] sm:$0xff]
  %v841 = vld [vmem:[%s837 + $0x20] sm:$0xff]
  %v842 = vld [vmem:[%s837 + $0x30] sm:$0xff]
  %v843 = vld [vmem:[%s837 + $0x38] sm:$0xff]
  %v844 = vld [vmem:[%s837 + $0x48] sm:$0xff]
  %v845 = vld [vmem:[%s837 + $0x50] sm:$0xff]
  %v846 = vld [vmem:[%s837 + $0x60] sm:$0xff]
  %v847 = vld [vmem:[%s837 + $0x68] sm:$0xff]
  %v848 = vld [vmem:[%s837 + $0x78] sm:$0xff]
  %v849 = vld [vmem:[%s837 + $0x80] sm:$0xff]
  %v850 = vld [vmem:[%s837 + $0x90] sm:$0xff]
  %v851 = vld [vmem:[%s837 + $0x98] sm:$0xff]
  %v852 = vld [vmem:[%s837 + $0xa8] sm:$0xff]
  %v853 = vld [vmem:[%s837 + $0xb0] sm:$0xff]
  %v854 = vld [vmem:[%s837 + $0xc0] sm:$0xff]
  %v855 = vld [vmem:[%s837 + $0xc8] sm:$0xff]
  %v856 = vld [vmem:[%s837 + $0xd8] sm:$0xff]
  %v857 = vld [vmem:[%s837 + $0xe0] sm:$0xff]
  %v858 = vld [vmem:[%s837 + $0xf0] sm:$0xff]
  %v859 = vld [vmem:[%s837 + $0xf8] sm:$0xff]
  %v860 = vld [vmem:[%s837 + $0x108] sm:$0xff]
  %v861 = vld [vmem:[%s837 + $0x110] sm:$0xff]
  %v862 = vld [vmem:[%s837 + $0x120] sm:$0xff]
  %v863 = vld [vmem:[%s837 + $0x128] sm:$0xff]
  %v864 = vld [vmem:[%s837 + $0x138] sm:$0xff]
  %v865 = vld [vmem:[%s837 + $0x140] sm:$0xff]
  %v866 = vld [vmem:[%s837 + $0x150] sm:$0xff]
  %v867 = vld [vmem:[%s837 + $0x158] sm:$0xff]
  %v868 = vld [vmem:[%s837 + $0x168] sm:$0xff]
  %v869 = vld [vmem:[%s837 + $0x170] sm:$0xff]
  %v870 = vadd.f32 %v805, %v838
  %v871 = vadd.f32 %v806, %v839
  %v872 = vadd.f32 %v807, %v840
  %v873 = vadd.f32 %v808, %v841
  %v874 = vadd.f32 %v809, %v842
  %v875 = vadd.f32 %v810, %v843
  %v876 = vadd.f32 %v811, %v844
  %v877 = vadd.f32 %v812, %v845
  %v878 = vadd.f32 %v813, %v846
  %v879 = vadd.f32 %v814, %v847
  %v880 = vadd.f32 %v815, %v848
  %v881 = vadd.f32 %v816, %v849
  %v882 = vadd.f32 %v817, %v850
  %v883 = vadd.f32 %v818, %v851
  %v884 = vadd.f32 %v819, %v852
  %v885 = vadd.f32 %v820, %v853
  %v886 = vadd.f32 %v821, %v854
  %v887 = vadd.f32 %v822, %v855
  %v888 = vadd.f32 %v823, %v856
  %v889 = vadd.f32 %v824, %v857
  %v890 = vadd.f32 %v825, %v858
  %v891 = vadd.f32 %v826, %v859
  %v892 = vadd.f32 %v827, %v860
  %v893 = vadd.f32 %v828, %v861
  %v894 = vadd.f32 %v829, %v862
  %v895 = vadd.f32 %v830, %v863
  %v896 = vadd.f32 %v831, %v864
  %v897 = vadd.f32 %v832, %v865
  %v898 = vadd.f32 %v833, %v866
  %v899 = vadd.f32 %v834, %v867
  %v900 = vadd.f32 %v835, %v868
  %v901 = vadd.f32 %v836, %v869
  %v902 = vld [vmem:[%s837 + $0x4] sm:$0xff]
  %v903 = vld [vmem:[%s837 + $0xc] sm:$0xff]
  %v904 = vld [vmem:[%s837 + $0x1c] sm:$0xff]
  %v905 = vld [vmem:[%s837 + $0x24] sm:$0xff]
  %v906 = vld [vmem:[%s837 + $0x34] sm:$0xff]
  %v907 = vld [vmem:[%s837 + $0x3c] sm:$0xff]
  %v908 = vld [vmem:[%s837 + $0x4c] sm:$0xff]
  %v909 = vld [vmem:[%s837 + $0x54] sm:$0xff]
  %v910 = vld [vmem:[%s837 + $0x64] sm:$0xff]
  %v911 = vld [vmem:[%s837 + $0x6c] sm:$0xff]
  %v912 = vld [vmem:[%s837 + $0x7c] sm:$0xff]
  %v913 = vld [vmem:[%s837 + $0x84] sm:$0xff]
  %v914 = vld [vmem:[%s837 + $0x94] sm:$0xff]
  %v915 = vld [vmem:[%s837 + $0x9c] sm:$0xff]
  %v916 = vld [vmem:[%s837 + $0xac] sm:$0xff]
  %v917 = vld [vmem:[%s837 + $0xb4] sm:$0xff]
  %v918 = vld [vmem:[%s837 + $0xc4] sm:$0xff]
  %v919 = vld [vmem:[%s837 + $0xcc] sm:$0xff]
  %v920 = vld [vmem:[%s837 + $0xdc] sm:$0xff]
  %v921 = vld [vmem:[%s837 + $0xe4] sm:$0xff]
  %v922 = vld [vmem:[%s837 + $0xf4] sm:$0xff]
  %v923 = vld [vmem:[%s837 + $0xfc] sm:$0xff]
  %v924 = vld [vmem:[%s837 + $0x10c] sm:$0xff]
  %v925 = vld [vmem:[%s837 + $0x114] sm:$0xff]
  %v926 = vld [vmem:[%s837 + $0x124] sm:$0xff]
  %v927 = vld [vmem:[%s837 + $0x12c] sm:$0xff]
  %v928 = vld [vmem:[%s837 + $0x13c] sm:$0xff]
  %v929 = vld [vmem:[%s837 + $0x144] sm:$0xff]
  %v930 = vld [vmem:[%s837 + $0x154] sm:$0xff]
  %v931 = vld [vmem:[%s837 + $0x15c] sm:$0xff]
  %v932 = vld [vmem:[%s837 + $0x16c] sm:$0xff]
  %v933 = vld [vmem:[%s837 + $0x174] sm:$0xff]
  %v934 = vadd.f32 %v870, %v902
  %v935 = vadd.f32 %v871, %v903
  %v936 = vadd.f32 %v872, %v904
  %v937 = vadd.f32 %v873, %v905
  %v938 = vadd.f32 %v874, %v906
  %v939 = vadd.f32 %v875, %v907
  %v940 = vadd.f32 %v876, %v908
  %v941 = vadd.f32 %v877, %v909
  %v942 = vadd.f32 %v878, %v910
  %v943 = vadd.f32 %v879, %v911
  %v944 = vadd.f32 %v880, %v912
  %v945 = vadd.f32 %v881, %v913
  %v946 = vadd.f32 %v882, %v914
  %v947 = vadd.f32 %v883, %v915
  %v948 = vadd.f32 %v884, %v916
  %v949 = vadd.f32 %v885, %v917
  %v950 = vadd.f32 %v886, %v918
  %v951 = vadd.f32 %v887, %v919
  %v952 = vadd.f32 %v888, %v920
  %v953 = vadd.f32 %v889, %v921
  %v954 = vadd.f32 %v890, %v922
  %v955 = vadd.f32 %v891, %v923
  %v956 = vadd.f32 %v892, %v924
  %v957 = vadd.f32 %v893, %v925
  %v958 = vadd.f32 %v894, %v926
  %v959 = vadd.f32 %v895, %v927
  %v960 = vadd.f32 %v896, %v928
  %v961 = vadd.f32 %v897, %v929
  %v962 = vadd.f32 %v898, %v930
  %v963 = vadd.f32 %v899, %v931
  %v964 = vadd.f32 %v900, %v932
  %v965 = vadd.f32 %v901, %v933
  %v966 = vld [vmem:[#allocation2 + $0x1] sm:$0xff]
  %v967 = vld [vmem:[#allocation2 + $0x9] sm:$0xff]
  %v968 = vld [vmem:[#allocation2 + $0x19] sm:$0xff]
  %v969 = vld [vmem:[#allocation2 + $0x21] sm:$0xff]
  %v970 = vld [vmem:[#allocation2 + $0x31] sm:$0xff]
  %v971 = vld [vmem:[#allocation2 + $0x39] sm:$0xff]
  %v972 = vld [vmem:[#allocation2 + $0x49] sm:$0xff]
  %v973 = vld [vmem:[#allocation2 + $0x51] sm:$0xff]
  %v974 = vld [vmem:[#allocation2 + $0x61] sm:$0xff]
  %v975 = vld [vmem:[#allocation2 + $0x69] sm:$0xff]
  %v976 = vld [vmem:[#allocation2 + $0x79] sm:$0xff]
  %v977 = vld [vmem:[#allocation2 + $0x81] sm:$0xff]
  %v978 = vld [vmem:[#allocation2 + $0x91] sm:$0xff]
  %v979 = vld [vmem:[#allocation2 + $0x99] sm:$0xff]
  %v980 = vld [vmem:[#allocation2 + $0xa9] sm:$0xff]
  %v981 = vld [vmem:[#allocation2 + $0xb1] sm:$0xff]
  %v982 = vld [vmem:[#allocation2 + $0xc1] sm:$0xff]
  %v983 = vld [vmem:[#allocation2 + $0xc9] sm:$0xff]
  %v984 = vld [vmem:[#allocation2 + $0xd9] sm:$0xff]
  %v985 = vld [vmem:[#allocation2 + $0xe1] sm:$0xff]
  %v986 = vld [vmem:[#allocation2 + $0xf1] sm:$0xff]
  %v987 = vld [vmem:[#allocation2 + $0xf9] sm:$0xff]
  %v988 = vld [vmem:[#allocation2 + $0x109] sm:$0xff]
  %v989 = vld [vmem:[#allocation2 + $0x111] sm:$0xff]
  %v990 = vld [vmem:[#allocation2 + $0x121] sm:$0xff]
  %v991 = vld [vmem:[#allocation2 + $0x129] sm:$0xff]
  %v992 = vld [vmem:[#allocation2 + $0x139] sm:$0xff]
  %v993 = vld [vmem:[#allocation2 + $0x141] sm:$0xff]
  %v994 = vld [vmem:[#allocation2 + $0x151] sm:$0xff]
  %v995 = vld [vmem:[#allocation2 + $0x159] sm:$0xff]
  %v996 = vld [vmem:[#allocation2 + $0x169] sm:$0xff]
  %v997 = vld [vmem:[#allocation2 + $0x171] sm:$0xff]
  %v998 = vld [vmem:[#allocation2 + $0x3] sm:$0xff]
  %v999 = vld [vmem:[#allocation2 + $0xb] sm:$0xff]
  %v1000 = vld [vmem:[#allocation2 + $0x1b] sm:$0xff]
  %v1001 = vld [vmem:[#allocation2 + $0x23] sm:$0xff]
  %v1002 = vld [vmem:[#allocation2 + $0x33] sm:$0xff]
  %v1003 = vld [vmem:[#allocation2 + $0x3b] sm:$0xff]
  %v1004 = vld [vmem:[#allocation2 + $0x4b] sm:$0xff]
  %v1005 = vld [vmem:[#allocation2 + $0x53] sm:$0xff]
  %v1006 = vld [vmem:[#allocation2 + $0x63] sm:$0xff]
  %v1007 = vld [vmem:[#allocation2 + $0x6b] sm:$0xff]
  %v1008 = vld [vmem:[#allocation2 + $0x7b] sm:$0xff]
  %v1009 = vld [vmem:[#allocation2 + $0x83] sm:$0xff]
  %v1010 = vld [vmem:[#allocation2 + $0x93] sm:$0xff]
  %v1011 = vld [vmem:[#allocation2 + $0x9b] sm:$0xff]
  %v1012 = vld [vmem:[#allocation2 + $0xab] sm:$0xff]
  %v1013 = vld [vmem:[#allocation2 + $0xb3] sm:$0xff]
  %v1014 = vld [vmem:[#allocation2 + $0xc3] sm:$0xff]
  %v1015 = vld [vmem:[#allocation2 + $0xcb] sm:$0xff]
  %v1016 = vld [vmem:[#allocation2 + $0xdb] sm:$0xff]
  %v1017 = vld [vmem:[#allocation2 + $0xe3] sm:$0xff]
  %v1018 = vld [vmem:[#allocation2 + $0xf3] sm:$0xff]
  %v1019 = vld [vmem:[#allocation2 + $0xfb] sm:$0xff]
  %v1020 = vld [vmem:[#allocation2 + $0x10b] sm:$0xff]
  %v1021 = vld [vmem:[#allocation2 + $0x113] sm:$0xff]
  %v1022 = vld [vmem:[#allocation2 + $0x123] sm:$0xff]
  %v1023 = vld [vmem:[#allocation2 + $0x12b] sm:$0xff]
  %v1024 = vld [vmem:[#allocation2 + $0x13b] sm:$0xff]
  %v1025 = vld [vmem:[#allocation2 + $0x143] sm:$0xff]
  %v1026 = vld [vmem:[#allocation2 + $0x153] sm:$0xff]
  %v1027 = vld [vmem:[#allocation2 + $0x15b] sm:$0xff]
  %v1028 = vld [vmem:[#allocation2 + $0x16b] sm:$0xff]
  %v1029 = vld [vmem:[#allocation2 + $0x173] sm:$0xff]
  %v1030 = vadd.f32 %v966, %v998
  %v1031 = vadd.f32 %v967, %v999
  %v1032 = vadd.f32 %v968, %v1000
  %v1033 = vadd.f32 %v969, %v1001
  %v1034 = vadd.f32 %v970, %v1002
  %v1035 = vadd.f32 %v971, %v1003
  %v1036 = vadd.f32 %v972, %v1004
  %v1037 = vadd.f32 %v973, %v1005
  %v1038 = vadd.f32 %v974, %v1006
  %v1039 = vadd.f32 %v975, %v1007
  %v1040 = vadd.f32 %v976, %v1008
  %v1041 = vadd.f32 %v977, %v1009
  %v1042 = vadd.f32 %v978, %v1010
  %v1043 = vadd.f32 %v979, %v1011
  %v1044 = vadd.f32 %v980, %v1012
  %v1045 = vadd.f32 %v981, %v1013
  %v1046 = vadd.f32 %v982, %v1014
  %v1047 = vadd.f32 %v983, %v1015
  %v1048 = vadd.f32 %v984, %v1016
  %v1049 = vadd.f32 %v985, %v1017
  %v1050 = vadd.f32 %v986, %v1018
  %v1051 = vadd.f32 %v987, %v1019
  %v1052 = vadd.f32 %v988, %v1020
  %v1053 = vadd.f32 %v989, %v1021
  %v1054 = vadd.f32 %v990, %v1022
  %v1055 = vadd.f32 %v991, %v1023
  %v1056 = vadd.f32 %v992, %v1024
  %v1057 = vadd.f32 %v993, %v1025
  %v1058 = vadd.f32 %v994, %v1026
  %v1059 = vadd.f32 %v995, %v1027
  %v1060 = vadd.f32 %v996, %v1028
  %v1061 = vadd.f32 %v997, %v1029
  %v1062 = vld [vmem:[%s291] sm:$0xff]
  %v1063 = vld [vmem:[%s291 + $0x8] sm:$0xff]
  %v1064 = vld [vmem:[%s291 + $0x18] sm:$0xff]
  %v1065 = vld [vmem:[%s291 + $0x20] sm:$0xff]
  %v1066 = vld [vmem:[%s291 + $0x30] sm:$0xff]
  %v1067 = vld [vmem:[%s291 + $0x38] sm:$0xff]
  %v1068 = vld [vmem:[%s291 + $0x48] sm:$0xff]
  %v1069 = vld [vmem:[%s291 + $0x50] sm:$0xff]
  %v1070 = vld [vmem:[%s291 + $0x60] sm:$0xff]
  %v1071 = vld [vmem:[%s291 + $0x68] sm:$0xff]
  %v1072 = vld [vmem:[%s291 + $0x78] sm:$0xff]
  %v1073 = vld [vmem:[%s291 + $0x80] sm:$0xff]
  %v1074 = vld [vmem:[%s291 + $0x90] sm:$0xff]
  %v1075 = vld [vmem:[%s291 + $0x98] sm:$0xff]
  %v1076 = vld [vmem:[%s291 + $0xa8] sm:$0xff]
  %v1077 = vld [vmem:[%s291 + $0xb0] sm:$0xff]
  %v1078 = vld [vmem:[%s291 + $0xc0] sm:$0xff]
  %v1079 = vld [vmem:[%s291 + $0xc8] sm:$0xff]
  %v1080 = vld [vmem:[%s291 + $0xd8] sm:$0xff]
  %v1081 = vld [vmem:[%s291 + $0xe0] sm:$0xff]
  %v1082 = vld [vmem:[%s291 + $0xf0] sm:$0xff]
  %v1083 = vld [vmem:[%s291 + $0xf8] sm:$0xff]
  %v1084 = vld [vmem:[%s291 + $0x108] sm:$0xff]
  %v1085 = vld [vmem:[%s291 + $0x110] sm:$0xff]
  %v1086 = vld [vmem:[%s291 + $0x120] sm:$0xff]
  %v1087 = vld [vmem:[%s291 + $0x128] sm:$0xff]
  %v1088 = vld [vmem:[%s291 + $0x138] sm:$0xff]
  %v1089 = vld [vmem:[%s291 + $0x140] sm:$0xff]
  %v1090 = vld [vmem:[%s291 + $0x150] sm:$0xff]
  %v1091 = vld [vmem:[%s291 + $0x158] sm:$0xff]
  %v1092 = vld [vmem:[%s291 + $0x168] sm:$0xff]
  %v1093 = vld [vmem:[%s291 + $0x170] sm:$0xff]
  %v1094 = vadd.f32 %v1030, %v1062
  %v1095 = vadd.f32 %v1031, %v1063
  %v1096 = vadd.f32 %v1032, %v1064
  %v1097 = vadd.f32 %v1033, %v1065
  %v1098 = vadd.f32 %v1034, %v1066
  %v1099 = vadd.f32 %v1035, %v1067
  %v1100 = vadd.f32 %v1036, %v1068
  %v1101 = vadd.f32 %v1037, %v1069
  %v1102 = vadd.f32 %v1038, %v1070
  %v1103 = vadd.f32 %v1039, %v1071
  %v1104 = vadd.f32 %v1040, %v1072
  %v1105 = vadd.f32 %v1041, %v1073
  %v1106 = vadd.f32 %v1042, %v1074
  %v1107 = vadd.f32 %v1043, %v1075
  %v1108 = vadd.f32 %v1044, %v1076
  %v1109 = vadd.f32 %v1045, %v1077
  %v1110 = vadd.f32 %v1046, %v1078
  %v1111 = vadd.f32 %v1047, %v1079
  %v1112 = vadd.f32 %v1048, %v1080
  %v1113 = vadd.f32 %v1049, %v1081
  %v1114 = vadd.f32 %v1050, %v1082
  %v1115 = vadd.f32 %v1051, %v1083
  %v1116 = vadd.f32 %v1052, %v1084
  %v1117 = vadd.f32 %v1053, %v1085
  %v1118 = vadd.f32 %v1054, %v1086
  %v1119 = vadd.f32 %v1055, %v1087
  %v1120 = vadd.f32 %v1056, %v1088
  %v1121 = vadd.f32 %v1057, %v1089
  %v1122 = vadd.f32 %v1058, %v1090
  %v1123 = vadd.f32 %v1059, %v1091
  %v1124 = vadd.f32 %v1060, %v1092
  %v1125 = vadd.f32 %v1061, %v1093
  %v1126 = vld [vmem:[%s291 + $0x4] sm:$0xff]
  %v1127 = vld [vmem:[%s291 + $0xc] sm:$0xff]
  %v1128 = vld [vmem:[%s291 + $0x1c] sm:$0xff]
  %v1129 = vld [vmem:[%s291 + $0x24] sm:$0xff]
  %v1130 = vld [vmem:[%s291 + $0x34] sm:$0xff]
  %v1131 = vld [vmem:[%s291 + $0x3c] sm:$0xff]
  %v1132 = vld [vmem:[%s291 + $0x4c] sm:$0xff]
  %v1133 = vld [vmem:[%s291 + $0x54] sm:$0xff]
  %v1134 = vld [vmem:[%s291 + $0x64] sm:$0xff]
  %v1135 = vld [vmem:[%s291 + $0x6c] sm:$0xff]
  %v1136 = vld [vmem:[%s291 + $0x7c] sm:$0xff]
  %v1137 = vld [vmem:[%s291 + $0x84] sm:$0xff]
  %v1138 = vld [vmem:[%s291 + $0x94] sm:$0xff]
  %v1139 = vld [vmem:[%s291 + $0x9c] sm:$0xff]
  %v1140 = vld [vmem:[%s291 + $0xac] sm:$0xff]
  %v1141 = vld [vmem:[%s291 + $0xb4] sm:$0xff]
  %v1142 = vld [vmem:[%s291 + $0xc4] sm:$0xff]
  %v1143 = vld [vmem:[%s291 + $0xcc] sm:$0xff]
  %v1144 = vld [vmem:[%s291 + $0xdc] sm:$0xff]
  %v1145 = vld [vmem:[%s291 + $0xe4] sm:$0xff]
  %v1146 = vld [vmem:[%s291 + $0xf4] sm:$0xff]
  %v1147 = vld [vmem:[%s291 + $0xfc] sm:$0xff]
  %v1148 = vld [vmem:[%s291 + $0x10c] sm:$0xff]
  %v1149 = vld [vmem:[%s291 + $0x114] sm:$0xff]
  %v1150 = vld [vmem:[%s291 + $0x124] sm:$0xff]
  %v1151 = vld [vmem:[%s291 + $0x12c] sm:$0xff]
  %v1152 = vld [vmem:[%s291 + $0x13c] sm:$0xff]
  %v1153 = vld [vmem:[%s291 + $0x144] sm:$0xff]
  %v1154 = vld [vmem:[%s291 + $0x154] sm:$0xff]
  %v1155 = vld [vmem:[%s291 + $0x15c] sm:$0xff]
  %v1156 = vld [vmem:[%s291 + $0x16c] sm:$0xff]
  %v1157 = vld [vmem:[%s291 + $0x174] sm:$0xff]
  %v1158 = vadd.f32 %v1094, %v1126
  %v1159 = vadd.f32 %v1095, %v1127
  %v1160 = vadd.f32 %v1096, %v1128
  %v1161 = vadd.f32 %v1097, %v1129
  %v1162 = vadd.f32 %v1098, %v1130
  %v1163 = vadd.f32 %v1099, %v1131
  %v1164 = vadd.f32 %v1100, %v1132
  %v1165 = vadd.f32 %v1101, %v1133
  %v1166 = vadd.f32 %v1102, %v1134
  %v1167 = vadd.f32 %v1103, %v1135
  %v1168 = vadd.f32 %v1104, %v1136
  %v1169 = vadd.f32 %v1105, %v1137
  %v1170 = vadd.f32 %v1106, %v1138
  %v1171 = vadd.f32 %v1107, %v1139
  %v1172 = vadd.f32 %v1108, %v1140
  %v1173 = vadd.f32 %v1109, %v1141
  %v1174 = vadd.f32 %v1110, %v1142
  %v1175 = vadd.f32 %v1111, %v1143
  %v1176 = vadd.f32 %v1112, %v1144
  %v1177 = vadd.f32 %v1113, %v1145
  %v1178 = vadd.f32 %v1114, %v1146
  %v1179 = vadd.f32 %v1115, %v1147
  %v1180 = vadd.f32 %v1116, %v1148
  %v1181 = vadd.f32 %v1117, %v1149
  %v1182 = vadd.f32 %v1118, %v1150
  %v1183 = vadd.f32 %v1119, %v1151
  %v1184 = vadd.f32 %v1120, %v1152
  %v1185 = vadd.f32 %v1121, %v1153
  %v1186 = vadd.f32 %v1122, %v1154
  %v1187 = vadd.f32 %v1123, %v1155
  %v1188 = vadd.f32 %v1124, %v1156
  %v1189 = vadd.f32 %v1125, %v1157
  %v1190 = vld [vmem:[%s388] sm:$0xff]
  %v1191 = vld [vmem:[%s388 + $0x8] sm:$0xff]
  %v1192 = vld [vmem:[%s388 + $0x18] sm:$0xff]
  %v1193 = vld [vmem:[%s388 + $0x20] sm:$0xff]
  %v1194 = vld [vmem:[%s388 + $0x30] sm:$0xff]
  %v1195 = vld [vmem:[%s388 + $0x38] sm:$0xff]
  %v1196 = vld [vmem:[%s388 + $0x48] sm:$0xff]
  %v1197 = vld [vmem:[%s388 + $0x50] sm:$0xff]
  %v1198 = vld [vmem:[%s388 + $0x60] sm:$0xff]
  %v1199 = vld [vmem:[%s388 + $0x68] sm:$0xff]
  %v1200 = vld [vmem:[%s388 + $0x78] sm:$0xff]
  %v1201 = vld [vmem:[%s388 + $0x80] sm:$0xff]
  %v1202 = vld [vmem:[%s388 + $0x90] sm:$0xff]
  %v1203 = vld [vmem:[%s388 + $0x98] sm:$0xff]
  %v1204 = vld [vmem:[%s388 + $0xa8] sm:$0xff]
  %v1205 = vld [vmem:[%s388 + $0xb0] sm:$0xff]
  %v1206 = vld [vmem:[%s388 + $0xc0] sm:$0xff]
  %v1207 = vld [vmem:[%s388 + $0xc8] sm:$0xff]
  %v1208 = vld [vmem:[%s388 + $0xd8] sm:$0xff]
  %v1209 = vld [vmem:[%s388 + $0xe0] sm:$0xff]
  %v1210 = vld [vmem:[%s388 + $0xf0] sm:$0xff]
  %v1211 = vld [vmem:[%s388 + $0xf8] sm:$0xff]
  %v1212 = vld [vmem:[%s388 + $0x108] sm:$0xff]
  %v1213 = vld [vmem:[%s388 + $0x110] sm:$0xff]
  %v1214 = vld [vmem:[%s388 + $0x120] sm:$0xff]
  %v1215 = vld [vmem:[%s388 + $0x128] sm:$0xff]
  %v1216 = vld [vmem:[%s388 + $0x138] sm:$0xff]
  %v1217 = vld [vmem:[%s388 + $0x140] sm:$0xff]
  %v1218 = vld [vmem:[%s388 + $0x150] sm:$0xff]
  %v1219 = vld [vmem:[%s388 + $0x158] sm:$0xff]
  %v1220 = vld [vmem:[%s388 + $0x168] sm:$0xff]
  %v1221 = vld [vmem:[%s388 + $0x170] sm:$0xff]
  %v1222 = vadd.f32 %v1158, %v1190
  %v1223 = vadd.f32 %v1159, %v1191
  %v1224 = vadd.f32 %v1160, %v1192
  %v1225 = vadd.f32 %v1161, %v1193
  %v1226 = vadd.f32 %v1162, %v1194
  %v1227 = vadd.f32 %v1163, %v1195
  %v1228 = vadd.f32 %v1164, %v1196
  %v1229 = vadd.f32 %v1165, %v1197
  %v1230 = vadd.f32 %v1166, %v1198
  %v1231 = vadd.f32 %v1167, %v1199
  %v1232 = vadd.f32 %v1168, %v1200
  %v1233 = vadd.f32 %v1169, %v1201
  %v1234 = vadd.f32 %v1170, %v1202
  %v1235 = vadd.f32 %v1171, %v1203
  %v1236 = vadd.f32 %v1172, %v1204
  %v1237 = vadd.f32 %v1173, %v1205
  %v1238 = vadd.f32 %v1174, %v1206
  %v1239 = vadd.f32 %v1175, %v1207
  %v1240 = vadd.f32 %v1176, %v1208
  %v1241 = vadd.f32 %v1177, %v1209
  %v1242 = vadd.f32 %v1178, %v1210
  %v1243 = vadd.f32 %v1179, %v1211
  %v1244 = vadd.f32 %v1180, %v1212
  %v1245 = vadd.f32 %v1181, %v1213
  %v1246 = vadd.f32 %v1182, %v1214
  %v1247 = vadd.f32 %v1183, %v1215
  %v1248 = vadd.f32 %v1184, %v1216
  %v1249 = vadd.f32 %v1185, %v1217
  %v1250 = vadd.f32 %v1186, %v1218
  %v1251 = vadd.f32 %v1187, %v1219
  %v1252 = vadd.f32 %v1188, %v1220
  %v1253 = vadd.f32 %v1189, %v1221
  %v1254 = vld [vmem:[%s388 + $0x4] sm:$0xff]
  %v1255 = vld [vmem:[%s388 + $0xc] sm:$0xff]
  %v1256 = vld [vmem:[%s388 + $0x1c] sm:$0xff]
  %v1257 = vld [vmem:[%s388 + $0x24] sm:$0xff]
  %v1258 = vld [vmem:[%s388 + $0x34] sm:$0xff]
  %v1259 = vld [vmem:[%s388 + $0x3c] sm:$0xff]
  %v1260 = vld [vmem:[%s388 + $0x4c] sm:$0xff]
  %v1261 = vld [vmem:[%s388 + $0x54] sm:$0xff]
  %v1262 = vld [vmem:[%s388 + $0x64] sm:$0xff]
  %v1263 = vld [vmem:[%s388 + $0x6c] sm:$0xff]
  %v1264 = vld [vmem:[%s388 + $0x7c] sm:$0xff]
  %v1265 = vld [vmem:[%s388 + $0x84] sm:$0xff]
  %v1266 = vld [vmem:[%s388 + $0x94] sm:$0xff]
  %v1267 = vld [vmem:[%s388 + $0x9c] sm:$0xff]
  %v1268 = vld [vmem:[%s388 + $0xac] sm:$0xff]
  %v1269 = vld [vmem:[%s388 + $0xb4] sm:$0xff]
  %v1270 = vld [vmem:[%s388 + $0xc4] sm:$0xff]
  %v1271 = vld [vmem:[%s388 + $0xcc] sm:$0xff]
  %v1272 = vld [vmem:[%s388 + $0xdc] sm:$0xff]
  %v1273 = vld [vmem:[%s388 + $0xe4] sm:$0xff]
  %v1274 = vld [vmem:[%s388 + $0xf4] sm:$0xff]
  %v1275 = vld [vmem:[%s388 + $0xfc] sm:$0xff]
  %v1276 = vld [vmem:[%s388 + $0x10c] sm:$0xff]
  %v1277 = vld [vmem:[%s388 + $0x114] sm:$0xff]
  %v1278 = vld [vmem:[%s388 + $0x124] sm:$0xff]
  %v1279 = vld [vmem:[%s388 + $0x12c] sm:$0xff]
  %v1280 = vld [vmem:[%s388 + $0x13c] sm:$0xff]
  %v1281 = vld [vmem:[%s388 + $0x144] sm:$0xff]
  %v1282 = vld [vmem:[%s388 + $0x154] sm:$0xff]
  %v1283 = vld [vmem:[%s388 + $0x15c] sm:$0xff]
  %v1284 = vld [vmem:[%s388 + $0x16c] sm:$0xff]
  %v1285 = vld [vmem:[%s388 + $0x174] sm:$0xff]
  %v1286 = vadd.f32 %v1222, %v1254
  %v1287 = vadd.f32 %v1223, %v1255
  %v1288 = vadd.f32 %v1224, %v1256
  %v1289 = vadd.f32 %v1225, %v1257
  %v1290 = vadd.f32 %v1226, %v1258
  %v1291 = vadd.f32 %v1227, %v1259
  %v1292 = vadd.f32 %v1228, %v1260
  %v1293 = vadd.f32 %v1229, %v1261
  %v1294 = vadd.f32 %v1230, %v1262
  %v1295 = vadd.f32 %v1231, %v1263
  %v1296 = vadd.f32 %v1232, %v1264
  %v1297 = vadd.f32 %v1233, %v1265
  %v1298 = vadd.f32 %v1234, %v1266
  %v1299 = vadd.f32 %v1235, %v1267
  %v1300 = vadd.f32 %v1236, %v1268
  %v1301 = vadd.f32 %v1237, %v1269
  %v1302 = vadd.f32 %v1238, %v1270
  %v1303 = vadd.f32 %v1239, %v1271
  %v1304 = vadd.f32 %v1240, %v1272
  %v1305 = vadd.f32 %v1241, %v1273
  %v1306 = vadd.f32 %v1242, %v1274
  %v1307 = vadd.f32 %v1243, %v1275
  %v1308 = vadd.f32 %v1244, %v1276
  %v1309 = vadd.f32 %v1245, %v1277
  %v1310 = vadd.f32 %v1246, %v1278
  %v1311 = vadd.f32 %v1247, %v1279
  %v1312 = vadd.f32 %v1248, %v1280
  %v1313 = vadd.f32 %v1249, %v1281
  %v1314 = vadd.f32 %v1250, %v1282
  %v1315 = vadd.f32 %v1251, %v1283
  %v1316 = vadd.f32 %v1252, %v1284
  %v1317 = vadd.f32 %v1253, %v1285
  %v1318 = vld [vmem:[%s837 + $0x1] sm:$0xff]
  %v1319 = vld [vmem:[%s837 + $0x9] sm:$0xff]
  %v1320 = vld [vmem:[%s837 + $0x19] sm:$0xff]
  %v1321 = vld [vmem:[%s837 + $0x21] sm:$0xff]
  %v1322 = vld [vmem:[%s837 + $0x31] sm:$0xff]
  %v1323 = vld [vmem:[%s837 + $0x39] sm:$0xff]
  %v1324 = vld [vmem:[%s837 + $0x49] sm:$0xff]
  %v1325 = vld [vmem:[%s837 + $0x51] sm:$0xff]
  %v1326 = vld [vmem:[%s837 + $0x61] sm:$0xff]
  %v1327 = vld [vmem:[%s837 + $0x69] sm:$0xff]
  %v1328 = vld [vmem:[%s837 + $0x79] sm:$0xff]
  %v1329 = vld [vmem:[%s837 + $0x81] sm:$0xff]
  %v1330 = vld [vmem:[%s837 + $0x91] sm:$0xff]
  %v1331 = vld [vmem:[%s837 + $0x99] sm:$0xff]
  %v1332 = vld [vmem:[%s837 + $0xa9] sm:$0xff]
  %v1333 = vld [vmem:[%s837 + $0xb1] sm:$0xff]
  %v1334 = vld [vmem:[%s837 + $0xc1] sm:$0xff]
  %v1335 = vld [vmem:[%s837 + $0xc9] sm:$0xff]
  %v1336 = vld [vmem:[%s837 + $0xd9] sm:$0xff]
  %v1337 = vld [vmem:[%s837 + $0xe1] sm:$0xff]
  %v1338 = vld [vmem:[%s837 + $0xf1] sm:$0xff]
  %v1339 = vld [vmem:[%s837 + $0xf9] sm:$0xff]
  %v1340 = vld [vmem:[%s837 + $0x109] sm:$0xff]
  %v1341 = vld [vmem:[%s837 + $0x111] sm:$0xff]
  %v1342 = vld [vmem:[%s837 + $0x121] sm:$0xff]
  %v1343 = vld [vmem:[%s837 + $0x129] sm:$0xff]
  %v1344 = vld [vmem:[%s837 + $0x139] sm:$0xff]
  %v1345 = vld [vmem:[%s837 + $0x141] sm:$0xff]
  %v1346 = vld [vmem:[%s837 + $0x151] sm:$0xff]
  %v1347 = vld [vmem:[%s837 + $0x159] sm:$0xff]
  %v1348 = vld [vmem:[%s837 + $0x169] sm:$0xff]
  %v1349 = vld [vmem:[%s837 + $0x171] sm:$0xff]
  %v1350 = vadd.f32 %v1286, %v1318
  %v1351 = vadd.f32 %v1287, %v1319
  %v1352 = vadd.f32 %v1288, %v1320
  %v1353 = vadd.f32 %v1289, %v1321
  %v1354 = vadd.f32 %v1290, %v1322
  %v1355 = vadd.f32 %v1291, %v1323
  %v1356 = vadd.f32 %v1292, %v1324
  %v1357 = vadd.f32 %v1293, %v1325
  %v1358 = vadd.f32 %v1294, %v1326
  %v1359 = vadd.f32 %v1295, %v1327
  %v1360 = vadd.f32 %v1296, %v1328
  %v1361 = vadd.f32 %v1297, %v1329
  %v1362 = vadd.f32 %v1298, %v1330
  %v1363 = vadd.f32 %v1299, %v1331
  %v1364 = vadd.f32 %v1300, %v1332
  %v1365 = vadd.f32 %v1301, %v1333
  %v1366 = vadd.f32 %v1302, %v1334
  %v1367 = vadd.f32 %v1303, %v1335
  %v1368 = vadd.f32 %v1304, %v1336
  %v1369 = vadd.f32 %v1305, %v1337
  %v1370 = vadd.f32 %v1306, %v1338
  %v1371 = vadd.f32 %v1307, %v1339
  %v1372 = vadd.f32 %v1308, %v1340
  %v1373 = vadd.f32 %v1309, %v1341
  %v1374 = vadd.f32 %v1310, %v1342
  %v1375 = vadd.f32 %v1311, %v1343
  %v1376 = vadd.f32 %v1312, %v1344
  %v1377 = vadd.f32 %v1313, %v1345
  %v1378 = vadd.f32 %v1314, %v1346
  %v1379 = vadd.f32 %v1315, %v1347
  %v1380 = vadd.f32 %v1316, %v1348
  %v1381 = vadd.f32 %v1317, %v1349
  %v1382 = vld [vmem:[%s837 + $0x3] sm:$0xff]
  %v1383 = vld [vmem:[%s837 + $0xb] sm:$0xff]
  %v1384 = vld [vmem:[%s837 + $0x1b] sm:$0xff]
  %v1385 = vld [vmem:[%s837 + $0x23] sm:$0xff]
  %v1386 = vld [vmem:[%s837 + $0x33] sm:$0xff]
  %v1387 = vld [vmem:[%s837 + $0x3b] sm:$0xff]
  %v1388 = vld [vmem:[%s837 + $0x4b] sm:$0xff]
  %v1389 = vld [vmem:[%s837 + $0x53] sm:$0xff]
  %v1390 = vld [vmem:[%s837 + $0x63] sm:$0xff]
  %v1391 = vld [vmem:[%s837 + $0x6b] sm:$0xff]
  %v1392 = vld [vmem:[%s837 + $0x7b] sm:$0xff]
  %v1393 = vld [vmem:[%s837 + $0x83] sm:$0xff]
  %v1394 = vld [vmem:[%s837 + $0x93] sm:$0xff]
  %v1395 = vld [vmem:[%s837 + $0x9b] sm:$0xff]
  %v1396 = vld [vmem:[%s837 + $0xab] sm:$0xff]
  %v1397 = vld [vmem:[%s837 + $0xb3] sm:$0xff]
  %v1398 = vld [vmem:[%s837 + $0xc3] sm:$0xff]
  %v1399 = vld [vmem:[%s837 + $0xcb] sm:$0xff]
  %v1400 = vld [vmem:[%s837 + $0xdb] sm:$0xff]
  %v1401 = vld [vmem:[%s837 + $0xe3] sm:$0xff]
  %v1402 = vld [vmem:[%s837 + $0xf3] sm:$0xff]
  %v1403 = vld [vmem:[%s837 + $0xfb] sm:$0xff]
  %v1404 = vld [vmem:[%s837 + $0x10b] sm:$0xff]
  %v1405 = vld [vmem:[%s837 + $0x113] sm:$0xff]
  %v1406 = vld [vmem:[%s837 + $0x123] sm:$0xff]
  %v1407 = vld [vmem:[%s837 + $0x12b] sm:$0xff]
  %v1408 = vld [vmem:[%s837 + $0x13b] sm:$0xff]
  %v1409 = vld [vmem:[%s837 + $0x143] sm:$0xff]
  %v1410 = vld [vmem:[%s837 + $0x153] sm:$0xff]
  %v1411 = vld [vmem:[%s837 + $0x15b] sm:$0xff]
  %v1412 = vld [vmem:[%s837 + $0x16b] sm:$0xff]
  %v1413 = vld [vmem:[%s837 + $0x173] sm:$0xff]
  %v1414 = vadd.f32 %v1350, %v1382
  %v1415 = vadd.f32 %v1351, %v1383
  %v1416 = vadd.f32 %v1352, %v1384
  %v1417 = vadd.f32 %v1353, %v1385
  %v1418 = vadd.f32 %v1354, %v1386
  %v1419 = vadd.f32 %v1355, %v1387
  %v1420 = vadd.f32 %v1356, %v1388
  %v1421 = vadd.f32 %v1357, %v1389
  %v1422 = vadd.f32 %v1358, %v1390
  %v1423 = vadd.f32 %v1359, %v1391
  %v1424 = vadd.f32 %v1360, %v1392
  %v1425 = vadd.f32 %v1361, %v1393
  %v1426 = vadd.f32 %v1362, %v1394
  %v1427 = vadd.f32 %v1363, %v1395
  %v1428 = vadd.f32 %v1364, %v1396
  %v1429 = vadd.f32 %v1365, %v1397
  %v1430 = vadd.f32 %v1366, %v1398
  %v1431 = vadd.f32 %v1367, %v1399
  %v1432 = vadd.f32 %v1368, %v1400
  %v1433 = vadd.f32 %v1369, %v1401
  %v1434 = vadd.f32 %v1370, %v1402
  %v1435 = vadd.f32 %v1371, %v1403
  %v1436 = vadd.f32 %v1372, %v1404
  %v1437 = vadd.f32 %v1373, %v1405
  %v1438 = vadd.f32 %v1374, %v1406
  %v1439 = vadd.f32 %v1375, %v1407
  %v1440 = vadd.f32 %v1376, %v1408
  %v1441 = vadd.f32 %v1377, %v1409
  %v1442 = vadd.f32 %v1378, %v1410
  %v1443 = vadd.f32 %v1379, %v1411
  %v1444 = vadd.f32 %v1380, %v1412
  %v1445 = vadd.f32 %v1381, %v1413
  %v1446 = vld [vmem:[#allocation2 + $0x2] sm:$0xff]
  %v1447 = vld [vmem:[#allocation2 + $0xa] sm:$0xff]
  %v1448 = vld [vmem:[#allocation2 + $0x1a] sm:$0xff]
  %v1449 = vld [vmem:[#allocation2 + $0x22] sm:$0xff]
  %v1450 = vld [vmem:[#allocation2 + $0x32] sm:$0xff]
  %v1451 = vld [vmem:[#allocation2 + $0x3a] sm:$0xff]
  %v1452 = vld [vmem:[#allocation2 + $0x4a] sm:$0xff]
  %v1453 = vld [vmem:[#allocation2 + $0x52] sm:$0xff]
  %v1454 = vld [vmem:[#allocation2 + $0x62] sm:$0xff]
  %v1455 = vld [vmem:[#allocation2 + $0x6a] sm:$0xff]
  %v1456 = vld [vmem:[#allocation2 + $0x7a] sm:$0xff]
  %v1457 = vld [vmem:[#allocation2 + $0x82] sm:$0xff]
  %v1458 = vld [vmem:[#allocation2 + $0x92] sm:$0xff]
  %v1459 = vld [vmem:[#allocation2 + $0x9a] sm:$0xff]
  %v1460 = vld [vmem:[#allocation2 + $0xaa] sm:$0xff]
  %v1461 = vld [vmem:[#allocation2 + $0xb2] sm:$0xff]
  %v1462 = vld [vmem:[#allocation2 + $0xc2] sm:$0xff]
  %v1463 = vld [vmem:[#allocation2 + $0xca] sm:$0xff]
  %v1464 = vld [vmem:[#allocation2 + $0xda] sm:$0xff]
  %v1465 = vld [vmem:[#allocation2 + $0xe2] sm:$0xff]
  %v1466 = vld [vmem:[#allocation2 + $0xf2] sm:$0xff]
  %v1467 = vld [vmem:[#allocation2 + $0xfa] sm:$0xff]
  %v1468 = vld [vmem:[#allocation2 + $0x10a] sm:$0xff]
  %v1469 = vld [vmem:[#allocation2 + $0x112] sm:$0xff]
  %v1470 = vld [vmem:[#allocation2 + $0x122] sm:$0xff]
  %v1471 = vld [vmem:[#allocation2 + $0x12a] sm:$0xff]
  %v1472 = vld [vmem:[#allocation2 + $0x13a] sm:$0xff]
  %v1473 = vld [vmem:[#allocation2 + $0x142] sm:$0xff]
  %v1474 = vld [vmem:[#allocation2 + $0x152] sm:$0xff]
  %v1475 = vld [vmem:[#allocation2 + $0x15a] sm:$0xff]
  %v1476 = vld [vmem:[#allocation2 + $0x16a] sm:$0xff]
  %v1477 = vld [vmem:[#allocation2 + $0x172] sm:$0xff]
  %v1478 = vld [vmem:[%s226] sm:$0xff]
  %v1479 = vld [vmem:[%s226 + $0x8] sm:$0xff]
  %v1480 = vld [vmem:[%s226 + $0x18] sm:$0xff]
  %v1481 = vld [vmem:[%s226 + $0x20] sm:$0xff]
  %v1482 = vld [vmem:[%s226 + $0x30] sm:$0xff]
  %v1483 = vld [vmem:[%s226 + $0x38] sm:$0xff]
  %v1484 = vld [vmem:[%s226 + $0x48] sm:$0xff]
  %v1485 = vld [vmem:[%s226 + $0x50] sm:$0xff]
  %v1486 = vld [vmem:[%s226 + $0x60] sm:$0xff]
  %v1487 = vld [vmem:[%s226 + $0x68] sm:$0xff]
  %v1488 = vld [vmem:[%s226 + $0x78] sm:$0xff]
  %v1489 = vld [vmem:[%s226 + $0x80] sm:$0xff]
  %v1490 = vld [vmem:[%s226 + $0x90] sm:$0xff]
  %v1491 = vld [vmem:[%s226 + $0x98] sm:$0xff]
  %v1492 = vld [vmem:[%s226 + $0xa8] sm:$0xff]
  %v1493 = vld [vmem:[%s226 + $0xb0] sm:$0xff]
  %v1494 = vld [vmem:[%s226 + $0xc0] sm:$0xff]
  %v1495 = vld [vmem:[%s226 + $0xc8] sm:$0xff]
  %v1496 = vld [vmem:[%s226 + $0xd8] sm:$0xff]
  %v1497 = vld [vmem:[%s226 + $0xe0] sm:$0xff]
  %v1498 = vld [vmem:[%s226 + $0xf0] sm:$0xff]
  %v1499 = vld [vmem:[%s226 + $0xf8] sm:$0xff]
  %v1500 = vld [vmem:[%s226 + $0x108] sm:$0xff]
  %v1501 = vld [vmem:[%s226 + $0x110] sm:$0xff]
  %v1502 = vld [vmem:[%s226 + $0x120] sm:$0xff]
  %v1503 = vld [vmem:[%s226 + $0x128] sm:$0xff]
  %v1504 = vld [vmem:[%s226 + $0x138] sm:$0xff]
  %v1505 = vld [vmem:[%s226 + $0x140] sm:$0xff]
  %v1506 = vld [vmem:[%s226 + $0x150] sm:$0xff]
  %v1507 = vld [vmem:[%s226 + $0x158] sm:$0xff]
  %v1508 = vld [vmem:[%s226 + $0x168] sm:$0xff]
  %v1509 = vld [vmem:[%s226 + $0x170] sm:$0xff]
  %v1510 = vadd.f32 %v1446, %v1478
  %v1511 = vadd.f32 %v1447, %v1479
  %v1512 = vadd.f32 %v1448, %v1480
  %v1513 = vadd.f32 %v1449, %v1481
  %v1514 = vadd.f32 %v1450, %v1482
  %v1515 = vadd.f32 %v1451, %v1483
  %v1516 = vadd.f32 %v1452, %v1484
  %v1517 = vadd.f32 %v1453, %v1485
  %v1518 = vadd.f32 %v1454, %v1486
  %v1519 = vadd.f32 %v1455, %v1487
  %v1520 = vadd.f32 %v1456, %v1488
  %v1521 = vadd.f32 %v1457, %v1489
  %v1522 = vadd.f32 %v1458, %v1490
  %v1523 = vadd.f32 %v1459, %v1491
  %v1524 = vadd.f32 %v1460, %v1492
  %v1525 = vadd.f32 %v1461, %v1493
  %v1526 = vadd.f32 %v1462, %v1494
  %v1527 = vadd.f32 %v1463, %v1495
  %v1528 = vadd.f32 %v1464, %v1496
  %v1529 = vadd.f32 %v1465, %v1497
  %v1530 = vadd.f32 %v1466, %v1498
  %v1531 = vadd.f32 %v1467, %v1499
  %v1532 = vadd.f32 %v1468, %v1500
  %v1533 = vadd.f32 %v1469, %v1501
  %v1534 = vadd.f32 %v1470, %v1502
  %v1535 = vadd.f32 %v1471, %v1503
  %v1536 = vadd.f32 %v1472, %v1504
  %v1537 = vadd.f32 %v1473, %v1505
  %v1538 = vadd.f32 %v1474, %v1506
  %v1539 = vadd.f32 %v1475, %v1507
  %v1540 = vadd.f32 %v1476, %v1508
  %v1541 = vadd.f32 %v1477, %v1509
  %v1542 = vld [vmem:[%s226 + $0x4] sm:$0xff]
  %v1543 = vld [vmem:[%s226 + $0xc] sm:$0xff]
  %v1544 = vld [vmem:[%s226 + $0x1c] sm:$0xff]
  %v1545 = vld [vmem:[%s226 + $0x24] sm:$0xff]
  %v1546 = vld [vmem:[%s226 + $0x34] sm:$0xff]
  %v1547 = vld [vmem:[%s226 + $0x3c] sm:$0xff]
  %v1548 = vld [vmem:[%s226 + $0x4c] sm:$0xff]
  %v1549 = vld [vmem:[%s226 + $0x54] sm:$0xff]
  %v1550 = vld [vmem:[%s226 + $0x64] sm:$0xff]
  %v1551 = vld [vmem:[%s226 + $0x6c] sm:$0xff]
  %v1552 = vld [vmem:[%s226 + $0x7c] sm:$0xff]
  %v1553 = vld [vmem:[%s226 + $0x84] sm:$0xff]
  %v1554 = vld [vmem:[%s226 + $0x94] sm:$0xff]
  %v1555 = vld [vmem:[%s226 + $0x9c] sm:$0xff]
  %v1556 = vld [vmem:[%s226 + $0xac] sm:$0xff]
  %v1557 = vld [vmem:[%s226 + $0xb4] sm:$0xff]
  %v1558 = vld [vmem:[%s226 + $0xc4] sm:$0xff]
  %v1559 = vld [vmem:[%s226 + $0xcc] sm:$0xff]
  %v1560 = vld [vmem:[%s226 + $0xdc] sm:$0xff]
  %v1561 = vld [vmem:[%s226 + $0xe4] sm:$0xff]
  %v1562 = vld [vmem:[%s226 + $0xf4] sm:$0xff]
  %v1563 = vld [vmem:[%s226 + $0xfc] sm:$0xff]
  %v1564 = vld [vmem:[%s226 + $0x10c] sm:$0xff]
  %v1565 = vld [vmem:[%s226 + $0x114] sm:$0xff]
  %v1566 = vld [vmem:[%s226 + $0x124] sm:$0xff]
  %v1567 = vld [vmem:[%s226 + $0x12c] sm:$0xff]
  %v1568 = vld [vmem:[%s226 + $0x13c] sm:$0xff]
  %v1569 = vld [vmem:[%s226 + $0x144] sm:$0xff]
  %v1570 = vld [vmem:[%s226 + $0x154] sm:$0xff]
  %v1571 = vld [vmem:[%s226 + $0x15c] sm:$0xff]
  %v1572 = vld [vmem:[%s226 + $0x16c] sm:$0xff]
  %v1573 = vld [vmem:[%s226 + $0x174] sm:$0xff]
  %v1574 = vadd.f32 %v1510, %v1542
  %v1575 = vadd.f32 %v1511, %v1543
  %v1576 = vadd.f32 %v1512, %v1544
  %v1577 = vadd.f32 %v1513, %v1545
  %v1578 = vadd.f32 %v1514, %v1546
  %v1579 = vadd.f32 %v1515, %v1547
  %v1580 = vadd.f32 %v1516, %v1548
  %v1581 = vadd.f32 %v1517, %v1549
  %v1582 = vadd.f32 %v1518, %v1550
  %v1583 = vadd.f32 %v1519, %v1551
  %v1584 = vadd.f32 %v1520, %v1552
  %v1585 = vadd.f32 %v1521, %v1553
  %v1586 = vadd.f32 %v1522, %v1554
  %v1587 = vadd.f32 %v1523, %v1555
  %v1588 = vadd.f32 %v1524, %v1556
  %v1589 = vadd.f32 %v1525, %v1557
  %v1590 = vadd.f32 %v1526, %v1558
  %v1591 = vadd.f32 %v1527, %v1559
  %v1592 = vadd.f32 %v1528, %v1560
  %v1593 = vadd.f32 %v1529, %v1561
  %v1594 = vadd.f32 %v1530, %v1562
  %v1595 = vadd.f32 %v1531, %v1563
  %v1596 = vadd.f32 %v1532, %v1564
  %v1597 = vadd.f32 %v1533, %v1565
  %v1598 = vadd.f32 %v1534, %v1566
  %v1599 = vadd.f32 %v1535, %v1567
  %v1600 = vadd.f32 %v1536, %v1568
  %v1601 = vadd.f32 %v1537, %v1569
  %v1602 = vadd.f32 %v1538, %v1570
  %v1603 = vadd.f32 %v1539, %v1571
  %v1604 = vadd.f32 %v1540, %v1572
  %v1605 = vadd.f32 %v1541, %v1573
  %v1606 = vld [vmem:[%s837 + $0x2] sm:$0xff]
  %v1607 = vld [vmem:[%s837 + $0xa] sm:$0xff]
  %v1608 = vld [vmem:[%s837 + $0x1a] sm:$0xff]
  %v1609 = vld [vmem:[%s837 + $0x22] sm:$0xff]
  %v1610 = vld [vmem:[%s837 + $0x32] sm:$0xff]
  %v1611 = vld [vmem:[%s837 + $0x3a] sm:$0xff]
  %v1612 = vld [vmem:[%s837 + $0x4a] sm:$0xff]
  %v1613 = vld [vmem:[%s837 + $0x52] sm:$0xff]
  %v1614 = vld [vmem:[%s837 + $0x62] sm:$0xff]
  %v1615 = vld [vmem:[%s837 + $0x6a] sm:$0xff]
  %v1616 = vld [vmem:[%s837 + $0x7a] sm:$0xff]
  %v1617 = vld [vmem:[%s837 + $0x82] sm:$0xff]
  %v1618 = vld [vmem:[%s837 + $0x92] sm:$0xff]
  %v1619 = vld [vmem:[%s837 + $0x9a] sm:$0xff]
  %v1620 = vld [vmem:[%s837 + $0xaa] sm:$0xff]
  %v1621 = vld [vmem:[%s837 + $0xb2] sm:$0xff]
  %v1622 = vld [vmem:[%s837 + $0xc2] sm:$0xff]
  %v1623 = vld [vmem:[%s837 + $0xca] sm:$0xff]
  %v1624 = vld [vmem:[%s837 + $0xda] sm:$0xff]
  %v1625 = vld [vmem:[%s837 + $0xe2] sm:$0xff]
  %v1626 = vld [vmem:[%s837 + $0xf2] sm:$0xff]
  %v1627 = vld [vmem:[%s837 + $0xfa] sm:$0xff]
  %v1628 = vld [vmem:[%s837 + $0x10a] sm:$0xff]
  %v1629 = vld [vmem:[%s837 + $0x112] sm:$0xff]
  %v1630 = vld [vmem:[%s837 + $0x122] sm:$0xff]
  %v1631 = vld [vmem:[%s837 + $0x12a] sm:$0xff]
  %v1632 = vld [vmem:[%s837 + $0x13a] sm:$0xff]
  %v1633 = vld [vmem:[%s837 + $0x142] sm:$0xff]
  %v1634 = vld [vmem:[%s837 + $0x152] sm:$0xff]
  %v1635 = vld [vmem:[%s837 + $0x15a] sm:$0xff]
  %v1636 = vld [vmem:[%s837 + $0x16a] sm:$0xff]
  %v1637 = vld [vmem:[%s837 + $0x172] sm:$0xff]
  %v1638 = vadd.f32 %v1574, %v1606
  %v1639 = vadd.f32 %v1575, %v1607
  %v1640 = vadd.f32 %v1576, %v1608
  %v1641 = vadd.f32 %v1577, %v1609
  %v1642 = vadd.f32 %v1578, %v1610
  %v1643 = vadd.f32 %v1579, %v1611
  %v1644 = vadd.f32 %v1580, %v1612
  %v1645 = vadd.f32 %v1581, %v1613
  %v1646 = vadd.f32 %v1582, %v1614
  %v1647 = vadd.f32 %v1583, %v1615
  %v1648 = vadd.f32 %v1584, %v1616
  %v1649 = vadd.f32 %v1585, %v1617
  %v1650 = vadd.f32 %v1586, %v1618
  %v1651 = vadd.f32 %v1587, %v1619
  %v1652 = vadd.f32 %v1588, %v1620
  %v1653 = vadd.f32 %v1589, %v1621
  %v1654 = vadd.f32 %v1590, %v1622
  %v1655 = vadd.f32 %v1591, %v1623
  %v1656 = vadd.f32 %v1592, %v1624
  %v1657 = vadd.f32 %v1593, %v1625
  %v1658 = vadd.f32 %v1594, %v1626
  %v1659 = vadd.f32 %v1595, %v1627
  %v1660 = vadd.f32 %v1596, %v1628
  %v1661 = vadd.f32 %v1597, %v1629
  %v1662 = vadd.f32 %v1598, %v1630
  %v1663 = vadd.f32 %v1599, %v1631
  %v1664 = vadd.f32 %v1600, %v1632
  %v1665 = vadd.f32 %v1601, %v1633
  %v1666 = vadd.f32 %v1602, %v1634
  %v1667 = vadd.f32 %v1603, %v1635
  %v1668 = vadd.f32 %v1604, %v1636
  %v1669 = vadd.f32 %v1605, %v1637
  %v1670 = vadd.f32 %v549, %v613
  %v1671 = vadd.f32 %v550, %v614
  %v1672 = vadd.f32 %v551, %v615
  %v1673 = vadd.f32 %v552, %v616
  %v1674 = vadd.f32 %v553, %v617
  %v1675 = vadd.f32 %v554, %v618
  %v1676 = vadd.f32 %v555, %v619
  %v1677 = vadd.f32 %v556, %v620
  %v1678 = vadd.f32 %v557, %v621
  %v1679 = vadd.f32 %v558, %v622
  %v1680 = vadd.f32 %v559, %v623
  %v1681 = vadd.f32 %v560, %v624
  %v1682 = vadd.f32 %v561, %v625
  %v1683 = vadd.f32 %v562, %v626
  %v1684 = vadd.f32 %v563, %v627
  %v1685 = vadd.f32 %v564, %v628
  %v1686 = vadd.f32 %v565, %v629
  %v1687 = vadd.f32 %v566, %v630
  %v1688 = vadd.f32 %v567, %v631
  %v1689 = vadd.f32 %v568, %v632
  %v1690 = vadd.f32 %v569, %v633
  %v1691 = vadd.f32 %v570, %v634
  %v1692 = vadd.f32 %v571, %v635
  %v1693 = vadd.f32 %v572, %v636
  %v1694 = vadd.f32 %v573, %v637
  %v1695 = vadd.f32 %v574, %v638
  %v1696 = vadd.f32 %v575, %v639
  %v1697 = vadd.f32 %v576, %v640
  %v1698 = vadd.f32 %v577, %v641
  %v1699 = vadd.f32 %v578, %v642
  %v1700 = vadd.f32 %v579, %v643
  %v1701 = vadd.f32 %v580, %v644
  %v1702 = vmul.f32 %v709, 2.0
  %v1703 = vmul.f32 %v710, 2.0
  %v1704 = vmul.f32 %v711, 2.0
  %v1705 = vmul.f32 %v712, 2.0
  %v1706 = vmul.f32 %v713, 2.0
  %v1707 = vmul.f32 %v714, 2.0
  %v1708 = vmul.f32 %v715, 2.0
  %v1709 = vmul.f32 %v716, 2.0
  %v1710 = vmul.f32 %v717, 2.0
  %v1711 = vmul.f32 %v718, 2.0
  %v1712 = vmul.f32 %v719, 2.0
  %v1713 = vmul.f32 %v720, 2.0
  %v1714 = vmul.f32 %v721, 2.0
  %v1715 = vmul.f32 %v722, 2.0
  %v1716 = vmul.f32 %v723, 2.0
  %v1717 = vmul.f32 %v724, 2.0
  %v1718 = vmul.f32 %v725, 2.0
  %v1719 = vmul.f32 %v726, 2.0
  %v1720 = vmul.f32 %v727, 2.0
  %v1721 = vmul.f32 %v728, 2.0
  %v1722 = vmul.f32 %v729, 2.0
  %v1723 = vmul.f32 %v730, 2.0
  %v1724 = vmul.f32 %v731, 2.0
  %v1725 = vmul.f32 %v732, 2.0
  %v1726 = vmul.f32 %v733, 2.0
  %v1727 = vmul.f32 %v734, 2.0
  %v1728 = vmul.f32 %v735, 2.0
  %v1729 = vmul.f32 %v736, 2.0
  %v1730 = vmul.f32 %v737, 2.0
  %v1731 = vmul.f32 %v738, 2.0
  %v1732 = vmul.f32 %v739, 2.0
  %v1733 = vmul.f32 %v740, 2.0
  %v1734 = vsub.f32 %v1702, %v485
  %v1735 = vsub.f32 %v1703, %v486
  %v1736 = vsub.f32 %v1704, %v487
  %v1737 = vsub.f32 %v1705, %v488
  %v1738 = vsub.f32 %v1706, %v489
  %v1739 = vsub.f32 %v1707, %v490
  %v1740 = vsub.f32 %v1708, %v491
  %v1741 = vsub.f32 %v1709, %v492
  %v1742 = vsub.f32 %v1710, %v493
  %v1743 = vsub.f32 %v1711, %v494
  %v1744 = vsub.f32 %v1712, %v495
  %v1745 = vsub.f32 %v1713, %v496
  %v1746 = vsub.f32 %v1714, %v497
  %v1747 = vsub.f32 %v1715, %v498
  %v1748 = vsub.f32 %v1716, %v499
  %v1749 = vsub.f32 %v1717, %v500
  %v1750 = vsub.f32 %v1718, %v501
  %v1751 = vsub.f32 %v1719, %v502
  %v1752 = vsub.f32 %v1720, %v503
  %v1753 = vsub.f32 %v1721, %v504
  %v1754 = vsub.f32 %v1722, %v505
  %v1755 = vsub.f32 %v1723, %v506
  %v1756 = vsub.f32 %v1724, %v507
  %v1757 = vsub.f32 %v1725, %v508
  %v1758 = vsub.f32 %v1726, %v509
  %v1759 = vsub.f32 %v1727, %v510
  %v1760 = vsub.f32 %v1728, %v511
  %v1761 = vsub.f32 %v1729, %v512
  %v1762 = vsub.f32 %v1730, %v513
  %v1763 = vsub.f32 %v1731, %v514
  %v1764 = vsub.f32 %v1732, %v515
  %v1765 = vsub.f32 %v1733, %v516
  %v1766 = vmul.f32 %v259, 4.0
  %v1767 = vmul.f32 %v260, 4.0
  %v1768 = vmul.f32 %v261, 4.0
  %v1769 = vmul.f32 %v262, 4.0
  %v1770 = vmul.f32 %v263, 4.0
  %v1771 = vmul.f32 %v264, 4.0
  %v1772 = vmul.f32 %v265, 4.0
  %v1773 = vmul.f32 %v266, 4.0
  %v1774 = vmul.f32 %v267, 4.0
  %v1775 = vmul.f32 %v268, 4.0
  %v1776 = vmul.f32 %v269, 4.0
  %v1777 = vmul.f32 %v270, 4.0
  %v1778 = vmul.f32 %v271, 4.0
  %v1779 = vmul.f32 %v272, 4.0
  %v1780 = vmul.f32 %v273, 4.0
  %v1781 = vmul.f32 %v274, 4.0
  %v1782 = vmul.f32 %v275, 4.0
  %v1783 = vmul.f32 %v276, 4.0
  %v1784 = vmul.f32 %v277, 4.0
  %v1785 = vmul.f32 %v278, 4.0
  %v1786 = vmul.f32 %v279, 4.0
  %v1787 = vmul.f32 %v280, 4.0
  %v1788 = vmul.f32 %v281, 4.0
  %v1789 = vmul.f32 %v282, 4.0
  %v1790 = vmul.f32 %v283, 4.0
  %v1791 = vmul.f32 %v284, 4.0
  %v1792 = vmul.f32 %v285, 4.0
  %v1793 = vmul.f32 %v286, 4.0
  %v1794 = vmul.f32 %v287, 4.0
  %v1795 = vmul.f32 %v288, 4.0
  %v1796 = vmul.f32 %v289, 4.0
  %v1797 = vmul.f32 %v290, 4.0
  %v1798 = vsub.f32 %v1734, %v1766
  %v1799 = vsub.f32 %v1735, %v1767
  %v1800 = vsub.f32 %v1736, %v1768
  %v1801 = vsub.f32 %v1737, %v1769
  %v1802 = vsub.f32 %v1738, %v1770
  %v1803 = vsub.f32 %v1739, %v1771
  %v1804 = vsub.f32 %v1740, %v1772
  %v1805 = vsub.f32 %v1741, %v1773
  %v1806 = vsub.f32 %v1742, %v1774
  %v1807 = vsub.f32 %v1743, %v1775
  %v1808 = vsub.f32 %v1744, %v1776
  %v1809 = vsub.f32 %v1745, %v1777
  %v1810 = vsub.f32 %v1746, %v1778
  %v1811 = vsub.f32 %v1747, %v1779
  %v1812 = vsub.f32 %v1748, %v1780
  %v1813 = vsub.f32 %v1749, %v1781
  %v1814 = vsub.f32 %v1750, %v1782
  %v1815 = vsub.f32 %v1751, %v1783
  %v1816 = vsub.f32 %v1752, %v1784
  %v1817 = vsub.f32 %v1753, %v1785
  %v1818 = vsub.f32 %v1754, %v1786
  %v1819 = vsub.f32 %v1755, %v1787
  %v1820 = vsub.f32 %v1756, %v1788
  %v1821 = vsub.f32 %v1757, %v1789
  %v1822 = vsub.f32 %v1758, %v1790
  %v1823 = vsub.f32 %v1759, %v1791
  %v1824 = vsub.f32 %v1760, %v1792
  %v1825 = vsub.f32 %v1761, %v1793
  %v1826 = vsub.f32 %v1762, %v1794
  %v1827 = vsub.f32 %v1763, %v1795
  %v1828 = vsub.f32 %v1764, %v1796
  %v1829 = vsub.f32 %v1765, %v1797
  %v1830 = vmul.f32 %v1414, 2.0
  %v1831 = vmul.f32 %v1415, 2.0
  %v1832 = vmul.f32 %v1416, 2.0
  %v1833 = vmul.f32 %v1417, 2.0
  %v1834 = vmul.f32 %v1418, 2.0
  %v1835 = vmul.f32 %v1419, 2.0
  %v1836 = vmul.f32 %v1420, 2.0
  %v1837 = vmul.f32 %v1421, 2.0
  %v1838 = vmul.f32 %v1422, 2.0
  %v1839 = vmul.f32 %v1423, 2.0
  %v1840 = vmul.f32 %v1424, 2.0
  %v1841 = vmul.f32 %v1425, 2.0
  %v1842 = vmul.f32 %v1426, 2.0
  %v1843 = vmul.f32 %v1427, 2.0
  %v1844 = vmul.f32 %v1428, 2.0
  %v1845 = vmul.f32 %v1429, 2.0
  %v1846 = vmul.f32 %v1430, 2.0
  %v1847 = vmul.f32 %v1431, 2.0
  %v1848 = vmul.f32 %v1432, 2.0
  %v1849 = vmul.f32 %v1433, 2.0
  %v1850 = vmul.f32 %v1434, 2.0
  %v1851 = vmul.f32 %v1435, 2.0
  %v1852 = vmul.f32 %v1436, 2.0
  %v1853 = vmul.f32 %v1437, 2.0
  %v1854 = vmul.f32 %v1438, 2.0
  %v1855 = vmul.f32 %v1439, 2.0
  %v1856 = vmul.f32 %v1440, 2.0
  %v1857 = vmul.f32 %v1441, 2.0
  %v1858 = vmul.f32 %v1442, 2.0
  %v1859 = vmul.f32 %v1443, 2.0
  %v1860 = vmul.f32 %v1444, 2.0
  %v1861 = vmul.f32 %v1445, 2.0
  %v1862 = vsub.f32 %v1830, %v934
  %v1863 = vsub.f32 %v1831, %v935
  %v1864 = vsub.f32 %v1832, %v936
  %v1865 = vsub.f32 %v1833, %v937
  %v1866 = vsub.f32 %v1834, %v938
  %v1867 = vsub.f32 %v1835, %v939
  %v1868 = vsub.f32 %v1836, %v940
  %v1869 = vsub.f32 %v1837, %v941
  %v1870 = vsub.f32 %v1838, %v942
  %v1871 = vsub.f32 %v1839, %v943
  %v1872 = vsub.f32 %v1840, %v944
  %v1873 = vsub.f32 %v1841, %v945
  %v1874 = vsub.f32 %v1842, %v946
  %v1875 = vsub.f32 %v1843, %v947
  %v1876 = vsub.f32 %v1844, %v948
  %v1877 = vsub.f32 %v1845, %v949
  %v1878 = vsub.f32 %v1846, %v950
  %v1879 = vsub.f32 %v1847, %v951
  %v1880 = vsub.f32 %v1848, %v952
  %v1881 = vsub.f32 %v1849, %v953
  %v1882 = vsub.f32 %v1850, %v954
  %v1883 = vsub.f32 %v1851, %v955
  %v1884 = vsub.f32 %v1852, %v956
  %v1885 = vsub.f32 %v1853, %v957
  %v1886 = vsub.f32 %v1854, %v958
  %v1887 = vsub.f32 %v1855, %v959
  %v1888 = vsub.f32 %v1856, %v960
  %v1889 = vsub.f32 %v1857, %v961
  %v1890 = vsub.f32 %v1858, %v962
  %v1891 = vsub.f32 %v1859, %v963
  %v1892 = vsub.f32 %v1860, %v964
  %v1893 = vsub.f32 %v1861, %v965
  %v1894 = vmul.f32 %v1638, 2.0
  %v1895 = vmul.f32 %v1639, 2.0
  %v1896 = vmul.f32 %v1640, 2.0
  %v1897 = vmul.f32 %v1641, 2.0
  %v1898 = vmul.f32 %v1642, 2.0
  %v1899 = vmul.f32 %v1643, 2.0
  %v1900 = vmul.f32 %v1644, 2.0
  %v1901 = vmul.f32 %v1645, 2.0
  %v1902 = vmul.f32 %v1646, 2.0
  %v1903 = vmul.f32 %v1647, 2.0
  %v1904 = vmul.f32 %v1648, 2.0
  %v1905 = vmul.f32 %v1649, 2.0
  %v1906 = vmul.f32 %v1650, 2.0
  %v1907 = vmul.f32 %v1651, 2.0
  %v1908 = vmul.f32 %v1652, 2.0
  %v1909 = vmul.f32 %v1653, 2.0
  %v1910 = vmul.f32 %v1654, 2.0
  %v1911 = vmul.f32 %v1655, 2.0
  %v1912 = vmul.f32 %v1656, 2.0
  %v1913 = vmul.f32 %v1657, 2.0
  %v1914 = vmul.f32 %v1658, 2.0
  %v1915 = vmul.f32 %v1659, 2.0
  %v1916 = vmul.f32 %v1660, 2.0
  %v1917 = vmul.f32 %v1661, 2.0
  %v1918 = vmul.f32 %v1662, 2.0
  %v1919 = vmul.f32 %v1663, 2.0
  %v1920 = vmul.f32 %v1664, 2.0
  %v1921 = vmul.f32 %v1665, 2.0
  %v1922 = vmul.f32 %v1666, 2.0
  %v1923 = vmul.f32 %v1667, 2.0
  %v1924 = vmul.f32 %v1668, 2.0
  %v1925 = vmul.f32 %v1669, 2.0
  %v1926 = vsub.f32 %v1862, %v1894
  %v1927 = vsub.f32 %v1863, %v1895
  %v1928 = vsub.f32 %v1864, %v1896
  %v1929 = vsub.f32 %v1865, %v1897
  %v1930 = vsub.f32 %v1866, %v1898
  %v1931 = vsub.f32 %v1867, %v1899
  %v1932 = vsub.f32 %v1868, %v1900
  %v1933 = vsub.f32 %v1869, %v1901
  %v1934 = vsub.f32 %v1870, %v1902
  %v1935 = vsub.f32 %v1871, %v1903
  %v1936 = vsub.f32 %v1872, %v1904
  %v1937 = vsub.f32 %v1873, %v1905
  %v1938 = vsub.f32 %v1874, %v1906
  %v1939 = vsub.f32 %v1875, %v1907
  %v1940 = vsub.f32 %v1876, %v1908
  %v1941 = vsub.f32 %v1877, %v1909
  %v1942 = vsub.f32 %v1878, %v1910
  %v1943 = vsub.f32 %v1879, %v1911
  %v1944 = vsub.f32 %v1880, %v1912
  %v1945 = vsub.f32 %v1881, %v1913
  %v1946 = vsub.f32 %v1882, %v1914
  %v1947 = vsub.f32 %v1883, %v1915
  %v1948 = vsub.f32 %v1884, %v1916
  %v1949 = vsub.f32 %v1885, %v1917
  %v1950 = vsub.f32 %v1886, %v1918
  %v1951 = vsub.f32 %v1887, %v1919
  %v1952 = vsub.f32 %v1888, %v1920
  %v1953 = vsub.f32 %v1889, %v1921
  %v1954 = vsub.f32 %v1890, %v1922
  %v1955 = vsub.f32 %v1891, %v1923
  %v1956 = vsub.f32 %v1892, %v1924
  %v1957 = vsub.f32 %v1893, %v1925
  %v1958 = vmul.f32 %v485, 6.0
  %v1959 = vmul.f32 %v486, 6.0
  %v1960 = vmul.f32 %v487, 6.0
  %v1961 = vmul.f32 %v488, 6.0
  %v1962 = vmul.f32 %v489, 6.0
  %v1963 = vmul.f32 %v490, 6.0
  %v1964 = vmul.f32 %v491, 6.0
  %v1965 = vmul.f32 %v492, 6.0
  %v1966 = vmul.f32 %v493, 6.0
  %v1967 = vmul.f32 %v494, 6.0
  %v1968 = vmul.f32 %v495, 6.0
  %v1969 = vmul.f32 %v496, 6.0
  %v1970 = vmul.f32 %v497, 6.0
  %v1971 = vmul.f32 %v498, 6.0
  %v1972 = vmul.f32 %v499, 6.0
  %v1973 = vmul.f32 %v500, 6.0
  %v1974 = vmul.f32 %v501, 6.0
  %v1975 = vmul.f32 %v502, 6.0
  %v1976 = vmul.f32 %v503, 6.0
  %v1977 = vmul.f32 %v504, 6.0
  %v1978 = vmul.f32 %v505, 6.0
  %v1979 = vmul.f32 %v506, 6.0
  %v1980 = vmul.f32 %v507, 6.0
  %v1981 = vmul.f32 %v508, 6.0
  %v1982 = vmul.f32 %v509, 6.0
  %v1983 = vmul.f32 %v510, 6.0
  %v1984 = vmul.f32 %v511, 6.0
  %v1985 = vmul.f32 %v512, 6.0
  %v1986 = vmul.f32 %v513, 6.0
  %v1987 = vmul.f32 %v514, 6.0
  %v1988 = vmul.f32 %v515, 6.0
  %v1989 = vmul.f32 %v516, 6.0
  %v1990 = vsub.f32 %v1926, %v1958
  %v1991 = vsub.f32 %v1927, %v1959
  %v1992 = vsub.f32 %v1928, %v1960
  %v1993 = vsub.f32 %v1929, %v1961
  %v1994 = vsub.f32 %v1930, %v1962
  %v1995 = vsub.f32 %v1931, %v1963
  %v1996 = vsub.f32 %v1932, %v1964
  %v1997 = vsub.f32 %v1933, %v1965
  %v1998 = vsub.f32 %v1934, %v1966
  %v1999 = vsub.f32 %v1935, %v1967
  %v2000 = vsub.f32 %v1936, %v1968
  %v2001 = vsub.f32 %v1937, %v1969
  %v2002 = vsub.f32 %v1938, %v1970
  %v2003 = vsub.f32 %v1939, %v1971
  %v2004 = vsub.f32 %v1940, %v1972
  %v2005 = vsub.f32 %v1941, %v1973
  %v2006 = vsub.f32 %v1942, %v1974
  %v2007 = vsub.f32 %v1943, %v1975
  %v2008 = vsub.f32 %v1944, %v1976
  %v2009 = vsub.f32 %v1945, %v1977
  %v2010 = vsub.f32 %v1946, %v1978
  %v2011 = vsub.f32 %v1947, %v1979
  %v2012 = vsub.f32 %v1948, %v1980
  %v2013 = vsub.f32 %v1949, %v1981
  %v2014 = vsub.f32 %v1950, %v1982
  %v2015 = vsub.f32 %v1951, %v1983
  %v2016 = vsub.f32 %v1952, %v1984
  %v2017 = vsub.f32 %v1953, %v1985
  %v2018 = vsub.f32 %v1954, %v1986
  %v2019 = vsub.f32 %v1955, %v1987
  %v2020 = vsub.f32 %v1956, %v1988
  %v2021 = vsub.f32 %v1957, %v1989
  %v2022 = vmul.f32 %v709, 8.0
  %v2023 = vmul.f32 %v710, 8.0
  %v2024 = vmul.f32 %v711, 8.0
  %v2025 = vmul.f32 %v712, 8.0
  %v2026 = vmul.f32 %v713, 8.0
  %v2027 = vmul.f32 %v714, 8.0
  %v2028 = vmul.f32 %v715, 8.0
  %v2029 = vmul.f32 %v716, 8.0
  %v2030 = vmul.f32 %v717, 8.0
  %v2031 = vmul.f32 %v718, 8.0
  %v2032 = vmul.f32 %v719, 8.0
  %v2033 = vmul.f32 %v720, 8.0
  %v2034 = vmul.f32 %v721, 8.0
  %v2035 = vmul.f32 %v722, 8.0
  %v2036 = vmul.f32 %v723, 8.0
  %v2037 = vmul.f32 %v724, 8.0
  %v2038 = vmul.f32 %v725, 8.0
  %v2039 = vmul.f32 %v726, 8.0
  %v2040 = vmul.f32 %v727, 8.0
  %v2041 = vmul.f32 %v728, 8.0
  %v2042 = vmul.f32 %v729, 8.0
  %v2043 = vmul.f32 %v730, 8.0
  %v2044 = vmul.f32 %v731, 8.0
  %v2045 = vmul.f32 %v732, 8.0
  %v2046 = vmul.f32 %v733, 8.0
  %v2047 = vmul.f32 %v734, 8.0
  %v2048 = vmul.f32 %v735, 8.0
  %v2049 = vmul.f32 %v736, 8.0
  %v2050 = vmul.f32 %v737, 8.0
  %v2051 = vmul.f32 %v738, 8.0
  %v2052 = vmul.f32 %v739, 8.0
  %v2053 = vmul.f32 %v740, 8.0
  %v2054 = vadd.f32 %v1990, %v2022
  %v2055 = vadd.f32 %v1991, %v2023
  %v2056 = vadd.f32 %v1992, %v2024
  %v2057 = vadd.f32 %v1993, %v2025
  %v2058 = vadd.f32 %v1994, %v2026
  %v2059 = vadd.f32 %v1995, %v2027
  %v2060 = vadd.f32 %v1996, %v2028
  %v2061 = vadd.f32 %v1997, %v2029
  %v2062 = vadd.f32 %v1998, %v2030
  %v2063 = vadd.f32 %v1999, %v2031
  %v2064 = vadd.f32 %v2000, %v2032
  %v2065 = vadd.f32 %v2001, %v2033
  %v2066 = vadd.f32 %v2002, %v2034
  %v2067 = vadd.f32 %v2003, %v2035
  %v2068 = vadd.f32 %v2004, %v2036
  %v2069 = vadd.f32 %v2005, %v2037
  %v2070 = vadd.f32 %v2006, %v2038
  %v2071 = vadd.f32 %v2007, %v2039
  %v2072 = vadd.f32 %v2008, %v2040
  %v2073 = vadd.f32 %v2009, %v2041
  %v2074 = vadd.f32 %v2010, %v2042
  %v2075 = vadd.f32 %v2011, %v2043
  %v2076 = vadd.f32 %v2012, %v2044
  %v2077 = vadd.f32 %v2013, %v2045
  %v2078 = vadd.f32 %v2014, %v2046
  %v2079 = vadd.f32 %v2015, %v2047
  %v2080 = vadd.f32 %v2016, %v2048
  %v2081 = vadd.f32 %v2017, %v2049
  %v2082 = vadd.f32 %v2018, %v2050
  %v2083 = vadd.f32 %v2019, %v2051
  %v2084 = vadd.f32 %v2020, %v2052
  %v2085 = vadd.f32 %v2021, %v2053
  %v2086 = vmul.f32 %v259, 12.0
  %v2087 = vmul.f32 %v260, 12.0
  %v2088 = vmul.f32 %v261, 12.0
  %v2089 = vmul.f32 %v262, 12.0
  %v2090 = vmul.f32 %v263, 12.0
  %v2091 = vmul.f32 %v264, 12.0
  %v2092 = vmul.f32 %v265, 12.0
  %v2093 = vmul.f32 %v266, 12.0
  %v2094 = vmul.f32 %v267, 12.0
  %v2095 = vmul.f32 %v268, 12.0
  %v2096 = vmul.f32 %v269, 12.0
  %v2097 = vmul.f32 %v270, 12.0
  %v2098 = vmul.f32 %v271, 12.0
  %v2099 = vmul.f32 %v272, 12.0
  %v2100 = vmul.f32 %v273, 12.0
  %v2101 = vmul.f32 %v274, 12.0
  %v2102 = vmul.f32 %v275, 12.0
  %v2103 = vmul.f32 %v276, 12.0
  %v2104 = vmul.f32 %v277, 12.0
  %v2105 = vmul.f32 %v278, 12.0
  %v2106 = vmul.f32 %v279, 12.0
  %v2107 = vmul.f32 %v280, 12.0
  %v2108 = vmul.f32 %v281, 12.0
  %v2109 = vmul.f32 %v282, 12.0
  %v2110 = vmul.f32 %v283, 12.0
  %v2111 = vmul.f32 %v284, 12.0
  %v2112 = vmul.f32 %v285, 12.0
  %v2113 = vmul.f32 %v286, 12.0
  %v2114 = vmul.f32 %v287, 12.0
  %v2115 = vmul.f32 %v288, 12.0
  %v2116 = vmul.f32 %v289, 12.0
  %v2117 = vmul.f32 %v290, 12.0
  %v2118 = vsub.f32 %v2054, %v2086
  %v2119 = vsub.f32 %v2055, %v2087
  %v2120 = vsub.f32 %v2056, %v2088
  %v2121 = vsub.f32 %v2057, %v2089
  %v2122 = vsub.f32 %v2058, %v2090
  %v2123 = vsub.f32 %v2059, %v2091
  %v2124 = vsub.f32 %v2060, %v2092
  %v2125 = vsub.f32 %v2061, %v2093
  %v2126 = vsub.f32 %v2062, %v2094
  %v2127 = vsub.f32 %v2063, %v2095
  %v2128 = vsub.f32 %v2064, %v2096
  %v2129 = vsub.f32 %v2065, %v2097
  %v2130 = vsub.f32 %v2066, %v2098
  %v2131 = vsub.f32 %v2067, %v2099
  %v2132 = vsub.f32 %v2068, %v2100
  %v2133 = vsub.f32 %v2069, %v2101
  %v2134 = vsub.f32 %v2070, %v2102
  %v2135 = vsub.f32 %v2071, %v2103
  %v2136 = vsub.f32 %v2072, %v2104
  %v2137 = vsub.f32 %v2073, %v2105
  %v2138 = vsub.f32 %v2074, %v2106
  %v2139 = vsub.f32 %v2075, %v2107
  %v2140 = vsub.f32 %v2076, %v2108
  %v2141 = vsub.f32 %v2077, %v2109
  %v2142 = vsub.f32 %v2078, %v2110
  %v2143 = vsub.f32 %v2079, %v2111
  %v2144 = vsub.f32 %v2080, %v2112
  %v2145 = vsub.f32 %v2081, %v2113
  %v2146 = vsub.f32 %v2082, %v2114
  %v2147 = vsub.f32 %v2083, %v2115
  %v2148 = vsub.f32 %v2084, %v2116
  %v2149 = vsub.f32 %v2085, %v2117
  %v2150 = vmul.f32 %v259, 2.0
  %v2151 = vmul.f32 %v260, 2.0
  %v2152 = vmul.f32 %v261, 2.0
  %v2153 = vmul.f32 %v262, 2.0
  %v2154 = vmul.f32 %v263, 2.0
  %v2155 = vmul.f32 %v264, 2.0
  %v2156 = vmul.f32 %v265, 2.0
  %v2157 = vmul.f32 %v266, 2.0
  %v2158 = vmul.f32 %v267, 2.0
  %v2159 = vmul.f32 %v268, 2.0
  %v2160 = vmul.f32 %v269, 2.0
  %v2161 = vmul.f32 %v270, 2.0
  %v2162 = vmul.f32 %v271, 2.0
  %v2163 = vmul.f32 %v272, 2.0
  %v2164 = vmul.f32 %v273, 2.0
  %v2165 = vmul.f32 %v274, 2.0
  %v2166 = vmul.f32 %v275, 2.0
  %v2167 = vmul.f32 %v276, 2.0
  %v2168 = vmul.f32 %v277, 2.0
  %v2169 = vmul.f32 %v278, 2.0
  %v2170 = vmul.f32 %v279, 2.0
  %v2171 = vmul.f32 %v280, 2.0
  %v2172 = vmul.f32 %v281, 2.0
  %v2173 = vmul.f32 %v282, 2.0
  %v2174 = vmul.f32 %v283, 2.0
  %v2175 = vmul.f32 %v284, 2.0
  %v2176 = vmul.f32 %v285, 2.0
  %v2177 = vmul.f32 %v286, 2.0
  %v2178 = vmul.f32 %v287, 2.0
  %v2179 = vmul.f32 %v288, 2.0
  %v2180 = vmul.f32 %v289, 2.0
  %v2181 = vmul.f32 %v290, 2.0
  %v2182 = vsub.f32 %v1670, %v2150
  %v2183 = vsub.f32 %v1671, %v2151
  %v2184 = vsub.f32 %v1672, %v2152
  %v2185 = vsub.f32 %v1673, %v2153
  %v2186 = vsub.f32 %v1674, %v2154
  %v2187 = vsub.f32 %v1675, %v2155
  %v2188 = vsub.f32 %v1676, %v2156
  %v2189 = vsub.f32 %v1677, %v2157
  %v2190 = vsub.f32 %v1678, %v2158
  %v2191 = vsub.f32 %v1679, %v2159
  %v2192 = vsub.f32 %v1680, %v2160
  %v2193 = vsub.f32 %v1681, %v2161
  %v2194 = vsub.f32 %v1682, %v2162
  %v2195 = vsub.f32 %v1683, %v2163
  %v2196 = vsub.f32 %v1684, %v2164
  %v2197 = vsub.f32 %v1685, %v2165
  %v2198 = vsub.f32 %v1686, %v2166
  %v2199 = vsub.f32 %v1687, %v2167
  %v2200 = vsub.f32 %v1688, %v2168
  %v2201 = vsub.f32 %v1689, %v2169
  %v2202 = vsub.f32 %v1690, %v2170
  %v2203 = vsub.f32 %v1691, %v2171
  %v2204 = vsub.f32 %v1692, %v2172
  %v2205 = vsub.f32 %v1693, %v2173
  %v2206 = vsub.f32 %v1694, %v2174
  %v2207 = vsub.f32 %v1695, %v2175
  %v2208 = vsub.f32 %v1696, %v2176
  %v2209 = vsub.f32 %v1697, %v2177
  %v2210 = vsub.f32 %v1698, %v2178
  %v2211 = vsub.f32 %v1699, %v2179
  %v2212 = vsub.f32 %v1700, %v2180
  %v2213 = vsub.f32 %v1701, %v2181
  %v2214 = vmul.f32 %v1798, 0.25
  %v2215 = vmul.f32 %v1799, 0.25
  %v2216 = vmul.f32 %v1800, 0.25
  %v2217 = vmul.f32 %v1801, 0.25
  %v2218 = vmul.f32 %v1802, 0.25
  %v2219 = vmul.f32 %v1803, 0.25
  %v2220 = vmul.f32 %v1804, 0.25
  %v2221 = vmul.f32 %v1805, 0.25
  %v2222 = vmul.f32 %v1806, 0.25
  %v2223 = vmul.f32 %v1807, 0.25
  %v2224 = vmul.f32 %v1808, 0.25
  %v2225 = vmul.f32 %v1809, 0.25
  %v2226 = vmul.f32 %v1810, 0.25
  %v2227 = vmul.f32 %v1811, 0.25
  %v2228 = vmul.f32 %v1812, 0.25
  %v2229 = vmul.f32 %v1813, 0.25
  %v2230 = vmul.f32 %v1814, 0.25
  %v2231 = vmul.f32 %v1815, 0.25
  %v2232 = vmul.f32 %v1816, 0.25
  %v2233 = vmul.f32 %v1817, 0.25
  %v2234 = vmul.f32 %v1818, 0.25
  %v2235 = vmul.f32 %v1819, 0.25
  %v2236 = vmul.f32 %v1820, 0.25
  %v2237 = vmul.f32 %v1821, 0.25
  %v2238 = vmul.f32 %v1822, 0.25
  %v2239 = vmul.f32 %v1823, 0.25
  %v2240 = vmul.f32 %v1824, 0.25
  %v2241 = vmul.f32 %v1825, 0.25
  %v2242 = vmul.f32 %v1826, 0.25
  %v2243 = vmul.f32 %v1827, 0.25
  %v2244 = vmul.f32 %v1828, 0.25
  %v2245 = vmul.f32 %v1829, 0.25
  %v2246 = vmax.f32 %v2214, -2.0
  %v2247 = vmax.f32 %v2215, -2.0
  %v2248 = vmax.f32 %v2216, -2.0
  %v2249 = vmax.f32 %v2217, -2.0
  %v2250 = vmax.f32 %v2218, -2.0
  %v2251 = vmax.f32 %v2219, -2.0
  %v2252 = vmax.f32 %v2220, -2.0
  %v2253 = vmax.f32 %v2221, -2.0
  %v2254 = vmax.f32 %v2222, -2.0
  %v2255 = vmax.f32 %v2223, -2.0
  %v2256 = vmax.f32 %v2224, -2.0
  %v2257 = vmax.f32 %v2225, -2.0
  %v2258 = vmax.f32 %v2226, -2.0
  %v2259 = vmax.f32 %v2227, -2.0
  %v2260 = vmax.f32 %v2228, -2.0
  %v2261 = vmax.f32 %v2229, -2.0
  %v2262 = vmax.f32 %v2230, -2.0
  %v2263 = vmax.f32 %v2231, -2.0
  %v2264 = vmax.f32 %v2232, -2.0
  %v2265 = vmax.f32 %v2233, -2.0
  %v2266 = vmax.f32 %v2234, -2.0
  %v2267 = vmax.f32 %v2235, -2.0
  %v2268 = vmax.f32 %v2236, -2.0
  %v2269 = vmax.f32 %v2237, -2.0
  %v2270 = vmax.f32 %v2238, -2.0
  %v2271 = vmax.f32 %v2239, -2.0
  %v2272 = vmax.f32 %v2240, -2.0
  %v2273 = vmax.f32 %v2241, -2.0
  %v2274 = vmax.f32 %v2242, -2.0
  %v2275 = vmax.f32 %v2243, -2.0
  %v2276 = vmax.f32 %v2244, -2.0
  %v2277 = vmax.f32 %v2245, -2.0
  %v2278 = vmin.f32 %v2246, 2.0
  %v2279 = vmin.f32 %v2247, 2.0
  %v2280 = vmin.f32 %v2248, 2.0
  %v2281 = vmin.f32 %v2249, 2.0
  %v2282 = vmin.f32 %v2250, 2.0
  %v2283 = vmin.f32 %v2251, 2.0
  %v2284 = vmin.f32 %v2252, 2.0
  %v2285 = vmin.f32 %v2253, 2.0
  %v2286 = vmin.f32 %v2254, 2.0
  %v2287 = vmin.f32 %v2255, 2.0
  %v2288 = vmin.f32 %v2256, 2.0
  %v2289 = vmin.f32 %v2257, 2.0
  %v2290 = vmin.f32 %v2258, 2.0
  %v2291 = vmin.f32 %v2259, 2.0
  %v2292 = vmin.f32 %v2260, 2.0
  %v2293 = vmin.f32 %v2261, 2.0
  %v2294 = vmin.f32 %v2262, 2.0
  %v2295 = vmin.f32 %v2263, 2.0
  %v2296 = vmin.f32 %v2264, 2.0
  %v2297 = vmin.f32 %v2265, 2.0
  %v2298 = vmin.f32 %v2266, 2.0
  %v2299 = vmin.f32 %v2267, 2.0
  %v2300 = vmin.f32 %v2268, 2.0
  %v2301 = vmin.f32 %v2269, 2.0
  %v2302 = vmin.f32 %v2270, 2.0
  %v2303 = vmin.f32 %v2271, 2.0
  %v2304 = vmin.f32 %v2272, 2.0
  %v2305 = vmin.f32 %v2273, 2.0
  %v2306 = vmin.f32 %v2274, 2.0
  %v2307 = vmin.f32 %v2275, 2.0
  %v2308 = vmin.f32 %v2276, 2.0
  %v2309 = vmin.f32 %v2277, 2.0
  %2310 = vst.msk [vmem:[%s1] sm:$0xff] %vm8, %v2278
  %2311 = vst.msk [vmem:[%s1 + $0x8] sm:$0xff] %vm8, %v2279
  %2312 = vst.msk [vmem:[%s1 + $0x10] sm:$0xff] %vm8, %v2280
  %2313 = vst.msk [vmem:[%s1 + $0x18] sm:$0xff] %vm8, %v2281
  %2314 = vst.msk [vmem:[%s1 + $0x20] sm:$0xff] %vm8, %v2282
  %2315 = vst.msk [vmem:[%s1 + $0x28] sm:$0xff] %vm8, %v2283
  %2316 = vst.msk [vmem:[%s1 + $0x30] sm:$0xff] %vm8, %v2284
  %2317 = vst.msk [vmem:[%s1 + $0x38] sm:$0xff] %vm8, %v2285
  %2318 = vst.msk [vmem:[%s1 + $0x40] sm:$0xff] %vm8, %v2286
  %2319 = vst.msk [vmem:[%s1 + $0x48] sm:$0xff] %vm8, %v2287
  %2320 = vst.msk [vmem:[%s1 + $0x50] sm:$0xff] %vm8, %v2288
  %2321 = vst.msk [vmem:[%s1 + $0x58] sm:$0xff] %vm8, %v2289
  %2322 = vst.msk [vmem:[%s1 + $0x60] sm:$0xff] %vm8, %v2290
  %2323 = vst.msk [vmem:[%s1 + $0x68] sm:$0xff] %vm8, %v2291
  %2324 = vst.msk [vmem:[%s1 + $0x70] sm:$0xff] %vm8, %v2292
  %2325 = vst.msk [vmem:[%s1 + $0x78] sm:$0xff] %vm8, %v2293
  %2326 = vst.msk [vmem:[%s1 + $0x80] sm:$0xff] %vm8, %v2294
  %2327 = vst.msk [vmem:[%s1 + $0x88] sm:$0xff] %vm8, %v2295
  %2328 = vst.msk [vmem:[%s1 + $0x90] sm:$0xff] %vm8, %v2296
  %2329 = vst.msk [vmem:[%s1 + $0x98] sm:$0xff] %vm8, %v2297
  %2330 = vst.msk [vmem:[%s1 + $0xa0] sm:$0xff] %vm8, %v2298
  %2331 = vst.msk [vmem:[%s1 + $0xa8] sm:$0xff] %vm8, %v2299
  %2332 = vst.msk [vmem:[%s1 + $0xb0] sm:$0xff] %vm8, %v2300
  %2333 = vst.msk [vmem:[%s1 + $0xb8] sm:$0xff] %vm8, %v2301
  %2334 = vst.msk [vmem:[%s1 + $0xc0] sm:$0xff] %vm8, %v2302
  %2335 = vst.msk [vmem:[%s1 + $0xc8] sm:$0xff] %vm8, %v2303
  %2336 = vst.msk [vmem:[%s1 + $0xd0] sm:$0xff] %vm8, %v2304
  %2337 = vst.msk [vmem:[%s1 + $0xd8] sm:$0xff] %vm8, %v2305
  %2338 = vst.msk [vmem:[%s1 + $0xe0] sm:$0xff] %vm8, %v2306
  %2339 = vst.msk [vmem:[%s1 + $0xe8] sm:$0xff] %vm8, %v2307
  %2340 = vst.msk [vmem:[%s1 + $0xf0] sm:$0xff] %vm8, %v2308
  %2341 = vst.msk [vmem:[%s1 + $0xf8] sm:$0xff] %vm8, %v2309
  %v2342 = vmul.f32 %v2118, 0.083333336
  %v2343 = vmul.f32 %v2119, 0.083333336
  %v2344 = vmul.f32 %v2120, 0.083333336
  %v2345 = vmul.f32 %v2121, 0.083333336
  %v2346 = vmul.f32 %v2122, 0.083333336
  %v2347 = vmul.f32 %v2123, 0.083333336
  %v2348 = vmul.f32 %v2124, 0.083333336
  %v2349 = vmul.f32 %v2125, 0.083333336
  %v2350 = vmul.f32 %v2126, 0.083333336
  %v2351 = vmul.f32 %v2127, 0.083333336
  %v2352 = vmul.f32 %v2128, 0.083333336
  %v2353 = vmul.f32 %v2129, 0.083333336
  %v2354 = vmul.f32 %v2130, 0.083333336
  %v2355 = vmul.f32 %v2131, 0.083333336
  %v2356 = vmul.f32 %v2132, 0.083333336
  %v2357 = vmul.f32 %v2133, 0.083333336
  %v2358 = vmul.f32 %v2134, 0.083333336
  %v2359 = vmul.f32 %v2135, 0.083333336
  %v2360 = vmul.f32 %v2136, 0.083333336
  %v2361 = vmul.f32 %v2137, 0.083333336
  %v2362 = vmul.f32 %v2138, 0.083333336
  %v2363 = vmul.f32 %v2139, 0.083333336
  %v2364 = vmul.f32 %v2140, 0.083333336
  %v2365 = vmul.f32 %v2141, 0.083333336
  %v2366 = vmul.f32 %v2142, 0.083333336
  %v2367 = vmul.f32 %v2143, 0.083333336
  %v2368 = vmul.f32 %v2144, 0.083333336
  %v2369 = vmul.f32 %v2145, 0.083333336
  %v2370 = vmul.f32 %v2146, 0.083333336
  %v2371 = vmul.f32 %v2147, 0.083333336
  %v2372 = vmul.f32 %v2148, 0.083333336
  %v2373 = vmul.f32 %v2149, 0.083333336
  %v2374 = vmax.f32 %v2342, -2.0
  %v2375 = vmax.f32 %v2343, -2.0
  %v2376 = vmax.f32 %v2344, -2.0
  %v2377 = vmax.f32 %v2345, -2.0
  %v2378 = vmax.f32 %v2346, -2.0
  %v2379 = vmax.f32 %v2347, -2.0
  %v2380 = vmax.f32 %v2348, -2.0
  %v2381 = vmax.f32 %v2349, -2.0
  %v2382 = vmax.f32 %v2350, -2.0
  %v2383 = vmax.f32 %v2351, -2.0
  %v2384 = vmax.f32 %v2352, -2.0
  %v2385 = vmax.f32 %v2353, -2.0
  %v2386 = vmax.f32 %v2354, -2.0
  %v2387 = vmax.f32 %v2355, -2.0
  %v2388 = vmax.f32 %v2356, -2.0
  %v2389 = vmax.f32 %v2357, -2.0
  %v2390 = vmax.f32 %v2358, -2.0
  %v2391 = vmax.f32 %v2359, -2.0
  %v2392 = vmax.f32 %v2360, -2.0
  %v2393 = vmax.f32 %v2361, -2.0
  %v2394 = vmax.f32 %v2362, -2.0
  %v2395 = vmax.f32 %v2363, -2.0
  %v2396 = vmax.f32 %v2364, -2.0
  %v2397 = vmax.f32 %v2365, -2.0
  %v2398 = vmax.f32 %v2366, -2.0
  %v2399 = vmax.f32 %v2367, -2.0
  %v2400 = vmax.f32 %v2368, -2.0
  %v2401 = vmax.f32 %v2369, -2.0
  %v2402 = vmax.f32 %v2370, -2.0
  %v2403 = vmax.f32 %v2371, -2.0
  %v2404 = vmax.f32 %v2372, -2.0
  %v2405 = vmax.f32 %v2373, -2.0
  %v2406 = vmin.f32 %v2374, 2.0
  %v2407 = vmin.f32 %v2375, 2.0
  %v2408 = vmin.f32 %v2376, 2.0
  %v2409 = vmin.f32 %v2377, 2.0
  %v2410 = vmin.f32 %v2378, 2.0
  %v2411 = vmin.f32 %v2379, 2.0
  %v2412 = vmin.f32 %v2380, 2.0
  %v2413 = vmin.f32 %v2381, 2.0
  %v2414 = vmin.f32 %v2382, 2.0
  %v2415 = vmin.f32 %v2383, 2.0
  %v2416 = vmin.f32 %v2384, 2.0
  %v2417 = vmin.f32 %v2385, 2.0
  %v2418 = vmin.f32 %v2386, 2.0
  %v2419 = vmin.f32 %v2387, 2.0
  %v2420 = vmin.f32 %v2388, 2.0
  %v2421 = vmin.f32 %v2389, 2.0
  %v2422 = vmin.f32 %v2390, 2.0
  %v2423 = vmin.f32 %v2391, 2.0
  %v2424 = vmin.f32 %v2392, 2.0
  %v2425 = vmin.f32 %v2393, 2.0
  %v2426 = vmin.f32 %v2394, 2.0
  %v2427 = vmin.f32 %v2395, 2.0
  %v2428 = vmin.f32 %v2396, 2.0
  %v2429 = vmin.f32 %v2397, 2.0
  %v2430 = vmin.f32 %v2398, 2.0
  %v2431 = vmin.f32 %v2399, 2.0
  %v2432 = vmin.f32 %v2400, 2.0
  %v2433 = vmin.f32 %v2401, 2.0
  %v2434 = vmin.f32 %v2402, 2.0
  %v2435 = vmin.f32 %v2403, 2.0
  %v2436 = vmin.f32 %v2404, 2.0
  %v2437 = vmin.f32 %v2405, 2.0
  %s2438 = scalar_lea.vmem %s1, 256
  %2439 = vst.msk [vmem:[%s2438] sm:$0xff] %vm8, %v2406
  %2440 = vst.msk [vmem:[%s2438 + $0x8] sm:$0xff] %vm8, %v2407
  %2441 = vst.msk [vmem:[%s2438 + $0x10] sm:$0xff] %vm8, %v2408
  %2442 = vst.msk [vmem:[%s2438 + $0x18] sm:$0xff] %vm8, %v2409
  %2443 = vst.msk [vmem:[%s2438 + $0x20] sm:$0xff] %vm8, %v2410
  %2444 = vst.msk [vmem:[%s2438 + $0x28] sm:$0xff] %vm8, %v2411
  %2445 = vst.msk [vmem:[%s2438 + $0x30] sm:$0xff] %vm8, %v2412
  %2446 = vst.msk [vmem:[%s2438 + $0x38] sm:$0xff] %vm8, %v2413
  %2447 = vst.msk [vmem:[%s2438 + $0x40] sm:$0xff] %vm8, %v2414
  %2448 = vst.msk [vmem:[%s2438 + $0x48] sm:$0xff] %vm8, %v2415
  %2449 = vst.msk [vmem:[%s2438 + $0x50] sm:$0xff] %vm8, %v2416
  %2450 = vst.msk [vmem:[%s2438 + $0x58] sm:$0xff] %vm8, %v2417
  %2451 = vst.msk [vmem:[%s2438 + $0x60] sm:$0xff] %vm8, %v2418
  %2452 = vst.msk [vmem:[%s2438 + $0x68] sm:$0xff] %vm8, %v2419
  %2453 = vst.msk [vmem:[%s2438 + $0x70] sm:$0xff] %vm8, %v2420
  %2454 = vst.msk [vmem:[%s2438 + $0x78] sm:$0xff] %vm8, %v2421
  %2455 = vst.msk [vmem:[%s2438 + $0x80] sm:$0xff] %vm8, %v2422
  %2456 = vst.msk [vmem:[%s2438 + $0x88] sm:$0xff] %vm8, %v2423
  %2457 = vst.msk [vmem:[%s2438 + $0x90] sm:$0xff] %vm8, %v2424
  %2458 = vst.msk [vmem:[%s2438 + $0x98] sm:$0xff] %vm8, %v2425
  %2459 = vst.msk [vmem:[%s2438 + $0xa0] sm:$0xff] %vm8, %v2426
  %2460 = vst.msk [vmem:[%s2438 + $0xa8] sm:$0xff] %vm8, %v2427
  %2461 = vst.msk [vmem:[%s2438 + $0xb0] sm:$0xff] %vm8, %v2428
  %2462 = vst.msk [vmem:[%s2438 + $0xb8] sm:$0xff] %vm8, %v2429
  %2463 = vst.msk [vmem:[%s2438 + $0xc0] sm:$0xff] %vm8, %v2430
  %2464 = vst.msk [vmem:[%s2438 + $0xc8] sm:$0xff] %vm8, %v2431
  %2465 = vst.msk [vmem:[%s2438 + $0xd0] sm:$0xff] %vm8, %v2432
  %2466 = vst.msk [vmem:[%s2438 + $0xd8] sm:$0xff] %vm8, %v2433
  %2467 = vst.msk [vmem:[%s2438 + $0xe0] sm:$0xff] %vm8, %v2434
  %2468 = vst.msk [vmem:[%s2438 + $0xe8] sm:$0xff] %vm8, %v2435
  %2469 = vst.msk [vmem:[%s2438 + $0xf0] sm:$0xff] %vm8, %v2436
  %2470 = vst.msk [vmem:[%s2438 + $0xf8] sm:$0xff] %vm8, %v2437
  %v2471 = vmul.f32 %v2182, 0.5
  %v2472 = vmul.f32 %v2183, 0.5
  %v2473 = vmul.f32 %v2184, 0.5
  %v2474 = vmul.f32 %v2185, 0.5
  %v2475 = vmul.f32 %v2186, 0.5
  %v2476 = vmul.f32 %v2187, 0.5
  %v2477 = vmul.f32 %v2188, 0.5
  %v2478 = vmul.f32 %v2189, 0.5
  %v2479 = vmul.f32 %v2190, 0.5
  %v2480 = vmul.f32 %v2191, 0.5
  %v2481 = vmul.f32 %v2192, 0.5
  %v2482 = vmul.f32 %v2193, 0.5
  %v2483 = vmul.f32 %v2194, 0.5
  %v2484 = vmul.f32 %v2195, 0.5
  %v2485 = vmul.f32 %v2196, 0.5
  %v2486 = vmul.f32 %v2197, 0.5
  %v2487 = vmul.f32 %v2198, 0.5
  %v2488 = vmul.f32 %v2199, 0.5
  %v2489 = vmul.f32 %v2200, 0.5
  %v2490 = vmul.f32 %v2201, 0.5
  %v2491 = vmul.f32 %v2202, 0.5
  %v2492 = vmul.f32 %v2203, 0.5
  %v2493 = vmul.f32 %v2204, 0.5
  %v2494 = vmul.f32 %v2205, 0.5
  %v2495 = vmul.f32 %v2206, 0.5
  %v2496 = vmul.f32 %v2207, 0.5
  %v2497 = vmul.f32 %v2208, 0.5
  %v2498 = vmul.f32 %v2209, 0.5
  %v2499 = vmul.f32 %v2210, 0.5
  %v2500 = vmul.f32 %v2211, 0.5
  %v2501 = vmul.f32 %v2212, 0.5
  %v2502 = vmul.f32 %v2213, 0.5
  %v2503 = vmax.f32 %v2471, -2.0
  %v2504 = vmax.f32 %v2472, -2.0
  %v2505 = vmax.f32 %v2473, -2.0
  %v2506 = vmax.f32 %v2474, -2.0
  %v2507 = vmax.f32 %v2475, -2.0
  %v2508 = vmax.f32 %v2476, -2.0
  %v2509 = vmax.f32 %v2477, -2.0
  %v2510 = vmax.f32 %v2478, -2.0
  %v2511 = vmax.f32 %v2479, -2.0
  %v2512 = vmax.f32 %v2480, -2.0
  %v2513 = vmax.f32 %v2481, -2.0
  %v2514 = vmax.f32 %v2482, -2.0
  %v2515 = vmax.f32 %v2483, -2.0
  %v2516 = vmax.f32 %v2484, -2.0
  %v2517 = vmax.f32 %v2485, -2.0
  %v2518 = vmax.f32 %v2486, -2.0
  %v2519 = vmax.f32 %v2487, -2.0
  %v2520 = vmax.f32 %v2488, -2.0
  %v2521 = vmax.f32 %v2489, -2.0
  %v2522 = vmax.f32 %v2490, -2.0
  %v2523 = vmax.f32 %v2491, -2.0
  %v2524 = vmax.f32 %v2492, -2.0
  %v2525 = vmax.f32 %v2493, -2.0
  %v2526 = vmax.f32 %v2494, -2.0
  %v2527 = vmax.f32 %v2495, -2.0
  %v2528 = vmax.f32 %v2496, -2.0
  %v2529 = vmax.f32 %v2497, -2.0
  %v2530 = vmax.f32 %v2498, -2.0
  %v2531 = vmax.f32 %v2499, -2.0
  %v2532 = vmax.f32 %v2500, -2.0
  %v2533 = vmax.f32 %v2501, -2.0
  %v2534 = vmax.f32 %v2502, -2.0
  %v2535 = vmin.f32 %v2503, 2.0
  %v2536 = vmin.f32 %v2504, 2.0
  %v2537 = vmin.f32 %v2505, 2.0
  %v2538 = vmin.f32 %v2506, 2.0
  %v2539 = vmin.f32 %v2507, 2.0
  %v2540 = vmin.f32 %v2508, 2.0
  %v2541 = vmin.f32 %v2509, 2.0
  %v2542 = vmin.f32 %v2510, 2.0
  %v2543 = vmin.f32 %v2511, 2.0
  %v2544 = vmin.f32 %v2512, 2.0
  %v2545 = vmin.f32 %v2513, 2.0
  %v2546 = vmin.f32 %v2514, 2.0
  %v2547 = vmin.f32 %v2515, 2.0
  %v2548 = vmin.f32 %v2516, 2.0
  %v2549 = vmin.f32 %v2517, 2.0
  %v2550 = vmin.f32 %v2518, 2.0
  %v2551 = vmin.f32 %v2519, 2.0
  %v2552 = vmin.f32 %v2520, 2.0
  %v2553 = vmin.f32 %v2521, 2.0
  %v2554 = vmin.f32 %v2522, 2.0
  %v2555 = vmin.f32 %v2523, 2.0
  %v2556 = vmin.f32 %v2524, 2.0
  %v2557 = vmin.f32 %v2525, 2.0
  %v2558 = vmin.f32 %v2526, 2.0
  %v2559 = vmin.f32 %v2527, 2.0
  %v2560 = vmin.f32 %v2528, 2.0
  %v2561 = vmin.f32 %v2529, 2.0
  %v2562 = vmin.f32 %v2530, 2.0
  %v2563 = vmin.f32 %v2531, 2.0
  %v2564 = vmin.f32 %v2532, 2.0
  %v2565 = vmin.f32 %v2533, 2.0
  %v2566 = vmin.f32 %v2534, 2.0
  %s2567 = scalar_lea.vmem %s1, 512
  %2568 = vst.msk [vmem:[%s2567] sm:$0xff] %vm8, %v2535
  %2569 = vst.msk [vmem:[%s2567 + $0x8] sm:$0xff] %vm8, %v2536
  %2570 = vst.msk [vmem:[%s2567 + $0x10] sm:$0xff] %vm8, %v2537
  %2571 = vst.msk [vmem:[%s2567 + $0x18] sm:$0xff] %vm8, %v2538
  %2572 = vst.msk [vmem:[%s2567 + $0x20] sm:$0xff] %vm8, %v2539
  %2573 = vst.msk [vmem:[%s2567 + $0x28] sm:$0xff] %vm8, %v2540
  %2574 = vst.msk [vmem:[%s2567 + $0x30] sm:$0xff] %vm8, %v2541
  %2575 = vst.msk [vmem:[%s2567 + $0x38] sm:$0xff] %vm8, %v2542
  %2576 = vst.msk [vmem:[%s2567 + $0x40] sm:$0xff] %vm8, %v2543
  %2577 = vst.msk [vmem:[%s2567 + $0x48] sm:$0xff] %vm8, %v2544
  %2578 = vst.msk [vmem:[%s2567 + $0x50] sm:$0xff] %vm8, %v2545
  %2579 = vst.msk [vmem:[%s2567 + $0x58] sm:$0xff] %vm8, %v2546
  %2580 = vst.msk [vmem:[%s2567 + $0x60] sm:$0xff] %vm8, %v2547
  %2581 = vst.msk [vmem:[%s2567 + $0x68] sm:$0xff] %vm8, %v2548
  %2582 = vst.msk [vmem:[%s2567 + $0x70] sm:$0xff] %vm8, %v2549
  %2583 = vst.msk [vmem:[%s2567 + $0x78] sm:$0xff] %vm8, %v2550
  %2584 = vst.msk [vmem:[%s2567 + $0x80] sm:$0xff] %vm8, %v2551
  %2585 = vst.msk [vmem:[%s2567 + $0x88] sm:$0xff] %vm8, %v2552
  %2586 = vst.msk [vmem:[%s2567 + $0x90] sm:$0xff] %vm8, %v2553
  %2587 = vst.msk [vmem:[%s2567 + $0x98] sm:$0xff] %vm8, %v2554
  %2588 = vst.msk [vmem:[%s2567 + $0xa0] sm:$0xff] %vm8, %v2555
  %2589 = vst.msk [vmem:[%s2567 + $0xa8] sm:$0xff] %vm8, %v2556
  %2590 = vst.msk [vmem:[%s2567 + $0xb0] sm:$0xff] %vm8, %v2557
  %2591 = vst.msk [vmem:[%s2567 + $0xb8] sm:$0xff] %vm8, %v2558
  %2592 = vst.msk [vmem:[%s2567 + $0xc0] sm:$0xff] %vm8, %v2559
  %2593 = vst.msk [vmem:[%s2567 + $0xc8] sm:$0xff] %vm8, %v2560
  %2594 = vst.msk [vmem:[%s2567 + $0xd0] sm:$0xff] %vm8, %v2561
  %2595 = vst.msk [vmem:[%s2567 + $0xd8] sm:$0xff] %vm8, %v2562
  %2596 = vst.msk [vmem:[%s2567 + $0xe0] sm:$0xff] %vm8, %v2563
  %2597 = vst.msk [vmem:[%s2567 + $0xe8] sm:$0xff] %vm8, %v2564
  %2598 = vst.msk [vmem:[%s2567 + $0xf0] sm:$0xff] %vm8, %v2565
  %2599 = vst.msk [vmem:[%s2567 + $0xf8] sm:$0xff] %vm8, %v2566
  // Predicated region
  $region6: #{tpu_custom_call.1} parent=0 // pred_check
    _
  $region7: #{tpu_custom_call.1} parent=0 // pred_check_branch
    %2601 = sbr.rel (0) target = $region9
  $region8: #{tpu_custom_call.1} parent=0 // pred_region
    _
  $region9: #{tpu_custom_call.1} parent=0 // pred_fallthru
    _
  // Predicated region
  $region10: #{tpu_custom_call.1} parent=0 // pred_check
    _
  $region11: #{tpu_custom_call.1} parent=0 // pred_check_branch
    %2603 = sbr.rel (0) target = $region13
  $region12: #{tpu_custom_call.1} parent=0 // pred_region
    _
  $region13: #{tpu_custom_call.1} parent=0 // pred_fallthru
    _

</llo_original>
